<compile_context>
chip_gen: v6e
topology: v6e:2x2x1
jax: 0.10.0
libtpu: 0.0.40
codegen_flags: <defaults>
</compile_context>

<pallas_src>
import functools

import jax
import jax.numpy as jnp
from jax.experimental import pallas as pl
from jax.experimental.pallas import tpu as pltpu


# --------------------------- fused forward kernel ---------------------------
def _fused_forward_kernel(S, B,
                          idx_ref, emb_ref,
                          wih1_ref, whh1_ref, b1_ref,
                          wih2_ref, whh2_ref, b2_ref,
                          wlin_ref, blin_ref,
                          out_ref,
                          xp_scr, hseq_scr):
    """Embedding -> LSTM1 -> LSTM2 -> Linear in one kernel invocation.

    Shapes (batch already padded to a sublane multiple, SB = S * B):
      idx_ref  : (SB, 1)   int32     flattened (time-major) token indices
      emb_ref  : (V, E)    float32   embedding table
      w_ih*    : (in, 4H)  float32   input->gates weights,  columns [i|f|g|o]
      w_hh*    : (H, 4H)   float32   hidden->gates weights, columns [i|f|g|o]
      b*       : (1, 4H)   float32   b_ih + b_hh (combined)
      wlin     : (H, N), blin : (1, N)
      out_ref  : (SB, N)   float32   logits slab (single bulk store)
      xp_scr   : (SB, 4H)  float32   precomputed input projections (reused)
      hseq_scr : (SB, H)   float32   per-layer hidden-state sequence (reused)
    """
    H = hseq_scr.shape[1]
    V = emb_ref.shape[0]
    SB = S * B

    # ---- Embedding gather as a one-hot MXU matmul (stays in VMEM). ----
    ids = idx_ref[...]                                           # (SB, 1) int32
    col = jax.lax.broadcasted_iota(jnp.int32, (SB, V), 1)        # (SB, V)
    one_hot = (col == ids).astype(jnp.float32)                   # (SB, V)
    x = jnp.dot(one_hot, emb_ref[...],
                preferred_element_type=jnp.float32)              # (SB, E)

    def run_lstm(x_seq, w_ih, w_hh, bias):
        # Bulk input projection for every timestep at once; bias folded in.
        xp_scr[...] = (jnp.dot(x_seq, w_ih,
                               preferred_element_type=jnp.float32) + bias)

        h = jnp.zeros((B, H), jnp.float32)
        c = jnp.zeros((B, H), jnp.float32)
        # Fully-unrolled recurrence (equivalent to fori_loop(..., unroll=True)
        # for this short, fixed S). Only h @ W_hh is left per step.
        for t in range(S):
            row0 = t * B                                         # 8-aligned
            gates = (xp_scr[row0:row0 + B, :]
                     + jnp.dot(h, w_hh,
                               preferred_element_type=jnp.float32))  # (B, 4H)
            i_g = jax.nn.sigmoid(gates[:, 0 * H:1 * H])
            f_g = jax.nn.sigmoid(gates[:, 1 * H:2 * H])
            g_g = jnp.tanh(gates[:, 2 * H:3 * H])
            o_g = jax.nn.sigmoid(gates[:, 3 * H:4 * H])
            c = f_g * c + i_g * g_g
            h = o_g * jnp.tanh(c)
            hseq_scr[row0:row0 + B, :] = h
        return hseq_scr[...]                                     # (SB, H)

    h1 = run_lstm(x, wih1_ref[...], whh1_ref[...], b1_ref[...])
    h2 = run_lstm(h1, wih2_ref[...], whh2_ref[...], b2_ref[...])

    # ---- Final linear: one bulk store of the whole logits slab. ----
    out_ref[...] = (jnp.dot(h2, wlin_ref[...],
                            preferred_element_type=jnp.float32)
                    + blin_ref[...])


# ------------------------------- wrapper ------------------------------------
def hypernym_hyponym_lstm_forward(params, hyponym):
    """hyponym: (S, B) int indices -> (S, B, num_hypernyms) float32 logits."""
    S, B = hyponym.shape
    H = params["w_hh1"].shape[0]
    N = params["w_lin"].shape[1]

    # Pad batch to a multiple of 8 sublanes (f32) so per-timestep row blocks
    # are vreg-aligned; padded columns are independent and sliced off below.
    B_pad = ((B + 7) // 8) * 8
    if B_pad != B:
        hyponym = jnp.pad(hyponym, ((0, 0), (0, B_pad - B)))
    idx2d = hyponym.astype(jnp.int32).reshape(S * B_pad, 1)

    kernel = functools.partial(_fused_forward_kernel, S, B_pad)
    logits = pl.pallas_call(
        kernel,
        out_shape=jax.ShapeDtypeStruct((S * B_pad, N), jnp.float32),
        in_specs=[pl.BlockSpec(memory_space=pltpu.MemorySpace.VMEM)
                  for _ in range(10)],
        out_specs=pl.BlockSpec(memory_space=pltpu.MemorySpace.VMEM),
        scratch_shapes=[
            pltpu.VMEM((S * B_pad, 4 * H), jnp.float32),   # input projections
            pltpu.VMEM((S * B_pad, H), jnp.float32),       # hidden sequence
        ],
    )(idx2d, params["embedding"],
      params["w_ih1"], params["w_hh1"], params["b1"],
      params["w_ih2"], params["w_hh2"], params["b2"],
      params["w_lin"], params["b_lin"])

    return logits.reshape(S, B_pad, N)[:, :B, :]


# ------------------------------ parameters -----------------------------------
def init_params(key, num_hyponyms, num_hypernyms, embedding_dim, hidden_dim):
    ks = jax.random.split(key, 12)
    s = 1.0 / jnp.sqrt(hidden_dim)

    def u(k, shape, scale):
        return jax.random.uniform(k, shape, jnp.float32, -scale, scale)

    return {
        "embedding": jax.random.normal(ks[0], (num_hyponyms, embedding_dim),
                                       jnp.float32),
        # lstm1 (input = embedding_dim); weights stored transposed (in, 4H)
        "w_ih1": u(ks[1], (embedding_dim, 4 * hidden_dim), s),
        "w_hh1": u(ks[2], (hidden_dim, 4 * hidden_dim), s),
        "b1":    u(ks[3], (1, 4 * hidden_dim), s)
                 + u(ks[4], (1, 4 * hidden_dim), s),     # b_ih + b_hh
        # lstm2 (input = hidden_dim)
        "w_ih2": u(ks[5], (hidden_dim, 4 * hidden_dim), s),
        "w_hh2": u(ks[6], (hidden_dim, 4 * hidden_dim), s),
        "b2":    u(ks[7], (1, 4 * hidden_dim), s)
                 + u(ks[8], (1, 4 * hidden_dim), s),
        # linear
        "w_lin": u(ks[9], (hidden_dim, num_hypernyms), s),
        "b_lin": u(ks[10], (1, num_hypernyms), s),
    }


# --------------------------- pure-JAX reference ------------------------------
def _reference_forward(params, hyponym):
    """Plain-XLA reference with identical semantics (for self-check)."""
    def lstm(x_seq, w_ih, w_hh, b):
        Hd = w_hh.shape[0]

        def step(carry, x_t):
            h, c = carry
            gates = x_t @ w_ih + h @ w_hh + b
            i = jax.nn.sigmoid(gates[:, 0 * Hd:1 * Hd])
            f = jax.nn.sigmoid(gates[:, 1 * Hd:2 * Hd])
            g = jnp.tanh(gates[:, 2 * Hd:3 * Hd])
            o = jax.nn.sigmoid(gates[:, 3 * Hd:4 * Hd])
            c = f * c + i * g
            h = o * jnp.tanh(c)
            return (h, c), h

        h0 = jnp.zeros((x_seq.shape[1], Hd), jnp.float32)
        _, hs = jax.lax.scan(step, (h0, h0), x_seq)
        return hs

    with jax.default_matmul_precision("highest"):
        emb = jnp.take(params["embedding"], hyponym, axis=0)     # (S, B, E)
        h1 = lstm(emb, params["w_ih1"], params["w_hh1"], params["b1"])
        h2 = lstm(h1, params["w_ih2"], params["w_hh2"], params["b2"])
        return jnp.einsum("sbh,hn->sbn", h2, params["w_lin"]) + params["b_lin"]


# --------------------------------- main --------------------------------------
if __name__ == "__main__":
    num_hyponyms = 50
    num_hypernyms = 16
    embedding_dim = 32
    hidden_dim = 32
    seq_len = 8
    batch = 2

    key = jax.random.PRNGKey(0)
    k_param, k_inp = jax.random.split(key)

    params = init_params(k_param, num_hyponyms, num_hypernyms,
                         embedding_dim, hidden_dim)
    hyponym = jax.random.randint(k_inp, (seq_len, batch), 0, num_hyponyms,
                                 dtype=jnp.int32)

    fwd = jax.jit(hypernym_hyponym_lstm_forward)
    out = fwd(params, hyponym)
    jax.block_until_ready(out)
    assert out.shape == (seq_len, batch, num_hypernyms)

    ref = _reference_forward(params, hyponym)
    max_err = float(jnp.max(jnp.abs(out - ref)))
    assert jnp.allclose(out, ref, atol=1e-3, rtol=1e-3), max_err

    print("KERNEL_OK")
</pallas_src>

<mosaic_0001>
module attributes {stable_mosaic.version = 11 : i64} {
  func.func @_fused_forward_kernel(%arg0: memref<64x1xi32, #tpu.memory_space<vmem>>, %arg1: memref<50x32xf32, #tpu.memory_space<vmem>>, %arg2: memref<32x128xf32, #tpu.memory_space<vmem>>, %arg3: memref<32x128xf32, #tpu.memory_space<vmem>>, %arg4: memref<1x128xf32, #tpu.memory_space<vmem>>, %arg5: memref<32x128xf32, #tpu.memory_space<vmem>>, %arg6: memref<32x128xf32, #tpu.memory_space<vmem>>, %arg7: memref<1x128xf32, #tpu.memory_space<vmem>>, %arg8: memref<32x16xf32, #tpu.memory_space<vmem>>, %arg9: memref<1x16xf32, #tpu.memory_space<vmem>>, %arg10: memref<64x16xf32, #tpu.memory_space<vmem>>, %arg11: memref<64x128xf32, #tpu.memory_space<vmem>>, %arg12: memref<64x32xf32, #tpu.memory_space<vmem>>) attributes {dimension_semantics = [], scalar_prefetch = 0 : i64, scratch_operands = 2 : i64, tpu.core_type = #tpu.core_type<tc>} {
    %c0 = arith.constant 0 : index
    %c0_0 = arith.constant 0 : index
    %0 = vector.load %arg0[%c0, %c0_0] : memref<64x1xi32, #tpu.memory_space<vmem>>, vector<64x1xi32>
    %1 = tpu.iota {dimensions = array<i32: 1>} : vector<64x50xi32>
    %2 = vector.broadcast %0 : vector<64x1xi32> to vector<64x50xi32>
    %3 = arith.cmpi eq, %1, %2 : vector<64x50xi32>
    %4 = arith.extui %3 : vector<64x50xi1> to vector<64x50xi32>
    %5 = arith.sitofp %4 : vector<64x50xi32> to vector<64x50xf32>
    %c0_1 = arith.constant 0 : index
    %c0_2 = arith.constant 0 : index
    %6 = vector.load %arg1[%c0_1, %c0_2] : memref<50x32xf32, #tpu.memory_space<vmem>>, vector<50x32xf32>
    %cst = arith.constant dense<0.000000e+00> : vector<64x32xf32>
    %7 = tpu.matmul %5, %6, %cst {dimension_numbers = #tpu.dot_dimension_numbers<[1], [0], [0], [1], [0, 0, 1, 1], [], []>} : vector<64x50xf32>, vector<50x32xf32>, vector<64x32xf32> -> vector<64x32xf32>
    %c0_3 = arith.constant 0 : index
    %c0_4 = arith.constant 0 : index
    %8 = vector.load %arg2[%c0_3, %c0_4] : memref<32x128xf32, #tpu.memory_space<vmem>>, vector<32x128xf32>
    %c0_5 = arith.constant 0 : index
    %c0_6 = arith.constant 0 : index
    %9 = vector.load %arg3[%c0_5, %c0_6] : memref<32x128xf32, #tpu.memory_space<vmem>>, vector<32x128xf32>
    %c0_7 = arith.constant 0 : index
    %c0_8 = arith.constant 0 : index
    %10 = vector.load %arg4[%c0_7, %c0_8] : memref<1x128xf32, #tpu.memory_space<vmem>>, vector<1x128xf32>
    %cst_9 = arith.constant dense<0.000000e+00> : vector<64x128xf32>
    %11 = tpu.matmul %7, %8, %cst_9 {dimension_numbers = #tpu.dot_dimension_numbers<[1], [0], [0], [1], [0, 0, 1, 1], [], []>} : vector<64x32xf32>, vector<32x128xf32>, vector<64x128xf32> -> vector<64x128xf32>
    %12 = vector.broadcast %10 : vector<1x128xf32> to vector<64x128xf32>
    %13 = arith.addf %11, %12 : vector<64x128xf32>
    %c0_10 = arith.constant 0 : index
    %c0_11 = arith.constant 0 : index
    %14 = vector.load %arg11[%c0_10, %c0_11] : memref<64x128xf32, #tpu.memory_space<vmem>>, vector<64x128xf32>
    tpu.vector_store %arg11[%c0_10, %c0_11], %13 {strides = array<i32>} : memref<64x128xf32, #tpu.memory_space<vmem>>, vector<64x128xf32>,
    %cst_12 = arith.constant 0.000000e+00 : f32
    %15 = vector.broadcast %cst_12 : f32 to vector<8x32xf32>
    %cst_13 = arith.constant 0.000000e+00 : f32
    %16 = vector.broadcast %cst_13 : f32 to vector<8x32xf32>
    %c0_14 = arith.constant 0 : index
    %c0_15 = arith.constant 0 : index
    %17 = vector.load %arg11[%c0_14, %c0_15] : memref<64x128xf32, #tpu.memory_space<vmem>>, vector<8x128xf32>
    %cst_16 = arith.constant dense<0.000000e+00> : vector<8x128xf32>
    %18 = tpu.matmul %15, %9, %cst_16 {dimension_numbers = #tpu.dot_dimension_numbers<[1], [0], [0], [1], [0, 0, 1, 1], [], []>} : vector<8x32xf32>, vector<32x128xf32>, vector<8x128xf32> -> vector<8x128xf32>
    %19 = arith.addf %17, %18 : vector<8x128xf32>
    %20 = vector.extract_strided_slice %19 {offsets = [0, 0], sizes = [8, 32], strides = [1, 1]} : vector<8x128xf32> to vector<8x32xf32>
    %21 = arith.negf %20 : vector<8x32xf32>
    %22 = math.exp %21 : vector<8x32xf32>
    %cst_17 = arith.constant 1.000000e+00 : f32
    %23 = vector.broadcast %cst_17 : f32 to vector<8x32xf32>
    %24 = arith.addf %23, %22 : vector<8x32xf32>
    %25 = arith.divf %23, %24 : vector<8x32xf32>
    %26 = vector.extract_strided_slice %19 {offsets = [0, 32], sizes = [8, 32], strides = [1, 1]} : vector<8x128xf32> to vector<8x32xf32>
    %27 = arith.negf %26 : vector<8x32xf32>
    %28 = math.exp %27 : vector<8x32xf32>
    %cst_18 = arith.constant 1.000000e+00 : f32
    %29 = vector.broadcast %cst_18 : f32 to vector<8x32xf32>
    %30 = arith.addf %29, %28 : vector<8x32xf32>
    %31 = arith.divf %29, %30 : vector<8x32xf32>
    %32 = vector.extract_strided_slice %19 {offsets = [0, 64], sizes = [8, 32], strides = [1, 1]} : vector<8x128xf32> to vector<8x32xf32>
    %33 = math.tanh %32 : vector<8x32xf32>
    %34 = vector.extract_strided_slice %19 {offsets = [0, 96], sizes = [8, 32], strides = [1, 1]} : vector<8x128xf32> to vector<8x32xf32>
    %35 = arith.negf %34 : vector<8x32xf32>
    %36 = math.exp %35 : vector<8x32xf32>
    %cst_19 = arith.constant 1.000000e+00 : f32
    %37 = vector.broadcast %cst_19 : f32 to vector<8x32xf32>
    %38 = arith.addf %37, %36 : vector<8x32xf32>
    %39 = arith.divf %37, %38 : vector<8x32xf32>
    %40 = arith.mulf %31, %16 : vector<8x32xf32>
    %41 = arith.mulf %25, %33 : vector<8x32xf32>
    %42 = arith.addf %40, %41 : vector<8x32xf32>
    %43 = math.tanh %42 : vector<8x32xf32>
    %44 = arith.mulf %39, %43 : vector<8x32xf32>
    %c0_20 = arith.constant 0 : index
    %c0_21 = arith.constant 0 : index
    %45 = vector.load %arg12[%c0_20, %c0_21] : memref<64x32xf32, #tpu.memory_space<vmem>>, vector<8x32xf32>
    tpu.vector_store %arg12[%c0_20, %c0_21], %44 {strides = array<i32>} : memref<64x32xf32, #tpu.memory_space<vmem>>, vector<8x32xf32>,
    %c8 = arith.constant 8 : index
    %c0_22 = arith.constant 0 : index
    %46 = vector.load %arg11[%c8, %c0_22] : memref<64x128xf32, #tpu.memory_space<vmem>>, vector<8x128xf32>
    %cst_23 = arith.constant dense<0.000000e+00> : vector<8x128xf32>
    %47 = tpu.matmul %44, %9, %cst_23 {dimension_numbers = #tpu.dot_dimension_numbers<[1], [0], [0], [1], [0, 0, 1, 1], [], []>} : vector<8x32xf32>, vector<32x128xf32>, vector<8x128xf32> -> vector<8x128xf32>
    %48 = arith.addf %46, %47 : vector<8x128xf32>
    %49 = vector.extract_strided_slice %48 {offsets = [0, 0], sizes = [8, 32], strides = [1, 1]} : vector<8x128xf32> to vector<8x32xf32>
    %50 = arith.negf %49 : vector<8x32xf32>
    %51 = math.exp %50 : vector<8x32xf32>
    %cst_24 = arith.constant 1.000000e+00 : f32
    %52 = vector.broadcast %cst_24 : f32 to vector<8x32xf32>
    %53 = arith.addf %52, %51 : vector<8x32xf32>
    %54 = arith.divf %52, %53 : vector<8x32xf32>
    %55 = vector.extract_strided_slice %48 {offsets = [0, 32], sizes = [8, 32], strides = [1, 1]} : vector<8x128xf32> to vector<8x32xf32>
    %56 = arith.negf %55 : vector<8x32xf32>
    %57 = math.exp %56 : vector<8x32xf32>
    %cst_25 = arith.constant 1.000000e+00 : f32
    %58 = vector.broadcast %cst_25 : f32 to vector<8x32xf32>
    %59 = arith.addf %58, %57 : vector<8x32xf32>
    %60 = arith.divf %58, %59 : vector<8x32xf32>
    %61 = vector.extract_strided_slice %48 {offsets = [0, 64], sizes = [8, 32], strides = [1, 1]} : vector<8x128xf32> to vector<8x32xf32>
    %62 = math.tanh %61 : vector<8x32xf32>
    %63 = vector.extract_strided_slice %48 {offsets = [0, 96], sizes = [8, 32], strides = [1, 1]} : vector<8x128xf32> to vector<8x32xf32>
    %64 = arith.negf %63 : vector<8x32xf32>
    %65 = math.exp %64 : vector<8x32xf32>
    %cst_26 = arith.constant 1.000000e+00 : f32
    %66 = vector.broadcast %cst_26 : f32 to vector<8x32xf32>
    %67 = arith.addf %66, %65 : vector<8x32xf32>
    %68 = arith.divf %66, %67 : vector<8x32xf32>
    %69 = arith.mulf %60, %42 : vector<8x32xf32>
    %70 = arith.mulf %54, %62 : vector<8x32xf32>
    %71 = arith.addf %69, %70 : vector<8x32xf32>
    %72 = math.tanh %71 : vector<8x32xf32>
    %73 = arith.mulf %68, %72 : vector<8x32xf32>
    %c8_27 = arith.constant 8 : index
    %c0_28 = arith.constant 0 : index
    %74 = vector.load %arg12[%c8_27, %c0_28] : memref<64x32xf32, #tpu.memory_space<vmem>>, vector<8x32xf32>
    tpu.vector_store %arg12[%c8_27, %c0_28], %73 {strides = array<i32>} : memref<64x32xf32, #tpu.memory_space<vmem>>, vector<8x32xf32>,
    %c16 = arith.constant 16 : index
    %c0_29 = arith.constant 0 : index
    %75 = vector.load %arg11[%c16, %c0_29] : memref<64x128xf32, #tpu.memory_space<vmem>>, vector<8x128xf32>
    %cst_30 = arith.constant dense<0.000000e+00> : vector<8x128xf32>
    %76 = tpu.matmul %73, %9, %cst_30 {dimension_numbers = #tpu.dot_dimension_numbers<[1], [0], [0], [1], [0, 0, 1, 1], [], []>} : vector<8x32xf32>, vector<32x128xf32>, vector<8x128xf32> -> vector<8x128xf32>
    %77 = arith.addf %75, %76 : vector<8x128xf32>
    %78 = vector.extract_strided_slice %77 {offsets = [0, 0], sizes = [8, 32], strides = [1, 1]} : vector<8x128xf32> to vector<8x32xf32>
    %79 = arith.negf %78 : vector<8x32xf32>
    %80 = math.exp %79 : vector<8x32xf32>
    %cst_31 = arith.constant 1.000000e+00 : f32
    %81 = vector.broadcast %cst_31 : f32 to vector<8x32xf32>
    %82 = arith.addf %81, %80 : vector<8x32xf32>
    %83 = arith.divf %81, %82 : vector<8x32xf32>
    %84 = vector.extract_strided_slice %77 {offsets = [0, 32], sizes = [8, 32], strides = [1, 1]} : vector<8x128xf32> to vector<8x32xf32>
    %85 = arith.negf %84 : vector<8x32xf32>
    %86 = math.exp %85 : vector<8x32xf32>
    %cst_32 = arith.constant 1.000000e+00 : f32
    %87 = vector.broadcast %cst_32 : f32 to vector<8x32xf32>
    %88 = arith.addf %87, %86 : vector<8x32xf32>
    %89 = arith.divf %87, %88 : vector<8x32xf32>
    %90 = vector.extract_strided_slice %77 {offsets = [0, 64], sizes = [8, 32], strides = [1, 1]} : vector<8x128xf32> to vector<8x32xf32>
    %91 = math.tanh %90 : vector<8x32xf32>
    %92 = vector.extract_strided_slice %77 {offsets = [0, 96], sizes = [8, 32], strides = [1, 1]} : vector<8x128xf32> to vector<8x32xf32>
    %93 = arith.negf %92 : vector<8x32xf32>
    %94 = math.exp %93 : vector<8x32xf32>
    %cst_33 = arith.constant 1.000000e+00 : f32
    %95 = vector.broadcast %cst_33 : f32 to vector<8x32xf32>
    %96 = arith.addf %95, %94 : vector<8x32xf32>
    %97 = arith.divf %95, %96 : vector<8x32xf32>
    %98 = arith.mulf %89, %71 : vector<8x32xf32>
    %99 = arith.mulf %83, %91 : vector<8x32xf32>
    %100 = arith.addf %98, %99 : vector<8x32xf32>
    %101 = math.tanh %100 : vector<8x32xf32>
    %102 = arith.mulf %97, %101 : vector<8x32xf32>
    %c16_34 = arith.constant 16 : index
    %c0_35 = arith.constant 0 : index
    %103 = vector.load %arg12[%c16_34, %c0_35] : memref<64x32xf32, #tpu.memory_space<vmem>>, vector<8x32xf32>
    tpu.vector_store %arg12[%c16_34, %c0_35], %102 {strides = array<i32>} : memref<64x32xf32, #tpu.memory_space<vmem>>, vector<8x32xf32>,
    %c24 = arith.constant 24 : index
    %c0_36 = arith.constant 0 : index
    %104 = vector.load %arg11[%c24, %c0_36] : memref<64x128xf32, #tpu.memory_space<vmem>>, vector<8x128xf32>
    %cst_37 = arith.constant dense<0.000000e+00> : vector<8x128xf32>
    %105 = tpu.matmul %102, %9, %cst_37 {dimension_numbers = #tpu.dot_dimension_numbers<[1], [0], [0], [1], [0, 0, 1, 1], [], []>} : vector<8x32xf32>, vector<32x128xf32>, vector<8x128xf32> -> vector<8x128xf32>
    %106 = arith.addf %104, %105 : vector<8x128xf32>
    %107 = vector.extract_strided_slice %106 {offsets = [0, 0], sizes = [8, 32], strides = [1, 1]} : vector<8x128xf32> to vector<8x32xf32>
    %108 = arith.negf %107 : vector<8x32xf32>
    %109 = math.exp %108 : vector<8x32xf32>
    %cst_38 = arith.constant 1.000000e+00 : f32
    %110 = vector.broadcast %cst_38 : f32 to vector<8x32xf32>
    %111 = arith.addf %110, %109 : vector<8x32xf32>
    %112 = arith.divf %110, %111 : vector<8x32xf32>
    %113 = vector.extract_strided_slice %106 {offsets = [0, 32], sizes = [8, 32], strides = [1, 1]} : vector<8x128xf32> to vector<8x32xf32>
    %114 = arith.negf %113 : vector<8x32xf32>
    %115 = math.exp %114 : vector<8x32xf32>
    %cst_39 = arith.constant 1.000000e+00 : f32
    %116 = vector.broadcast %cst_39 : f32 to vector<8x32xf32>
    %117 = arith.addf %116, %115 : vector<8x32xf32>
    %118 = arith.divf %116, %117 : vector<8x32xf32>
    %119 = vector.extract_strided_slice %106 {offsets = [0, 64], sizes = [8, 32], strides = [1, 1]} : vector<8x128xf32> to vector<8x32xf32>
    %120 = math.tanh %119 : vector<8x32xf32>
    %121 = vector.extract_strided_slice %106 {offsets = [0, 96], sizes = [8, 32], strides = [1, 1]} : vector<8x128xf32> to vector<8x32xf32>
    %122 = arith.negf %121 : vector<8x32xf32>
    %123 = math.exp %122 : vector<8x32xf32>
    %cst_40 = arith.constant 1.000000e+00 : f32
    %124 = vector.broadcast %cst_40 : f32 to vector<8x32xf32>
    %125 = arith.addf %124, %123 : vector<8x32xf32>
    %126 = arith.divf %124, %125 : vector<8x32xf32>
    %127 = arith.mulf %118, %100 : vector<8x32xf32>
    %128 = arith.mulf %112, %120 : vector<8x32xf32>
    %129 = arith.addf %127, %128 : vector<8x32xf32>
    %130 = math.tanh %129 : vector<8x32xf32>
    %131 = arith.mulf %126, %130 : vector<8x32xf32>
    %c24_41 = arith.constant 24 : index
    %c0_42 = arith.constant 0 : index
    %132 = vector.load %arg12[%c24_41, %c0_42] : memref<64x32xf32, #tpu.memory_space<vmem>>, vector<8x32xf32>
    tpu.vector_store %arg12[%c24_41, %c0_42], %131 {strides = array<i32>} : memref<64x32xf32, #tpu.memory_space<vmem>>, vector<8x32xf32>,
    %c32 = arith.constant 32 : index
    %c0_43 = arith.constant 0 : index
    %133 = vector.load %arg11[%c32, %c0_43] : memref<64x128xf32, #tpu.memory_space<vmem>>, vector<8x128xf32>
    %cst_44 = arith.constant dense<0.000000e+00> : vector<8x128xf32>
    %134 = tpu.matmul %131, %9, %cst_44 {dimension_numbers = #tpu.dot_dimension_numbers<[1], [0], [0], [1], [0, 0, 1, 1], [], []>} : vector<8x32xf32>, vector<32x128xf32>, vector<8x128xf32> -> vector<8x128xf32>
    %135 = arith.addf %133, %134 : vector<8x128xf32>
    %136 = vector.extract_strided_slice %135 {offsets = [0, 0], sizes = [8, 32], strides = [1, 1]} : vector<8x128xf32> to vector<8x32xf32>
    %137 = arith.negf %136 : vector<8x32xf32>
    %138 = math.exp %137 : vector<8x32xf32>
    %cst_45 = arith.constant 1.000000e+00 : f32
    %139 = vector.broadcast %cst_45 : f32 to vector<8x32xf32>
    %140 = arith.addf %139, %138 : vector<8x32xf32>
    %141 = arith.divf %139, %140 : vector<8x32xf32>
    %142 = vector.extract_strided_slice %135 {offsets = [0, 32], sizes = [8, 32], strides = [1, 1]} : vector<8x128xf32> to vector<8x32xf32>
    %143 = arith.negf %142 : vector<8x32xf32>
    %144 = math.exp %143 : vector<8x32xf32>
    %cst_46 = arith.constant 1.000000e+00 : f32
    %145 = vector.broadcast %cst_46 : f32 to vector<8x32xf32>
    %146 = arith.addf %145, %144 : vector<8x32xf32>
    %147 = arith.divf %145, %146 : vector<8x32xf32>
    %148 = vector.extract_strided_slice %135 {offsets = [0, 64], sizes = [8, 32], strides = [1, 1]} : vector<8x128xf32> to vector<8x32xf32>
    %149 = math.tanh %148 : vector<8x32xf32>
    %150 = vector.extract_strided_slice %135 {offsets = [0, 96], sizes = [8, 32], strides = [1, 1]} : vector<8x128xf32> to vector<8x32xf32>
    %151 = arith.negf %150 : vector<8x32xf32>
    %152 = math.exp %151 : vector<8x32xf32>
    %cst_47 = arith.constant 1.000000e+00 : f32
    %153 = vector.broadcast %cst_47 : f32 to vector<8x32xf32>
    %154 = arith.addf %153, %152 : vector<8x32xf32>
    %155 = arith.divf %153, %154 : vector<8x32xf32>
    %156 = arith.mulf %147, %129 : vector<8x32xf32>
    %157 = arith.mulf %141, %149 : vector<8x32xf32>
    %158 = arith.addf %156, %157 : vector<8x32xf32>
    %159 = math.tanh %158 : vector<8x32xf32>
    %160 = arith.mulf %155, %159 : vector<8x32xf32>
    %c32_48 = arith.constant 32 : index
    %c0_49 = arith.constant 0 : index
    %161 = vector.load %arg12[%c32_48, %c0_49] : memref<64x32xf32, #tpu.memory_space<vmem>>, vector<8x32xf32>
    tpu.vector_store %arg12[%c32_48, %c0_49], %160 {strides = array<i32>} : memref<64x32xf32, #tpu.memory_space<vmem>>, vector<8x32xf32>,
    %c40 = arith.constant 40 : index
    %c0_50 = arith.constant 0 : index
    %162 = vector.load %arg11[%c40, %c0_50] : memref<64x128xf32, #tpu.memory_space<vmem>>, vector<8x128xf32>
    %cst_51 = arith.constant dense<0.000000e+00> : vector<8x128xf32>
    %163 = tpu.matmul %160, %9, %cst_51 {dimension_numbers = #tpu.dot_dimension_numbers<[1], [0], [0], [1], [0, 0, 1, 1], [], []>} : vector<8x32xf32>, vector<32x128xf32>, vector<8x128xf32> -> vector<8x128xf32>
    %164 = arith.addf %162, %163 : vector<8x128xf32>
    %165 = vector.extract_strided_slice %164 {offsets = [0, 0], sizes = [8, 32], strides = [1, 1]} : vector<8x128xf32> to vector<8x32xf32>
    %166 = arith.negf %165 : vector<8x32xf32>
    %167 = math.exp %166 : vector<8x32xf32>
    %cst_52 = arith.constant 1.000000e+00 : f32
    %168 = vector.broadcast %cst_52 : f32 to vector<8x32xf32>
    %169 = arith.addf %168, %167 : vector<8x32xf32>
    %170 = arith.divf %168, %169 : vector<8x32xf32>
    %171 = vector.extract_strided_slice %164 {offsets = [0, 32], sizes = [8, 32], strides = [1, 1]} : vector<8x128xf32> to vector<8x32xf32>
    %172 = arith.negf %171 : vector<8x32xf32>
    %173 = math.exp %172 : vector<8x32xf32>
    %cst_53 = arith.constant 1.000000e+00 : f32
    %174 = vector.broadcast %cst_53 : f32 to vector<8x32xf32>
    %175 = arith.addf %174, %173 : vector<8x32xf32>
    %176 = arith.divf %174, %175 : vector<8x32xf32>
    %177 = vector.extract_strided_slice %164 {offsets = [0, 64], sizes = [8, 32], strides = [1, 1]} : vector<8x128xf32> to vector<8x32xf32>
    %178 = math.tanh %177 : vector<8x32xf32>
    %179 = vector.extract_strided_slice %164 {offsets = [0, 96], sizes = [8, 32], strides = [1, 1]} : vector<8x128xf32> to vector<8x32xf32>
    %180 = arith.negf %179 : vector<8x32xf32>
    %181 = math.exp %180 : vector<8x32xf32>
    %cst_54 = arith.constant 1.000000e+00 : f32
    %182 = vector.broadcast %cst_54 : f32 to vector<8x32xf32>
    %183 = arith.addf %182, %181 : vector<8x32xf32>
    %184 = arith.divf %182, %183 : vector<8x32xf32>
    %185 = arith.mulf %176, %158 : vector<8x32xf32>
    %186 = arith.mulf %170, %178 : vector<8x32xf32>
    %187 = arith.addf %185, %186 : vector<8x32xf32>
    %188 = math.tanh %187 : vector<8x32xf32>
    %189 = arith.mulf %184, %188 : vector<8x32xf32>
    %c40_55 = arith.constant 40 : index
    %c0_56 = arith.constant 0 : index
    %190 = vector.load %arg12[%c40_55, %c0_56] : memref<64x32xf32, #tpu.memory_space<vmem>>, vector<8x32xf32>
    tpu.vector_store %arg12[%c40_55, %c0_56], %189 {strides = array<i32>} : memref<64x32xf32, #tpu.memory_space<vmem>>, vector<8x32xf32>,
    %c48 = arith.constant 48 : index
    %c0_57 = arith.constant 0 : index
    %191 = vector.load %arg11[%c48, %c0_57] : memref<64x128xf32, #tpu.memory_space<vmem>>, vector<8x128xf32>
    %cst_58 = arith.constant dense<0.000000e+00> : vector<8x128xf32>
    %192 = tpu.matmul %189, %9, %cst_58 {dimension_numbers = #tpu.dot_dimension_numbers<[1], [0], [0], [1], [0, 0, 1, 1], [], []>} : vector<8x32xf32>, vector<32x128xf32>, vector<8x128xf32> -> vector<8x128xf32>
    %193 = arith.addf %191, %192 : vector<8x128xf32>
    %194 = vector.extract_strided_slice %193 {offsets = [0, 0], sizes = [8, 32], strides = [1, 1]} : vector<8x128xf32> to vector<8x32xf32>
    %195 = arith.negf %194 : vector<8x32xf32>
    %196 = math.exp %195 : vector<8x32xf32>
    %cst_59 = arith.constant 1.000000e+00 : f32
    %197 = vector.broadcast %cst_59 : f32 to vector<8x32xf32>
    %198 = arith.addf %197, %196 : vector<8x32xf32>
    %199 = arith.divf %197, %198 : vector<8x32xf32>
    %200 = vector.extract_strided_slice %193 {offsets = [0, 32], sizes = [8, 32], strides = [1, 1]} : vector<8x128xf32> to vector<8x32xf32>
    %201 = arith.negf %200 : vector<8x32xf32>
    %202 = math.exp %201 : vector<8x32xf32>
    %cst_60 = arith.constant 1.000000e+00 : f32
    %203 = vector.broadcast %cst_60 : f32 to vector<8x32xf32>
    %204 = arith.addf %203, %202 : vector<8x32xf32>
    %205 = arith.divf %203, %204 : vector<8x32xf32>
    %206 = vector.extract_strided_slice %193 {offsets = [0, 64], sizes = [8, 32], strides = [1, 1]} : vector<8x128xf32> to vector<8x32xf32>
    %207 = math.tanh %206 : vector<8x32xf32>
    %208 = vector.extract_strided_slice %193 {offsets = [0, 96], sizes = [8, 32], strides = [1, 1]} : vector<8x128xf32> to vector<8x32xf32>
    %209 = arith.negf %208 : vector<8x32xf32>
    %210 = math.exp %209 : vector<8x32xf32>
    %cst_61 = arith.constant 1.000000e+00 : f32
    %211 = vector.broadcast %cst_61 : f32 to vector<8x32xf32>
    %212 = arith.addf %211, %210 : vector<8x32xf32>
    %213 = arith.divf %211, %212 : vector<8x32xf32>
    %214 = arith.mulf %205, %187 : vector<8x32xf32>
    %215 = arith.mulf %199, %207 : vector<8x32xf32>
    %216 = arith.addf %214, %215 : vector<8x32xf32>
    %217 = math.tanh %216 : vector<8x32xf32>
    %218 = arith.mulf %213, %217 : vector<8x32xf32>
    %c48_62 = arith.constant 48 : index
    %c0_63 = arith.constant 0 : index
    %219 = vector.load %arg12[%c48_62, %c0_63] : memref<64x32xf32, #tpu.memory_space<vmem>>, vector<8x32xf32>
    tpu.vector_store %arg12[%c48_62, %c0_63], %218 {strides = array<i32>} : memref<64x32xf32, #tpu.memory_space<vmem>>, vector<8x32xf32>,
    %c56 = arith.constant 56 : index
    %c0_64 = arith.constant 0 : index
    %220 = vector.load %arg11[%c56, %c0_64] : memref<64x128xf32, #tpu.memory_space<vmem>>, vector<8x128xf32>
    %cst_65 = arith.constant dense<0.000000e+00> : vector<8x128xf32>
    %221 = tpu.matmul %218, %9, %cst_65 {dimension_numbers = #tpu.dot_dimension_numbers<[1], [0], [0], [1], [0, 0, 1, 1], [], []>} : vector<8x32xf32>, vector<32x128xf32>, vector<8x128xf32> -> vector<8x128xf32>
    %222 = arith.addf %220, %221 : vector<8x128xf32>
    %223 = vector.extract_strided_slice %222 {offsets = [0, 0], sizes = [8, 32], strides = [1, 1]} : vector<8x128xf32> to vector<8x32xf32>
    %224 = arith.negf %223 : vector<8x32xf32>
    %225 = math.exp %224 : vector<8x32xf32>
    %cst_66 = arith.constant 1.000000e+00 : f32
    %226 = vector.broadcast %cst_66 : f32 to vector<8x32xf32>
    %227 = arith.addf %226, %225 : vector<8x32xf32>
    %228 = arith.divf %226, %227 : vector<8x32xf32>
    %229 = vector.extract_strided_slice %222 {offsets = [0, 32], sizes = [8, 32], strides = [1, 1]} : vector<8x128xf32> to vector<8x32xf32>
    %230 = arith.negf %229 : vector<8x32xf32>
    %231 = math.exp %230 : vector<8x32xf32>
    %cst_67 = arith.constant 1.000000e+00 : f32
    %232 = vector.broadcast %cst_67 : f32 to vector<8x32xf32>
    %233 = arith.addf %232, %231 : vector<8x32xf32>
    %234 = arith.divf %232, %233 : vector<8x32xf32>
    %235 = vector.extract_strided_slice %222 {offsets = [0, 64], sizes = [8, 32], strides = [1, 1]} : vector<8x128xf32> to vector<8x32xf32>
    %236 = math.tanh %235 : vector<8x32xf32>
    %237 = vector.extract_strided_slice %222 {offsets = [0, 96], sizes = [8, 32], strides = [1, 1]} : vector<8x128xf32> to vector<8x32xf32>
    %238 = arith.negf %237 : vector<8x32xf32>
    %239 = math.exp %238 : vector<8x32xf32>
    %cst_68 = arith.constant 1.000000e+00 : f32
    %240 = vector.broadcast %cst_68 : f32 to vector<8x32xf32>
    %241 = arith.addf %240, %239 : vector<8x32xf32>
    %242 = arith.divf %240, %241 : vector<8x32xf32>
    %243 = arith.mulf %234, %216 : vector<8x32xf32>
    %244 = arith.mulf %228, %236 : vector<8x32xf32>
    %245 = arith.addf %243, %244 : vector<8x32xf32>
    %246 = math.tanh %245 : vector<8x32xf32>
    %247 = arith.mulf %242, %246 : vector<8x32xf32>
    %c56_69 = arith.constant 56 : index
    %c0_70 = arith.constant 0 : index
    %248 = vector.load %arg12[%c56_69, %c0_70] : memref<64x32xf32, #tpu.memory_space<vmem>>, vector<8x32xf32>
    tpu.vector_store %arg12[%c56_69, %c0_70], %247 {strides = array<i32>} : memref<64x32xf32, #tpu.memory_space<vmem>>, vector<8x32xf32>,
    %c0_71 = arith.constant 0 : index
    %c0_72 = arith.constant 0 : index
    %249 = vector.load %arg12[%c0_71, %c0_72] : memref<64x32xf32, #tpu.memory_space<vmem>>, vector<64x32xf32>
    %c0_73 = arith.constant 0 : index
    %c0_74 = arith.constant 0 : index
    %250 = vector.load %arg5[%c0_73, %c0_74] : memref<32x128xf32, #tpu.memory_space<vmem>>, vector<32x128xf32>
    %c0_75 = arith.constant 0 : index
    %c0_76 = arith.constant 0 : index
    %251 = vector.load %arg6[%c0_75, %c0_76] : memref<32x128xf32, #tpu.memory_space<vmem>>, vector<32x128xf32>
    %c0_77 = arith.constant 0 : index
    %c0_78 = arith.constant 0 : index
    %252 = vector.load %arg7[%c0_77, %c0_78] : memref<1x128xf32, #tpu.memory_space<vmem>>, vector<1x128xf32>
    %cst_79 = arith.constant dense<0.000000e+00> : vector<64x128xf32>
    %253 = tpu.matmul %249, %250, %cst_79 {dimension_numbers = #tpu.dot_dimension_numbers<[1], [0], [0], [1], [0, 0, 1, 1], [], []>} : vector<64x32xf32>, vector<32x128xf32>, vector<64x128xf32> -> vector<64x128xf32>
    %254 = vector.broadcast %252 : vector<1x128xf32> to vector<64x128xf32>
    %255 = arith.addf %253, %254 : vector<64x128xf32>
    %c0_80 = arith.constant 0 : index
    %c0_81 = arith.constant 0 : index
    %256 = vector.load %arg11[%c0_80, %c0_81] : memref<64x128xf32, #tpu.memory_space<vmem>>, vector<64x128xf32>
    tpu.vector_store %arg11[%c0_80, %c0_81], %255 {strides = array<i32>} : memref<64x128xf32, #tpu.memory_space<vmem>>, vector<64x128xf32>,
    %cst_82 = arith.constant 0.000000e+00 : f32
    %257 = vector.broadcast %cst_82 : f32 to vector<8x32xf32>
    %cst_83 = arith.constant 0.000000e+00 : f32
    %258 = vector.broadcast %cst_83 : f32 to vector<8x32xf32>
    %c0_84 = arith.constant 0 : index
    %c0_85 = arith.constant 0 : index
    %259 = vector.load %arg11[%c0_84, %c0_85] : memref<64x128xf32, #tpu.memory_space<vmem>>, vector<8x128xf32>
    %cst_86 = arith.constant dense<0.000000e+00> : vector<8x128xf32>
    %260 = tpu.matmul %257, %251, %cst_86 {dimension_numbers = #tpu.dot_dimension_numbers<[1], [0], [0], [1], [0, 0, 1, 1], [], []>} : vector<8x32xf32>, vector<32x128xf32>, vector<8x128xf32> -> vector<8x128xf32>
    %261 = arith.addf %259, %260 : vector<8x128xf32>
    %262 = vector.extract_strided_slice %261 {offsets = [0, 0], sizes = [8, 32], strides = [1, 1]} : vector<8x128xf32> to vector<8x32xf32>
    %263 = arith.negf %262 : vector<8x32xf32>
    %264 = math.exp %263 : vector<8x32xf32>
    %cst_87 = arith.constant 1.000000e+00 : f32
    %265 = vector.broadcast %cst_87 : f32 to vector<8x32xf32>
    %266 = arith.addf %265, %264 : vector<8x32xf32>
    %267 = arith.divf %265, %266 : vector<8x32xf32>
    %268 = vector.extract_strided_slice %261 {offsets = [0, 32], sizes = [8, 32], strides = [1, 1]} : vector<8x128xf32> to vector<8x32xf32>
    %269 = arith.negf %268 : vector<8x32xf32>
    %270 = math.exp %269 : vector<8x32xf32>
    %cst_88 = arith.constant 1.000000e+00 : f32
    %271 = vector.broadcast %cst_88 : f32 to vector<8x32xf32>
    %272 = arith.addf %271, %270 : vector<8x32xf32>
    %273 = arith.divf %271, %272 : vector<8x32xf32>
    %274 = vector.extract_strided_slice %261 {offsets = [0, 64], sizes = [8, 32], strides = [1, 1]} : vector<8x128xf32> to vector<8x32xf32>
    %275 = math.tanh %274 : vector<8x32xf32>
    %276 = vector.extract_strided_slice %261 {offsets = [0, 96], sizes = [8, 32], strides = [1, 1]} : vector<8x128xf32> to vector<8x32xf32>
    %277 = arith.negf %276 : vector<8x32xf32>
    %278 = math.exp %277 : vector<8x32xf32>
    %cst_89 = arith.constant 1.000000e+00 : f32
    %279 = vector.broadcast %cst_89 : f32 to vector<8x32xf32>
    %280 = arith.addf %279, %278 : vector<8x32xf32>
    %281 = arith.divf %279, %280 : vector<8x32xf32>
    %282 = arith.mulf %273, %258 : vector<8x32xf32>
    %283 = arith.mulf %267, %275 : vector<8x32xf32>
    %284 = arith.addf %282, %283 : vector<8x32xf32>
    %285 = math.tanh %284 : vector<8x32xf32>
    %286 = arith.mulf %281, %285 : vector<8x32xf32>
    %c0_90 = arith.constant 0 : index
    %c0_91 = arith.constant 0 : index
    %287 = vector.load %arg12[%c0_90, %c0_91] : memref<64x32xf32, #tpu.memory_space<vmem>>, vector<8x32xf32>
    tpu.vector_store %arg12[%c0_90, %c0_91], %286 {strides = array<i32>} : memref<64x32xf32, #tpu.memory_space<vmem>>, vector<8x32xf32>,
    %c8_92 = arith.constant 8 : index
    %c0_93 = arith.constant 0 : index
    %288 = vector.load %arg11[%c8_92, %c0_93] : memref<64x128xf32, #tpu.memory_space<vmem>>, vector<8x128xf32>
    %cst_94 = arith.constant dense<0.000000e+00> : vector<8x128xf32>
    %289 = tpu.matmul %286, %251, %cst_94 {dimension_numbers = #tpu.dot_dimension_numbers<[1], [0], [0], [1], [0, 0, 1, 1], [], []>} : vector<8x32xf32>, vector<32x128xf32>, vector<8x128xf32> -> vector<8x128xf32>
    %290 = arith.addf %288, %289 : vector<8x128xf32>
    %291 = vector.extract_strided_slice %290 {offsets = [0, 0], sizes = [8, 32], strides = [1, 1]} : vector<8x128xf32> to vector<8x32xf32>
    %292 = arith.negf %291 : vector<8x32xf32>
    %293 = math.exp %292 : vector<8x32xf32>
    %cst_95 = arith.constant 1.000000e+00 : f32
    %294 = vector.broadcast %cst_95 : f32 to vector<8x32xf32>
    %295 = arith.addf %294, %293 : vector<8x32xf32>
    %296 = arith.divf %294, %295 : vector<8x32xf32>
    %297 = vector.extract_strided_slice %290 {offsets = [0, 32], sizes = [8, 32], strides = [1, 1]} : vector<8x128xf32> to vector<8x32xf32>
    %298 = arith.negf %297 : vector<8x32xf32>
    %299 = math.exp %298 : vector<8x32xf32>
    %cst_96 = arith.constant 1.000000e+00 : f32
    %300 = vector.broadcast %cst_96 : f32 to vector<8x32xf32>
    %301 = arith.addf %300, %299 : vector<8x32xf32>
    %302 = arith.divf %300, %301 : vector<8x32xf32>
    %303 = vector.extract_strided_slice %290 {offsets = [0, 64], sizes = [8, 32], strides = [1, 1]} : vector<8x128xf32> to vector<8x32xf32>
    %304 = math.tanh %303 : vector<8x32xf32>
    %305 = vector.extract_strided_slice %290 {offsets = [0, 96], sizes = [8, 32], strides = [1, 1]} : vector<8x128xf32> to vector<8x32xf32>
    %306 = arith.negf %305 : vector<8x32xf32>
    %307 = math.exp %306 : vector<8x32xf32>
    %cst_97 = arith.constant 1.000000e+00 : f32
    %308 = vector.broadcast %cst_97 : f32 to vector<8x32xf32>
    %309 = arith.addf %308, %307 : vector<8x32xf32>
    %310 = arith.divf %308, %309 : vector<8x32xf32>
    %311 = arith.mulf %302, %284 : vector<8x32xf32>
    %312 = arith.mulf %296, %304 : vector<8x32xf32>
    %313 = arith.addf %311, %312 : vector<8x32xf32>
    %314 = math.tanh %313 : vector<8x32xf32>
    %315 = arith.mulf %310, %314 : vector<8x32xf32>
    %c8_98 = arith.constant 8 : index
    %c0_99 = arith.constant 0 : index
    %316 = vector.load %arg12[%c8_98, %c0_99] : memref<64x32xf32, #tpu.memory_space<vmem>>, vector<8x32xf32>
    tpu.vector_store %arg12[%c8_98, %c0_99], %315 {strides = array<i32>} : memref<64x32xf32, #tpu.memory_space<vmem>>, vector<8x32xf32>,
    %c16_100 = arith.constant 16 : index
    %c0_101 = arith.constant 0 : index
    %317 = vector.load %arg11[%c16_100, %c0_101] : memref<64x128xf32, #tpu.memory_space<vmem>>, vector<8x128xf32>
    %cst_102 = arith.constant dense<0.000000e+00> : vector<8x128xf32>
    %318 = tpu.matmul %315, %251, %cst_102 {dimension_numbers = #tpu.dot_dimension_numbers<[1], [0], [0], [1], [0, 0, 1, 1], [], []>} : vector<8x32xf32>, vector<32x128xf32>, vector<8x128xf32> -> vector<8x128xf32>
    %319 = arith.addf %317, %318 : vector<8x128xf32>
    %320 = vector.extract_strided_slice %319 {offsets = [0, 0], sizes = [8, 32], strides = [1, 1]} : vector<8x128xf32> to vector<8x32xf32>
    %321 = arith.negf %320 : vector<8x32xf32>
    %322 = math.exp %321 : vector<8x32xf32>
    %cst_103 = arith.constant 1.000000e+00 : f32
    %323 = vector.broadcast %cst_103 : f32 to vector<8x32xf32>
    %324 = arith.addf %323, %322 : vector<8x32xf32>
    %325 = arith.divf %323, %324 : vector<8x32xf32>
    %326 = vector.extract_strided_slice %319 {offsets = [0, 32], sizes = [8, 32], strides = [1, 1]} : vector<8x128xf32> to vector<8x32xf32>
    %327 = arith.negf %326 : vector<8x32xf32>
    %328 = math.exp %327 : vector<8x32xf32>
    %cst_104 = arith.constant 1.000000e+00 : f32
    %329 = vector.broadcast %cst_104 : f32 to vector<8x32xf32>
    %330 = arith.addf %329, %328 : vector<8x32xf32>
    %331 = arith.divf %329, %330 : vector<8x32xf32>
    %332 = vector.extract_strided_slice %319 {offsets = [0, 64], sizes = [8, 32], strides = [1, 1]} : vector<8x128xf32> to vector<8x32xf32>
    %333 = math.tanh %332 : vector<8x32xf32>
    %334 = vector.extract_strided_slice %319 {offsets = [0, 96], sizes = [8, 32], strides = [1, 1]} : vector<8x128xf32> to vector<8x32xf32>
    %335 = arith.negf %334 : vector<8x32xf32>
    %336 = math.exp %335 : vector<8x32xf32>
    %cst_105 = arith.constant 1.000000e+00 : f32
    %337 = vector.broadcast %cst_105 : f32 to vector<8x32xf32>
    %338 = arith.addf %337, %336 : vector<8x32xf32>
    %339 = arith.divf %337, %338 : vector<8x32xf32>
    %340 = arith.mulf %331, %313 : vector<8x32xf32>
    %341 = arith.mulf %325, %333 : vector<8x32xf32>
    %342 = arith.addf %340, %341 : vector<8x32xf32>
    %343 = math.tanh %342 : vector<8x32xf32>
    %344 = arith.mulf %339, %343 : vector<8x32xf32>
    %c16_106 = arith.constant 16 : index
    %c0_107 = arith.constant 0 : index
    %345 = vector.load %arg12[%c16_106, %c0_107] : memref<64x32xf32, #tpu.memory_space<vmem>>, vector<8x32xf32>
    tpu.vector_store %arg12[%c16_106, %c0_107], %344 {strides = array<i32>} : memref<64x32xf32, #tpu.memory_space<vmem>>, vector<8x32xf32>,
    %c24_108 = arith.constant 24 : index
    %c0_109 = arith.constant 0 : index
    %346 = vector.load %arg11[%c24_108, %c0_109] : memref<64x128xf32, #tpu.memory_space<vmem>>, vector<8x128xf32>
    %cst_110 = arith.constant dense<0.000000e+00> : vector<8x128xf32>
    %347 = tpu.matmul %344, %251, %cst_110 {dimension_numbers = #tpu.dot_dimension_numbers<[1], [0], [0], [1], [0, 0, 1, 1], [], []>} : vector<8x32xf32>, vector<32x128xf32>, vector<8x128xf32> -> vector<8x128xf32>
    %348 = arith.addf %346, %347 : vector<8x128xf32>
    %349 = vector.extract_strided_slice %348 {offsets = [0, 0], sizes = [8, 32], strides = [1, 1]} : vector<8x128xf32> to vector<8x32xf32>
    %350 = arith.negf %349 : vector<8x32xf32>
    %351 = math.exp %350 : vector<8x32xf32>
    %cst_111 = arith.constant 1.000000e+00 : f32
    %352 = vector.broadcast %cst_111 : f32 to vector<8x32xf32>
    %353 = arith.addf %352, %351 : vector<8x32xf32>
    %354 = arith.divf %352, %353 : vector<8x32xf32>
    %355 = vector.extract_strided_slice %348 {offsets = [0, 32], sizes = [8, 32], strides = [1, 1]} : vector<8x128xf32> to vector<8x32xf32>
    %356 = arith.negf %355 : vector<8x32xf32>
    %357 = math.exp %356 : vector<8x32xf32>
    %cst_112 = arith.constant 1.000000e+00 : f32
    %358 = vector.broadcast %cst_112 : f32 to vector<8x32xf32>
    %359 = arith.addf %358, %357 : vector<8x32xf32>
    %360 = arith.divf %358, %359 : vector<8x32xf32>
    %361 = vector.extract_strided_slice %348 {offsets = [0, 64], sizes = [8, 32], strides = [1, 1]} : vector<8x128xf32> to vector<8x32xf32>
    %362 = math.tanh %361 : vector<8x32xf32>
    %363 = vector.extract_strided_slice %348 {offsets = [0, 96], sizes = [8, 32], strides = [1, 1]} : vector<8x128xf32> to vector<8x32xf32>
    %364 = arith.negf %363 : vector<8x32xf32>
    %365 = math.exp %364 : vector<8x32xf32>
    %cst_113 = arith.constant 1.000000e+00 : f32
    %366 = vector.broadcast %cst_113 : f32 to vector<8x32xf32>
    %367 = arith.addf %366, %365 : vector<8x32xf32>
    %368 = arith.divf %366, %367 : vector<8x32xf32>
    %369 = arith.mulf %360, %342 : vector<8x32xf32>
    %370 = arith.mulf %354, %362 : vector<8x32xf32>
    %371 = arith.addf %369, %370 : vector<8x32xf32>
    %372 = math.tanh %371 : vector<8x32xf32>
    %373 = arith.mulf %368, %372 : vector<8x32xf32>
    %c24_114 = arith.constant 24 : index
    %c0_115 = arith.constant 0 : index
    %374 = vector.load %arg12[%c24_114, %c0_115] : memref<64x32xf32, #tpu.memory_space<vmem>>, vector<8x32xf32>
    tpu.vector_store %arg12[%c24_114, %c0_115], %373 {strides = array<i32>} : memref<64x32xf32, #tpu.memory_space<vmem>>, vector<8x32xf32>,
    %c32_116 = arith.constant 32 : index
    %c0_117 = arith.constant 0 : index
    %375 = vector.load %arg11[%c32_116, %c0_117] : memref<64x128xf32, #tpu.memory_space<vmem>>, vector<8x128xf32>
    %cst_118 = arith.constant dense<0.000000e+00> : vector<8x128xf32>
    %376 = tpu.matmul %373, %251, %cst_118 {dimension_numbers = #tpu.dot_dimension_numbers<[1], [0], [0], [1], [0, 0, 1, 1], [], []>} : vector<8x32xf32>, vector<32x128xf32>, vector<8x128xf32> -> vector<8x128xf32>
    %377 = arith.addf %375, %376 : vector<8x128xf32>
    %378 = vector.extract_strided_slice %377 {offsets = [0, 0], sizes = [8, 32], strides = [1, 1]} : vector<8x128xf32> to vector<8x32xf32>
    %379 = arith.negf %378 : vector<8x32xf32>
    %380 = math.exp %379 : vector<8x32xf32>
    %cst_119 = arith.constant 1.000000e+00 : f32
    %381 = vector.broadcast %cst_119 : f32 to vector<8x32xf32>
    %382 = arith.addf %381, %380 : vector<8x32xf32>
    %383 = arith.divf %381, %382 : vector<8x32xf32>
    %384 = vector.extract_strided_slice %377 {offsets = [0, 32], sizes = [8, 32], strides = [1, 1]} : vector<8x128xf32> to vector<8x32xf32>
    %385 = arith.negf %384 : vector<8x32xf32>
    %386 = math.exp %385 : vector<8x32xf32>
    %cst_120 = arith.constant 1.000000e+00 : f32
    %387 = vector.broadcast %cst_120 : f32 to vector<8x32xf32>
    %388 = arith.addf %387, %386 : vector<8x32xf32>
    %389 = arith.divf %387, %388 : vector<8x32xf32>
    %390 = vector.extract_strided_slice %377 {offsets = [0, 64], sizes = [8, 32], strides = [1, 1]} : vector<8x128xf32> to vector<8x32xf32>
    %391 = math.tanh %390 : vector<8x32xf32>
    %392 = vector.extract_strided_slice %377 {offsets = [0, 96], sizes = [8, 32], strides = [1, 1]} : vector<8x128xf32> to vector<8x32xf32>
    %393 = arith.negf %392 : vector<8x32xf32>
    %394 = math.exp %393 : vector<8x32xf32>
    %cst_121 = arith.constant 1.000000e+00 : f32
    %395 = vector.broadcast %cst_121 : f32 to vector<8x32xf32>
    %396 = arith.addf %395, %394 : vector<8x32xf32>
    %397 = arith.divf %395, %396 : vector<8x32xf32>
    %398 = arith.mulf %389, %371 : vector<8x32xf32>
    %399 = arith.mulf %383, %391 : vector<8x32xf32>
    %400 = arith.addf %398, %399 : vector<8x32xf32>
    %401 = math.tanh %400 : vector<8x32xf32>
    %402 = arith.mulf %397, %401 : vector<8x32xf32>
    %c32_122 = arith.constant 32 : index
    %c0_123 = arith.constant 0 : index
    %403 = vector.load %arg12[%c32_122, %c0_123] : memref<64x32xf32, #tpu.memory_space<vmem>>, vector<8x32xf32>
    tpu.vector_store %arg12[%c32_122, %c0_123], %402 {strides = array<i32>} : memref<64x32xf32, #tpu.memory_space<vmem>>, vector<8x32xf32>,
    %c40_124 = arith.constant 40 : index
    %c0_125 = arith.constant 0 : index
    %404 = vector.load %arg11[%c40_124, %c0_125] : memref<64x128xf32, #tpu.memory_space<vmem>>, vector<8x128xf32>
    %cst_126 = arith.constant dense<0.000000e+00> : vector<8x128xf32>
    %405 = tpu.matmul %402, %251, %cst_126 {dimension_numbers = #tpu.dot_dimension_numbers<[1], [0], [0], [1], [0, 0, 1, 1], [], []>} : vector<8x32xf32>, vector<32x128xf32>, vector<8x128xf32> -> vector<8x128xf32>
    %406 = arith.addf %404, %405 : vector<8x128xf32>
    %407 = vector.extract_strided_slice %406 {offsets = [0, 0], sizes = [8, 32], strides = [1, 1]} : vector<8x128xf32> to vector<8x32xf32>
    %408 = arith.negf %407 : vector<8x32xf32>
    %409 = math.exp %408 : vector<8x32xf32>
    %cst_127 = arith.constant 1.000000e+00 : f32
    %410 = vector.broadcast %cst_127 : f32 to vector<8x32xf32>
    %411 = arith.addf %410, %409 : vector<8x32xf32>
    %412 = arith.divf %410, %411 : vector<8x32xf32>
    %413 = vector.extract_strided_slice %406 {offsets = [0, 32], sizes = [8, 32], strides = [1, 1]} : vector<8x128xf32> to vector<8x32xf32>
    %414 = arith.negf %413 : vector<8x32xf32>
    %415 = math.exp %414 : vector<8x32xf32>
    %cst_128 = arith.constant 1.000000e+00 : f32
    %416 = vector.broadcast %cst_128 : f32 to vector<8x32xf32>
    %417 = arith.addf %416, %415 : vector<8x32xf32>
    %418 = arith.divf %416, %417 : vector<8x32xf32>
    %419 = vector.extract_strided_slice %406 {offsets = [0, 64], sizes = [8, 32], strides = [1, 1]} : vector<8x128xf32> to vector<8x32xf32>
    %420 = math.tanh %419 : vector<8x32xf32>
    %421 = vector.extract_strided_slice %406 {offsets = [0, 96], sizes = [8, 32], strides = [1, 1]} : vector<8x128xf32> to vector<8x32xf32>
    %422 = arith.negf %421 : vector<8x32xf32>
    %423 = math.exp %422 : vector<8x32xf32>
    %cst_129 = arith.constant 1.000000e+00 : f32
    %424 = vector.broadcast %cst_129 : f32 to vector<8x32xf32>
    %425 = arith.addf %424, %423 : vector<8x32xf32>
    %426 = arith.divf %424, %425 : vector<8x32xf32>
    %427 = arith.mulf %418, %400 : vector<8x32xf32>
    %428 = arith.mulf %412, %420 : vector<8x32xf32>
    %429 = arith.addf %427, %428 : vector<8x32xf32>
    %430 = math.tanh %429 : vector<8x32xf32>
    %431 = arith.mulf %426, %430 : vector<8x32xf32>
    %c40_130 = arith.constant 40 : index
    %c0_131 = arith.constant 0 : index
    %432 = vector.load %arg12[%c40_130, %c0_131] : memref<64x32xf32, #tpu.memory_space<vmem>>, vector<8x32xf32>
    tpu.vector_store %arg12[%c40_130, %c0_131], %431 {strides = array<i32>} : memref<64x32xf32, #tpu.memory_space<vmem>>, vector<8x32xf32>,
    %c48_132 = arith.constant 48 : index
    %c0_133 = arith.constant 0 : index
    %433 = vector.load %arg11[%c48_132, %c0_133] : memref<64x128xf32, #tpu.memory_space<vmem>>, vector<8x128xf32>
    %cst_134 = arith.constant dense<0.000000e+00> : vector<8x128xf32>
    %434 = tpu.matmul %431, %251, %cst_134 {dimension_numbers = #tpu.dot_dimension_numbers<[1], [0], [0], [1], [0, 0, 1, 1], [], []>} : vector<8x32xf32>, vector<32x128xf32>, vector<8x128xf32> -> vector<8x128xf32>
    %435 = arith.addf %433, %434 : vector<8x128xf32>
    %436 = vector.extract_strided_slice %435 {offsets = [0, 0], sizes = [8, 32], strides = [1, 1]} : vector<8x128xf32> to vector<8x32xf32>
    %437 = arith.negf %436 : vector<8x32xf32>
    %438 = math.exp %437 : vector<8x32xf32>
    %cst_135 = arith.constant 1.000000e+00 : f32
    %439 = vector.broadcast %cst_135 : f32 to vector<8x32xf32>
    %440 = arith.addf %439, %438 : vector<8x32xf32>
    %441 = arith.divf %439, %440 : vector<8x32xf32>
    %442 = vector.extract_strided_slice %435 {offsets = [0, 32], sizes = [8, 32], strides = [1, 1]} : vector<8x128xf32> to vector<8x32xf32>
    %443 = arith.negf %442 : vector<8x32xf32>
    %444 = math.exp %443 : vector<8x32xf32>
    %cst_136 = arith.constant 1.000000e+00 : f32
    %445 = vector.broadcast %cst_136 : f32 to vector<8x32xf32>
    %446 = arith.addf %445, %444 : vector<8x32xf32>
    %447 = arith.divf %445, %446 : vector<8x32xf32>
    %448 = vector.extract_strided_slice %435 {offsets = [0, 64], sizes = [8, 32], strides = [1, 1]} : vector<8x128xf32> to vector<8x32xf32>
    %449 = math.tanh %448 : vector<8x32xf32>
    %450 = vector.extract_strided_slice %435 {offsets = [0, 96], sizes = [8, 32], strides = [1, 1]} : vector<8x128xf32> to vector<8x32xf32>
    %451 = arith.negf %450 : vector<8x32xf32>
    %452 = math.exp %451 : vector<8x32xf32>
    %cst_137 = arith.constant 1.000000e+00 : f32
    %453 = vector.broadcast %cst_137 : f32 to vector<8x32xf32>
    %454 = arith.addf %453, %452 : vector<8x32xf32>
    %455 = arith.divf %453, %454 : vector<8x32xf32>
    %456 = arith.mulf %447, %429 : vector<8x32xf32>
    %457 = arith.mulf %441, %449 : vector<8x32xf32>
    %458 = arith.addf %456, %457 : vector<8x32xf32>
    %459 = math.tanh %458 : vector<8x32xf32>
    %460 = arith.mulf %455, %459 : vector<8x32xf32>
    %c48_138 = arith.constant 48 : index
    %c0_139 = arith.constant 0 : index
    %461 = vector.load %arg12[%c48_138, %c0_139] : memref<64x32xf32, #tpu.memory_space<vmem>>, vector<8x32xf32>
    tpu.vector_store %arg12[%c48_138, %c0_139], %460 {strides = array<i32>} : memref<64x32xf32, #tpu.memory_space<vmem>>, vector<8x32xf32>,
    %c56_140 = arith.constant 56 : index
    %c0_141 = arith.constant 0 : index
    %462 = vector.load %arg11[%c56_140, %c0_141] : memref<64x128xf32, #tpu.memory_space<vmem>>, vector<8x128xf32>
    %cst_142 = arith.constant dense<0.000000e+00> : vector<8x128xf32>
    %463 = tpu.matmul %460, %251, %cst_142 {dimension_numbers = #tpu.dot_dimension_numbers<[1], [0], [0], [1], [0, 0, 1, 1], [], []>} : vector<8x32xf32>, vector<32x128xf32>, vector<8x128xf32> -> vector<8x128xf32>
    %464 = arith.addf %462, %463 : vector<8x128xf32>
    %465 = vector.extract_strided_slice %464 {offsets = [0, 0], sizes = [8, 32], strides = [1, 1]} : vector<8x128xf32> to vector<8x32xf32>
    %466 = arith.negf %465 : vector<8x32xf32>
    %467 = math.exp %466 : vector<8x32xf32>
    %cst_143 = arith.constant 1.000000e+00 : f32
    %468 = vector.broadcast %cst_143 : f32 to vector<8x32xf32>
    %469 = arith.addf %468, %467 : vector<8x32xf32>
    %470 = arith.divf %468, %469 : vector<8x32xf32>
    %471 = vector.extract_strided_slice %464 {offsets = [0, 32], sizes = [8, 32], strides = [1, 1]} : vector<8x128xf32> to vector<8x32xf32>
    %472 = arith.negf %471 : vector<8x32xf32>
    %473 = math.exp %472 : vector<8x32xf32>
    %cst_144 = arith.constant 1.000000e+00 : f32
    %474 = vector.broadcast %cst_144 : f32 to vector<8x32xf32>
    %475 = arith.addf %474, %473 : vector<8x32xf32>
    %476 = arith.divf %474, %475 : vector<8x32xf32>
    %477 = vector.extract_strided_slice %464 {offsets = [0, 64], sizes = [8, 32], strides = [1, 1]} : vector<8x128xf32> to vector<8x32xf32>
    %478 = math.tanh %477 : vector<8x32xf32>
    %479 = vector.extract_strided_slice %464 {offsets = [0, 96], sizes = [8, 32], strides = [1, 1]} : vector<8x128xf32> to vector<8x32xf32>
    %480 = arith.negf %479 : vector<8x32xf32>
    %481 = math.exp %480 : vector<8x32xf32>
    %cst_145 = arith.constant 1.000000e+00 : f32
    %482 = vector.broadcast %cst_145 : f32 to vector<8x32xf32>
    %483 = arith.addf %482, %481 : vector<8x32xf32>
    %484 = arith.divf %482, %483 : vector<8x32xf32>
    %485 = arith.mulf %476, %458 : vector<8x32xf32>
    %486 = arith.mulf %470, %478 : vector<8x32xf32>
    %487 = arith.addf %485, %486 : vector<8x32xf32>
    %488 = math.tanh %487 : vector<8x32xf32>
    %489 = arith.mulf %484, %488 : vector<8x32xf32>
    %c56_146 = arith.constant 56 : index
    %c0_147 = arith.constant 0 : index
    %490 = vector.load %arg12[%c56_146, %c0_147] : memref<64x32xf32, #tpu.memory_space<vmem>>, vector<8x32xf32>
    tpu.vector_store %arg12[%c56_146, %c0_147], %489 {strides = array<i32>} : memref<64x32xf32, #tpu.memory_space<vmem>>, vector<8x32xf32>,
    %c0_148 = arith.constant 0 : index
    %c0_149 = arith.constant 0 : index
    %491 = vector.load %arg12[%c0_148, %c0_149] : memref<64x32xf32, #tpu.memory_space<vmem>>, vector<64x32xf32>
    %c0_150 = arith.constant 0 : index
    %c0_151 = arith.constant 0 : index
    %492 = vector.load %arg8[%c0_150, %c0_151] : memref<32x16xf32, #tpu.memory_space<vmem>>, vector<32x16xf32>
    %cst_152 = arith.constant dense<0.000000e+00> : vector<64x16xf32>
    %493 = tpu.matmul %491, %492, %cst_152 {dimension_numbers = #tpu.dot_dimension_numbers<[1], [0], [0], [1], [0, 0, 1, 1], [], []>} : vector<64x32xf32>, vector<32x16xf32>, vector<64x16xf32> -> vector<64x16xf32>
    %c0_153 = arith.constant 0 : index
    %c0_154 = arith.constant 0 : index
    %494 = vector.load %arg9[%c0_153, %c0_154] : memref<1x16xf32, #tpu.memory_space<vmem>>, vector<1x16xf32>
    %495 = vector.broadcast %494 : vector<1x16xf32> to vector<64x16xf32>
    %496 = arith.addf %493, %495 : vector<64x16xf32>
    %c0_155 = arith.constant 0 : index
    %c0_156 = arith.constant 0 : index
    %497 = vector.load %arg10[%c0_155, %c0_156] : memref<64x16xf32, #tpu.memory_space<vmem>>, vector<64x16xf32>
    tpu.vector_store %arg10[%c0_155, %c0_156], %496 {strides = array<i32>} : memref<64x16xf32, #tpu.memory_space<vmem>>, vector<64x16xf32>,
    return
  }
}

</mosaic_0001>

<llo_original>
// kernel: hypernym_hyponym_lstm_forward.1
$region0: #{hypernym_hyponym_lstm_forward.1}
  #allocation0 [shape = 'u32[]', space=smem, size = 0x4, offset = 0x4, fixed_abs, tag = 'smem constant byte address 0x4 - core index']
  #allocation1 [shape = 'u32[144,128]{1,0:T(1,128)}', space=vmem, size = 0x12000, scoped, tag = 'internal scratch']
  #allocation2 [shape = 'f32[64,128]{1,0:T(8,128)}', space=vmem, size = 0x8000, scoped, tag = 'scratch operand']
  #allocation3 [shape = 'f32[64,32]{1,0:T(8,128)}', space=vmem, size = 0x8000, scoped, tag = 'scratch operand']
  %s0 = inlined_call_operand.vmem [shape: s32[64,1], index: 0, kind: input, shape index: {}]
  %s1 = inlined_call_operand.vmem [shape: f32[50,32], index: 1, kind: input, shape index: {}]
  %s2 = inlined_call_operand.vmem [shape: f32[32,128], index: 2, kind: input, shape index: {}]
  %s3 = inlined_call_operand.vmem [shape: f32[32,128], index: 3, kind: input, shape index: {}]
  %s4 = inlined_call_operand.vmem [shape: f32[1,128], index: 4, kind: input, shape index: {}]
  %s5 = inlined_call_operand.vmem [shape: f32[32,128], index: 5, kind: input, shape index: {}]
  %s6 = inlined_call_operand.vmem [shape: f32[32,128], index: 6, kind: input, shape index: {}]
  %s7 = inlined_call_operand.vmem [shape: f32[1,128], index: 7, kind: input, shape index: {}]
  %s8 = inlined_call_operand.vmem [shape: f32[32,16], index: 8, kind: input, shape index: {}]
  %s9 = inlined_call_operand.vmem [shape: f32[1,16], index: 9, kind: input, shape index: {}]
  %s10 = inlined_call_operand.vmem [shape: f32[64,16], index: 10, kind: output, shape index: {}]
  %s11 = sld [smem:[#allocation0]]
  $region50: #{hypernym_hyponym_lstm_forward.1} parent=0
    _
  %s13 = ssub.s32 1, %s11
  %s14 = scalar_select 0, %s13, %s11
  // Predicated region
  $region2: #{hypernym_hyponym_lstm_forward.1} parent=0 // pred_check
    _
  $region3: #{hypernym_hyponym_lstm_forward.1} parent=0 // pred_check_branch
    %16 = sbr.rel (0) target = $region5
  $region4: #{hypernym_hyponym_lstm_forward.1} parent=0 // pred_region
    _
  $region5: #{hypernym_hyponym_lstm_forward.1} parent=0 // pred_fallthru
    _
  // Predicated region
  $region6: #{hypernym_hyponym_lstm_forward.1} parent=0 // pred_check
    _
  $region7: #{hypernym_hyponym_lstm_forward.1} parent=0 // pred_check_branch
    %18 = sbr.rel (0) target = $region9
  $region8: #{hypernym_hyponym_lstm_forward.1} parent=0 // pred_region
    _
  $region9: #{hypernym_hyponym_lstm_forward.1} parent=0 // pred_fallthru
    _
  // Predicated region
  $region10: #{hypernym_hyponym_lstm_forward.1} parent=0 // pred_check
    _
  $region11: #{hypernym_hyponym_lstm_forward.1} parent=0 // pred_check_branch
    %20 = sbr.rel (0) target = $region13
  $region12: #{hypernym_hyponym_lstm_forward.1} parent=0 // pred_region
    _
  $region13: #{hypernym_hyponym_lstm_forward.1} parent=0 // pred_fallthru
    _
  // Predicated region
  $region14: #{hypernym_hyponym_lstm_forward.1} parent=0 // pred_check
    _
  $region15: #{hypernym_hyponym_lstm_forward.1} parent=0 // pred_check_branch
    %22 = sbr.rel (0) target = $region17
  $region16: #{hypernym_hyponym_lstm_forward.1} parent=0 // pred_region
    _
  $region17: #{hypernym_hyponym_lstm_forward.1} parent=0 // pred_fallthru
    _
  // Predicated region
  $region18: #{hypernym_hyponym_lstm_forward.1} parent=0 // pred_check
    _
  $region19: #{hypernym_hyponym_lstm_forward.1} parent=0 // pred_check_branch
    %24 = sbr.rel (0) target = $region21
  $region20: #{hypernym_hyponym_lstm_forward.1} parent=0 // pred_region
    _
  $region21: #{hypernym_hyponym_lstm_forward.1} parent=0 // pred_fallthru
    _
  // Predicated region
  $region22: #{hypernym_hyponym_lstm_forward.1} parent=0 // pred_check
    _
  $region23: #{hypernym_hyponym_lstm_forward.1} parent=0 // pred_check_branch
    %26 = sbr.rel (0) target = $region25
  $region24: #{hypernym_hyponym_lstm_forward.1} parent=0 // pred_region
    _
  $region25: #{hypernym_hyponym_lstm_forward.1} parent=0 // pred_fallthru
    _
  // Predicated region
  $region26: #{hypernym_hyponym_lstm_forward.1} parent=0 // pred_check
    _
  $region27: #{hypernym_hyponym_lstm_forward.1} parent=0 // pred_check_branch
    %28 = sbr.rel (0) target = $region29
  $region28: #{hypernym_hyponym_lstm_forward.1} parent=0 // pred_region
    _
  $region29: #{hypernym_hyponym_lstm_forward.1} parent=0 // pred_fallthru
    _
  // Predicated region
  $region30: #{hypernym_hyponym_lstm_forward.1} parent=0 // pred_check
    _
  $region31: #{hypernym_hyponym_lstm_forward.1} parent=0 // pred_check_branch
    %30 = sbr.rel (0) target = $region33
  $region32: #{hypernym_hyponym_lstm_forward.1} parent=0 // pred_region
    _
  $region33: #{hypernym_hyponym_lstm_forward.1} parent=0 // pred_fallthru
    _
  // Predicated region
  $region34: #{hypernym_hyponym_lstm_forward.1} parent=0 // pred_check
    _
  $region35: #{hypernym_hyponym_lstm_forward.1} parent=0 // pred_check_branch
    %32 = sbr.rel (0) target = $region37
  $region36: #{hypernym_hyponym_lstm_forward.1} parent=0 // pred_region
    _
  $region37: #{hypernym_hyponym_lstm_forward.1} parent=0 // pred_fallthru
    _
  // Predicated region
  $region38: #{hypernym_hyponym_lstm_forward.1} parent=0 // pred_check
    _
  $region39: #{hypernym_hyponym_lstm_forward.1} parent=0 // pred_check_branch
    %34 = sbr.rel (0) target = $region41
  $region40: #{hypernym_hyponym_lstm_forward.1} parent=0 // pred_region
    _
  $region41: #{hypernym_hyponym_lstm_forward.1} parent=0 // pred_fallthru
    _
  %v35 = vld [vmem:[%s0] sm:$0xff]
  %v36 = vld [vmem:[%s0 + $0x8] sm:$0xff]
  %v37 = vld [vmem:[%s0 + $0x10] sm:$0xff]
  %v38 = vld [vmem:[%s0 + $0x18] sm:$0xff]
  %v39 = vld [vmem:[%s0 + $0x20] sm:$0xff]
  %v40 = vld [vmem:[%s0 + $0x28] sm:$0xff]
  %v41 = vld [vmem:[%s0 + $0x30] sm:$0xff]
  %v42 = vld [vmem:[%s0 + $0x38] sm:$0xff]
  %v43 = vlaneseq
  %v44 = vand.u32 %v43, 127
  %45 = vset.pattern.permute.xlu0 0
  %46 = vperm.xlu0 %45, %v35
  %v47 = vpop.permute.xlu0 %46
  %48 = vset.pattern.permute.xlu0 0
  %49 = vperm.xlu0 %48, %v36
  %v50 = vpop.permute.xlu0 %49
  %51 = vset.pattern.permute.xlu0 0
  %52 = vperm.xlu0 %51, %v37
  %v53 = vpop.permute.xlu0 %52
  %54 = vset.pattern.permute.xlu0 0
  %55 = vperm.xlu0 %54, %v38
  %v56 = vpop.permute.xlu0 %55
  %57 = vset.pattern.permute.xlu0 0
  %58 = vperm.xlu0 %57, %v39
  %v59 = vpop.permute.xlu0 %58
  %60 = vset.pattern.permute.xlu0 0
  %61 = vperm.xlu0 %60, %v40
  %v62 = vpop.permute.xlu0 %61
  %63 = vset.pattern.permute.xlu0 0
  %64 = vperm.xlu0 %63, %v41
  %v65 = vpop.permute.xlu0 %64
  %66 = vset.pattern.permute.xlu0 0
  %67 = vperm.xlu0 %66, %v42
  %v68 = vpop.permute.xlu0 %67
  %vm69 = vcmp.eq.s32.totalorder %v44, %v47
  %vm70 = vcmp.eq.s32.totalorder %v44, %v50
  %vm71 = vcmp.eq.s32.totalorder %v44, %v53
  %vm72 = vcmp.eq.s32.totalorder %v44, %v56
  %vm73 = vcmp.eq.s32.totalorder %v44, %v59
  %vm74 = vcmp.eq.s32.totalorder %v44, %v62
  %vm75 = vcmp.eq.s32.totalorder %v44, %v65
  %vm76 = vcmp.eq.s32.totalorder %v44, %v68
  %v77 = vsel %vm69, 1, 0
  %v78 = vsel %vm70, 1, 0
  %v79 = vsel %vm71, 1, 0
  %v80 = vsel %vm72, 1, 0
  %v81 = vsel %vm73, 1, 0
  %v82 = vsel %vm74, 1, 0
  %v83 = vsel %vm75, 1, 0
  %v84 = vsel %vm76, 1, 0
  %v85 = vcvt.s32.f32 %v77
  %v86 = vcvt.s32.f32 %v78
  %v87 = vcvt.s32.f32 %v79
  %v88 = vcvt.s32.f32 %v80
  %v89 = vcvt.s32.f32 %v81
  %v90 = vcvt.s32.f32 %v82
  %v91 = vcvt.s32.f32 %v83
  %v92 = vcvt.s32.f32 %v84
  %v93 = vld [vmem:[%s1] sm:$0xff]
  %v94 = vld [vmem:[%s1 + $0x8] sm:$0xff]
  %v95 = vld [vmem:[%s1 + $0x10] sm:$0xff]
  %v96 = vld [vmem:[%s1 + $0x18] sm:$0xff]
  %v97 = vld [vmem:[%s1 + $0x20] sm:$0xff]
  %v98 = vld [vmem:[%s1 + $0x28] sm:$0xff]
  %v99 = vld [vmem:[%s1 + $0x30] sm:$0x3]
  %vm100 = vcmask 408576
  %v102 = vsel %vm100, %v85, 0
  %v105 = vsel %vm100, %v86, 0
  %v108 = vsel %vm100, %v87, 0
  %v111 = vsel %vm100, %v88, 0
  %v114 = vsel %vm100, %v89, 0
  %v117 = vsel %vm100, %v90, 0
  %v120 = vsel %vm100, %v91, 0
  %v123 = vsel %vm100, %v92, 0
  %vm125 = vcmask 1041408
  %v127 = vsel %vm125, %v99, 0
  %129 = vmatprep.subr.mxu0 0.0
  %130 = vmatpush1.msra.mxu0 0.0
  %131 = vmatprep.subr.mxu0 0.0
  %132 = vmatpush1.msra.mxu0 0.0
  %133 = vmatprep.subr.mxu0 0.0
  %134 = vmatpush1.msra.mxu0 0.0
  %135 = vmatprep.subr.mxu0 0.0
  %136 = vmatpush1.msra.mxu0 0.0
  %137 = vmatprep.subr.mxu0 0.0
  %138 = vmatpush1.msra.mxu0 0.0
  %139 = vmatprep.subr.mxu0 0.0
  %140 = vmatpush1.msra.mxu0 0.0
  %141 = vmatprep.subr.mxu0 0.0
  %142 = vmatpush1.msra.mxu0 0.0
  %143 = vmatprep.subr.mxu0 0.0
  %144 = vmatpush1.msra.mxu0 0.0
  %145 = vmatprep.subr.mxu0 0.0
  %146 = vmatpush1.msra.mxu0 0.0
  %147 = vmatprep.subr.mxu0 0.0
  %148 = vmatpush1.msra.mxu0 %v127
  %149 = vmatprep.subr.mxu0 0.0
  %150 = vmatpush1.msra.mxu0 %v98
  %151 = vmatprep.subr.mxu0 0.0
  %152 = vmatpush1.msra.mxu0 %v97
  %153 = vmatprep.subr.mxu0 0.0
  %154 = vmatpush1.msra.mxu0 %v96
  %155 = vmatprep.subr.mxu0 0.0
  %156 = vmatpush1.msra.mxu0 %v95
  %157 = vmatprep.subr.mxu0 0.0
  %158 = vmatpush1.msra.mxu0 %v94
  %159 = vmatprep.subr.mxu0 0.0
  %160 = vmatpush1.msra.mxu0 %v93
  %161 = vmatprep.subr.mxu0 0.0
  %162 = vmatpush2.msra.mxu0 0.0
  %163 = vmatprep.subr.mxu0 0.0
  %164 = vmatpush2.msra.mxu0 0.0
  %165 = vmatprep.subr.mxu0 0.0
  %166 = vmatpush2.msra.mxu0 0.0
  %167 = vmatprep.subr.mxu0 0.0
  %168 = vmatpush2.msra.mxu0 0.0
  %169 = vmatprep.subr.mxu0 0.0
  %170 = vmatpush2.msra.mxu0 0.0
  %171 = vmatprep.subr.mxu0 0.0
  %172 = vmatpush2.msra.mxu0 0.0
  %173 = vmatprep.subr.mxu0 0.0
  %174 = vmatpush2.msra.mxu0 0.0
  %175 = vmatprep.subr.mxu0 0.0
  %176 = vmatpush2.msra.mxu0 0.0
  %177 = vmatprep.subr.mxu0 0.0
  %178 = vmatpush2.msra.mxu0 0.0
  %179 = vmatprep.subr.mxu0 0.0
  %180 = vmatpush2.msra.mxu0 0.0
  %181 = vmatprep.subr.mxu0 0.0
  %182 = vmatpush2.msra.mxu0 0.0
  %183 = vmatprep.subr.mxu0 0.0
  %184 = vmatpush2.msra.mxu0 0.0
  %185 = vmatprep.subr.mxu0 0.0
  %186 = vmatpush2.msra.mxu0 0.0
  %187 = vmatprep.subr.mxu0 0.0
  %188 = vmatpush2.msra.mxu0 0.0
  %189 = vmatprep.subr.mxu0 0.0
  %190 = vmatpush2.msra.mxu0 0.0
  %191 = vmatprep.subr.mxu0 0.0
  %192 = vmatpush2.msra.mxu0 0.0
  %193 = vmatprep.mubr.f32.mxu0 0.0
  %194 = vmatmul.mubr.f32.gmra.mxu0 %v102
  %v195 = vpop.f32.mrf.mxu0
  %v196 = vadd.f32 0.0, %v195
  %v197 = vpop.f32.mrf.mxu0
  %198 = vmatprep.mubr.f32.mxu0 0.0
  %199 = vmatmul.mubr.f32.gmra.mxu0 %v105
  %v200 = vpop.f32.mrf.mxu0
  %v201 = vadd.f32 0.0, %v200
  %v202 = vpop.f32.mrf.mxu0
  %203 = vmatprep.mubr.f32.mxu0 0.0
  %204 = vmatmul.mubr.f32.gmra.mxu0 %v108
  %v205 = vpop.f32.mrf.mxu0
  %v206 = vadd.f32 0.0, %v205
  %v207 = vpop.f32.mrf.mxu0
  %208 = vmatprep.mubr.f32.mxu0 0.0
  %209 = vmatmul.mubr.f32.gmra.mxu0 %v111
  %v210 = vpop.f32.mrf.mxu0
  %v211 = vadd.f32 0.0, %v210
  %v212 = vpop.f32.mrf.mxu0
  %213 = vmatprep.mubr.f32.mxu0 0.0
  %214 = vmatmul.mubr.f32.gmra.mxu0 %v114
  %v215 = vpop.f32.mrf.mxu0
  %v216 = vadd.f32 0.0, %v215
  %v217 = vpop.f32.mrf.mxu0
  %218 = vmatprep.mubr.f32.mxu0 0.0
  %219 = vmatmul.mubr.f32.gmra.mxu0 %v117
  %v220 = vpop.f32.mrf.mxu0
  %v221 = vadd.f32 0.0, %v220
  %v222 = vpop.f32.mrf.mxu0
  %223 = vmatprep.mubr.f32.mxu0 0.0
  %224 = vmatmul.mubr.f32.gmra.mxu0 %v120
  %v225 = vpop.f32.mrf.mxu0
  %v226 = vadd.f32 0.0, %v225
  %v227 = vpop.f32.mrf.mxu0
  %228 = vmatprep.mubr.f32.mxu0 0.0
  %229 = vmatmul.mubr.f32.gmra.mxu0 %v123
  %v230 = vpop.f32.mrf.mxu0
  %v231 = vadd.f32 0.0, %v230
  %v232 = vpop.f32.mrf.mxu0
  %233 = vdwg.mxu0
  %v234 = vld [vmem:[%s2] sm:$0xff]
  %v235 = vld [vmem:[%s2 + $0x8] sm:$0xff]
  %v236 = vld [vmem:[%s2 + $0x10] sm:$0xff]
  %v237 = vld [vmem:[%s2 + $0x18] sm:$0xff]
  %v238 = vld [vmem:[%s3] sm:$0xff]
  %v239 = vld [vmem:[%s3 + $0x8] sm:$0xff]
  %v240 = vld [vmem:[%s3 + $0x10] sm:$0xff]
  %v241 = vld [vmem:[%s3 + $0x18] sm:$0xff]
  %v242 = vld [vmem:[%s4] sm:$0x1]
  %v244 = vlaneseq
  %v245 = vshrl.u32 %v244, 7
  %v246 = vsub.s32 0, %v245
  %v247 = vrot.slane %v242, %v246
  %vm249 = vcmask 261120
  %v251 = vsel %vm249, %v196, 0
  %v254 = vsel %vm249, %v201, 0
  %v257 = vsel %vm249, %v206, 0
  %v260 = vsel %vm249, %v211, 0
  %v263 = vsel %vm249, %v216, 0
  %v266 = vsel %vm249, %v221, 0
  %v269 = vsel %vm249, %v226, 0
  %v272 = vsel %vm249, %v231, 0
  %274 = vmatprep.subr.mxu0 0.0
  %275 = vmatpush1.msra.mxu0 0.0
  %276 = vmatprep.subr.mxu0 0.0
  %277 = vmatpush1.msra.mxu0 0.0
  %278 = vmatprep.subr.mxu0 0.0
  %279 = vmatpush1.msra.mxu0 0.0
  %280 = vmatprep.subr.mxu0 0.0
  %281 = vmatpush1.msra.mxu0 0.0
  %282 = vmatprep.subr.mxu0 0.0
  %283 = vmatpush1.msra.mxu0 0.0
  %284 = vmatprep.subr.mxu0 0.0
  %285 = vmatpush1.msra.mxu0 0.0
  %286 = vmatprep.subr.mxu0 0.0
  %287 = vmatpush1.msra.mxu0 0.0
  %288 = vmatprep.subr.mxu0 0.0
  %289 = vmatpush1.msra.mxu0 0.0
  %290 = vmatprep.subr.mxu0 0.0
  %291 = vmatpush1.msra.mxu0 0.0
  %292 = vmatprep.subr.mxu0 0.0
  %293 = vmatpush1.msra.mxu0 0.0
  %294 = vmatprep.subr.mxu0 0.0
  %295 = vmatpush1.msra.mxu0 0.0
  %296 = vmatprep.subr.mxu0 0.0
  %297 = vmatpush1.msra.mxu0 0.0
  %298 = vmatprep.subr.mxu0 0.0
  %299 = vmatpush1.msra.mxu0 %v237
  %300 = vmatprep.subr.mxu0 0.0
  %301 = vmatpush1.msra.mxu0 %v236
  %302 = vmatprep.subr.mxu0 0.0
  %303 = vmatpush1.msra.mxu0 %v235
  %304 = vmatprep.subr.mxu0 0.0
  %305 = vmatpush1.msra.mxu0 %v234
  %306 = vmatprep.subr.mxu0 0.0
  %307 = vmatpush2.msra.mxu0 0.0
  %308 = vmatprep.subr.mxu0 0.0
  %309 = vmatpush2.msra.mxu0 0.0
  %310 = vmatprep.subr.mxu0 0.0
  %311 = vmatpush2.msra.mxu0 0.0
  %312 = vmatprep.subr.mxu0 0.0
  %313 = vmatpush2.msra.mxu0 0.0
  %314 = vmatprep.subr.mxu0 0.0
  %315 = vmatpush2.msra.mxu0 0.0
  %316 = vmatprep.subr.mxu0 0.0
  %317 = vmatpush2.msra.mxu0 0.0
  %318 = vmatprep.subr.mxu0 0.0
  %319 = vmatpush2.msra.mxu0 0.0
  %320 = vmatprep.subr.mxu0 0.0
  %321 = vmatpush2.msra.mxu0 0.0
  %322 = vmatprep.subr.mxu0 0.0
  %323 = vmatpush2.msra.mxu0 0.0
  %324 = vmatprep.subr.mxu0 0.0
  %325 = vmatpush2.msra.mxu0 0.0
  %326 = vmatprep.subr.mxu0 0.0
  %327 = vmatpush2.msra.mxu0 0.0
  %328 = vmatprep.subr.mxu0 0.0
  %329 = vmatpush2.msra.mxu0 0.0
  %330 = vmatprep.subr.mxu0 0.0
  %331 = vmatpush2.msra.mxu0 0.0
  %332 = vmatprep.subr.mxu0 0.0
  %333 = vmatpush2.msra.mxu0 0.0
  %334 = vmatprep.subr.mxu0 0.0
  %335 = vmatpush2.msra.mxu0 0.0
  %336 = vmatprep.subr.mxu0 0.0
  %337 = vmatpush2.msra.mxu0 0.0
  %338 = vmatprep.mubr.f32.mxu0 0.0
  %339 = vmatmul.mubr.f32.gmra.mxu0 %v251
  %v340 = vpop.f32.mrf.mxu0
  %v341 = vadd.f32 %v247, %v340
  %v342 = vpop.f32.mrf.mxu0
  %343 = vmatprep.mubr.f32.mxu0 0.0
  %344 = vmatmul.mubr.f32.gmra.mxu0 %v254
  %v345 = vpop.f32.mrf.mxu0
  %v346 = vadd.f32 %v247, %v345
  %v347 = vpop.f32.mrf.mxu0
  %348 = vmatprep.mubr.f32.mxu0 0.0
  %349 = vmatmul.mubr.f32.gmra.mxu0 %v257
  %v350 = vpop.f32.mrf.mxu0
  %v351 = vadd.f32 %v247, %v350
  %v352 = vpop.f32.mrf.mxu0
  %353 = vmatprep.mubr.f32.mxu0 0.0
  %354 = vmatmul.mubr.f32.gmra.mxu0 %v260
  %v355 = vpop.f32.mrf.mxu0
  %v356 = vadd.f32 %v247, %v355
  %v357 = vpop.f32.mrf.mxu0
  %358 = vmatprep.mubr.f32.mxu0 0.0
  %359 = vmatmul.mubr.f32.gmra.mxu0 %v263
  %v360 = vpop.f32.mrf.mxu0
  %v361 = vadd.f32 %v247, %v360
  %v362 = vpop.f32.mrf.mxu0
  %363 = vmatprep.mubr.f32.mxu0 0.0
  %364 = vmatmul.mubr.f32.gmra.mxu0 %v266
  %v365 = vpop.f32.mrf.mxu0
  %v366 = vadd.f32 %v247, %v365
  %v367 = vpop.f32.mrf.mxu0
  %368 = vmatprep.mubr.f32.mxu0 0.0
  %369 = vmatmul.mubr.f32.gmra.mxu0 %v269
  %v370 = vpop.f32.mrf.mxu0
  %v371 = vadd.f32 %v247, %v370
  %v372 = vpop.f32.mrf.mxu0
  %373 = vmatprep.mubr.f32.mxu0 0.0
  %374 = vmatmul.mubr.f32.gmra.mxu0 %v272
  %v375 = vpop.f32.mrf.mxu0
  %v376 = vadd.f32 %v247, %v375
  %v377 = vpop.f32.mrf.mxu0
  %378 = vdwg.mxu0
  %379 = vst [vmem:[#allocation2] sm:$0xff] %v341
  %380 = vst [vmem:[#allocation2 + $0x8] sm:$0xff] %v346
  %381 = vst [vmem:[#allocation2 + $0x10] sm:$0xff] %v351
  %382 = vst [vmem:[#allocation2 + $0x18] sm:$0xff] %v356
  %383 = vst [vmem:[#allocation2 + $0x20] sm:$0xff] %v361
  %384 = vst [vmem:[#allocation2 + $0x28] sm:$0xff] %v366
  %385 = vst [vmem:[#allocation2 + $0x30] sm:$0xff] %v371
  %386 = vst [vmem:[#allocation2 + $0x38] sm:$0xff] %v376
  %v387 = vld [vmem:[#allocation2] sm:$0xff]
  %v389 = vsel %vm249, 0.0, 0
  %391 = vmatprep.subr.mxu0 0.0
  %392 = vmatpush1.msra.mxu0 0.0
  %393 = vmatprep.subr.mxu0 0.0
  %394 = vmatpush1.msra.mxu0 0.0
  %395 = vmatprep.subr.mxu0 0.0
  %396 = vmatpush1.msra.mxu0 0.0
  %397 = vmatprep.subr.mxu0 0.0
  %398 = vmatpush1.msra.mxu0 0.0
  %399 = vmatprep.subr.mxu0 0.0
  %400 = vmatpush1.msra.mxu0 0.0
  %401 = vmatprep.subr.mxu0 0.0
  %402 = vmatpush1.msra.mxu0 0.0
  %403 = vmatprep.subr.mxu0 0.0
  %404 = vmatpush1.msra.mxu0 0.0
  %405 = vmatprep.subr.mxu0 0.0
  %406 = vmatpush1.msra.mxu0 0.0
  %407 = vmatprep.subr.mxu0 0.0
  %408 = vmatpush1.msra.mxu0 0.0
  %409 = vmatprep.subr.mxu0 0.0
  %410 = vmatpush1.msra.mxu0 0.0
  %411 = vmatprep.subr.mxu0 0.0
  %412 = vmatpush1.msra.mxu0 0.0
  %413 = vmatprep.subr.mxu0 0.0
  %414 = vmatpush1.msra.mxu0 0.0
  %415 = vmatprep.subr.mxu0 0.0
  %416 = vmatpush1.msra.mxu0 %v241
  %417 = vmatprep.subr.mxu0 0.0
  %418 = vmatpush1.msra.mxu0 %v240
  %419 = vmatprep.subr.mxu0 0.0
  %420 = vmatpush1.msra.mxu0 %v239
  %421 = vmatprep.subr.mxu0 0.0
  %422 = vmatpush1.msra.mxu0 %v238
  %423 = vmatprep.subr.mxu0 0.0
  %424 = vmatpush2.msra.mxu0 0.0
  %425 = vmatprep.subr.mxu0 0.0
  %426 = vmatpush2.msra.mxu0 0.0
  %427 = vmatprep.subr.mxu0 0.0
  %428 = vmatpush2.msra.mxu0 0.0
  %429 = vmatprep.subr.mxu0 0.0
  %430 = vmatpush2.msra.mxu0 0.0
  %431 = vmatprep.subr.mxu0 0.0
  %432 = vmatpush2.msra.mxu0 0.0
  %433 = vmatprep.subr.mxu0 0.0
  %434 = vmatpush2.msra.mxu0 0.0
  %435 = vmatprep.subr.mxu0 0.0
  %436 = vmatpush2.msra.mxu0 0.0
  %437 = vmatprep.subr.mxu0 0.0
  %438 = vmatpush2.msra.mxu0 0.0
  %439 = vmatprep.subr.mxu0 0.0
  %440 = vmatpush2.msra.mxu0 0.0
  %441 = vmatprep.subr.mxu0 0.0
  %442 = vmatpush2.msra.mxu0 0.0
  %443 = vmatprep.subr.mxu0 0.0
  %444 = vmatpush2.msra.mxu0 0.0
  %445 = vmatprep.subr.mxu0 0.0
  %446 = vmatpush2.msra.mxu0 0.0
  %447 = vmatprep.subr.mxu0 0.0
  %448 = vmatpush2.msra.mxu0 0.0
  %449 = vmatprep.subr.mxu0 0.0
  %450 = vmatpush2.msra.mxu0 0.0
  %451 = vmatprep.subr.mxu0 0.0
  %452 = vmatpush2.msra.mxu0 0.0
  %453 = vmatprep.subr.mxu0 0.0
  %454 = vmatpush2.msra.mxu0 0.0
  %455 = vmatprep.mubr.f32.mxu0 0.0
  %456 = vmatmul.mubr.f32.gmra.mxu0 %v389
  %v457 = vpop.f32.mrf.mxu0
  %v458 = vadd.f32 0.0, %v457
  %v459 = vpop.f32.mrf.mxu0
  %460 = vdwg.mxu0
  %v461 = vadd.f32 %v387, %v458
  %v462 = vxor.u32 %v461, 2147483648
  %v463 = vmul.f32 %v462, 1.442695
  %v464 = vpow.pop %v463
  %v465 = vadd.f32 %v464, 1.0
  %v466 = vrcp.pop %v465
  %v467 = vmul.f32 1.0, %v466
  %v468 = vtanh.pop %v461
  %v469 = vmul.f32 %v467, 0.0
  %471 = vrot.lane.b32.xlu0 %v468, 64
  %v472 = vpop.permute.xlu0 %471
  %v474 = vmul.f32 %v467, %v472
  %476 = vrot.lane.b32.xlu0 %v474, 32
  %v477 = vpop.permute.xlu0 %476
  %v479 = vadd.f32 %v469, %v477
  %v480 = vtanh.pop %v479
  %482 = vrot.lane.b32.xlu0 %v480, 64
  %v483 = vpop.permute.xlu0 %482
  %v485 = vmul.f32 %v467, %v483
  %487 = vrot.lane.b32.xlu0 %v485, 32
  %v488 = vpop.permute.xlu0 %487
  %490 = vst.msk [vmem:[#allocation3] sm:$0xff] %vm249, %v488
  %v491 = vld [vmem:[#allocation2 + $0x8] sm:$0xff]
  %v492 = vsel %vm249, %v488, 0
  %494 = vmatprep.subr.mxu0 0.0
  %495 = vmatpush1.msra.mxu0 0.0
  %496 = vmatprep.subr.mxu0 0.0
  %497 = vmatpush1.msra.mxu0 0.0
  %498 = vmatprep.subr.mxu0 0.0
  %499 = vmatpush1.msra.mxu0 0.0
  %500 = vmatprep.subr.mxu0 0.0
  %501 = vmatpush1.msra.mxu0 0.0
  %502 = vmatprep.subr.mxu0 0.0
  %503 = vmatpush1.msra.mxu0 0.0
  %504 = vmatprep.subr.mxu0 0.0
  %505 = vmatpush1.msra.mxu0 0.0
  %506 = vmatprep.subr.mxu0 0.0
  %507 = vmatpush1.msra.mxu0 0.0
  %508 = vmatprep.subr.mxu0 0.0
  %509 = vmatpush1.msra.mxu0 0.0
  %510 = vmatprep.subr.mxu0 0.0
  %511 = vmatpush1.msra.mxu0 0.0
  %512 = vmatprep.subr.mxu0 0.0
  %513 = vmatpush1.msra.mxu0 0.0
  %514 = vmatprep.subr.mxu0 0.0
  %515 = vmatpush1.msra.mxu0 0.0
  %516 = vmatprep.subr.mxu0 0.0
  %517 = vmatpush1.msra.mxu0 0.0
  %518 = vmatprep.subr.mxu0 0.0
  %519 = vmatpush1.msra.mxu0 %v241
  %520 = vmatprep.subr.mxu0 0.0
  %521 = vmatpush1.msra.mxu0 %v240
  %522 = vmatprep.subr.mxu0 0.0
  %523 = vmatpush1.msra.mxu0 %v239
  %524 = vmatprep.subr.mxu0 0.0
  %525 = vmatpush1.msra.mxu0 %v238
  %526 = vmatprep.subr.mxu0 0.0
  %527 = vmatpush2.msra.mxu0 0.0
  %528 = vmatprep.subr.mxu0 0.0
  %529 = vmatpush2.msra.mxu0 0.0
  %530 = vmatprep.subr.mxu0 0.0
  %531 = vmatpush2.msra.mxu0 0.0
  %532 = vmatprep.subr.mxu0 0.0
  %533 = vmatpush2.msra.mxu0 0.0
  %534 = vmatprep.subr.mxu0 0.0
  %535 = vmatpush2.msra.mxu0 0.0
  %536 = vmatprep.subr.mxu0 0.0
  %537 = vmatpush2.msra.mxu0 0.0
  %538 = vmatprep.subr.mxu0 0.0
  %539 = vmatpush2.msra.mxu0 0.0
  %540 = vmatprep.subr.mxu0 0.0
  %541 = vmatpush2.msra.mxu0 0.0
  %542 = vmatprep.subr.mxu0 0.0
  %543 = vmatpush2.msra.mxu0 0.0
  %544 = vmatprep.subr.mxu0 0.0
  %545 = vmatpush2.msra.mxu0 0.0
  %546 = vmatprep.subr.mxu0 0.0
  %547 = vmatpush2.msra.mxu0 0.0
  %548 = vmatprep.subr.mxu0 0.0
  %549 = vmatpush2.msra.mxu0 0.0
  %550 = vmatprep.subr.mxu0 0.0
  %551 = vmatpush2.msra.mxu0 0.0
  %552 = vmatprep.subr.mxu0 0.0
  %553 = vmatpush2.msra.mxu0 0.0
  %554 = vmatprep.subr.mxu0 0.0
  %555 = vmatpush2.msra.mxu0 0.0
  %556 = vmatprep.subr.mxu0 0.0
  %557 = vmatpush2.msra.mxu0 0.0
  %558 = vmatprep.mubr.f32.mxu0 0.0
  %559 = vmatmul.mubr.f32.gmra.mxu0 %v492
  %v560 = vpop.f32.mrf.mxu0
  %v561 = vadd.f32 0.0, %v560
  %v562 = vpop.f32.mrf.mxu0
  %563 = vdwg.mxu0
  %v564 = vadd.f32 %v491, %v561
  %v565 = vxor.u32 %v564, 2147483648
  %v566 = vmul.f32 %v565, 1.442695
  %v567 = vpow.pop %v566
  %v568 = vadd.f32 %v567, 1.0
  %v569 = vrcp.pop %v568
  %v570 = vmul.f32 1.0, %v569
  %v571 = vtanh.pop %v564
  %v572 = vmul.f32 %v570, %v479
  %574 = vrot.lane.b32.xlu0 %v571, 64
  %v575 = vpop.permute.xlu0 %574
  %v577 = vmul.f32 %v570, %v575
  %579 = vrot.lane.b32.xlu0 %v577, 32
  %v580 = vpop.permute.xlu0 %579
  %v582 = vadd.f32 %v572, %v580
  %v583 = vtanh.pop %v582
  %585 = vrot.lane.b32.xlu0 %v583, 64
  %v586 = vpop.permute.xlu0 %585
  %v588 = vmul.f32 %v570, %v586
  %590 = vrot.lane.b32.xlu0 %v588, 32
  %v591 = vpop.permute.xlu0 %590
  %593 = vst.msk [vmem:[#allocation3 + $0x8] sm:$0xff] %vm249, %v591
  %v594 = vld [vmem:[#allocation2 + $0x10] sm:$0xff]
  %v595 = vsel %vm249, %v591, 0
  %597 = vmatprep.subr.mxu0 0.0
  %598 = vmatpush1.msra.mxu0 0.0
  %599 = vmatprep.subr.mxu0 0.0
  %600 = vmatpush1.msra.mxu0 0.0
  %601 = vmatprep.subr.mxu0 0.0
  %602 = vmatpush1.msra.mxu0 0.0
  %603 = vmatprep.subr.mxu0 0.0
  %604 = vmatpush1.msra.mxu0 0.0
  %605 = vmatprep.subr.mxu0 0.0
  %606 = vmatpush1.msra.mxu0 0.0
  %607 = vmatprep.subr.mxu0 0.0
  %608 = vmatpush1.msra.mxu0 0.0
  %609 = vmatprep.subr.mxu0 0.0
  %610 = vmatpush1.msra.mxu0 0.0
  %611 = vmatprep.subr.mxu0 0.0
  %612 = vmatpush1.msra.mxu0 0.0
  %613 = vmatprep.subr.mxu0 0.0
  %614 = vmatpush1.msra.mxu0 0.0
  %615 = vmatprep.subr.mxu0 0.0
  %616 = vmatpush1.msra.mxu0 0.0
  %617 = vmatprep.subr.mxu0 0.0
  %618 = vmatpush1.msra.mxu0 0.0
  %619 = vmatprep.subr.mxu0 0.0
  %620 = vmatpush1.msra.mxu0 0.0
  %621 = vmatprep.subr.mxu0 0.0
  %622 = vmatpush1.msra.mxu0 %v241
  %623 = vmatprep.subr.mxu0 0.0
  %624 = vmatpush1.msra.mxu0 %v240
  %625 = vmatprep.subr.mxu0 0.0
  %626 = vmatpush1.msra.mxu0 %v239
  %627 = vmatprep.subr.mxu0 0.0
  %628 = vmatpush1.msra.mxu0 %v238
  %629 = vmatprep.subr.mxu0 0.0
  %630 = vmatpush2.msra.mxu0 0.0
  %631 = vmatprep.subr.mxu0 0.0
  %632 = vmatpush2.msra.mxu0 0.0
  %633 = vmatprep.subr.mxu0 0.0
  %634 = vmatpush2.msra.mxu0 0.0
  %635 = vmatprep.subr.mxu0 0.0
  %636 = vmatpush2.msra.mxu0 0.0
  %637 = vmatprep.subr.mxu0 0.0
  %638 = vmatpush2.msra.mxu0 0.0
  %639 = vmatprep.subr.mxu0 0.0
  %640 = vmatpush2.msra.mxu0 0.0
  %641 = vmatprep.subr.mxu0 0.0
  %642 = vmatpush2.msra.mxu0 0.0
  %643 = vmatprep.subr.mxu0 0.0
  %644 = vmatpush2.msra.mxu0 0.0
  %645 = vmatprep.subr.mxu0 0.0
  %646 = vmatpush2.msra.mxu0 0.0
  %647 = vmatprep.subr.mxu0 0.0
  %648 = vmatpush2.msra.mxu0 0.0
  %649 = vmatprep.subr.mxu0 0.0
  %650 = vmatpush2.msra.mxu0 0.0
  %651 = vmatprep.subr.mxu0 0.0
  %652 = vmatpush2.msra.mxu0 0.0
  %653 = vmatprep.subr.mxu0 0.0
  %654 = vmatpush2.msra.mxu0 0.0
  %655 = vmatprep.subr.mxu0 0.0
  %656 = vmatpush2.msra.mxu0 0.0
  %657 = vmatprep.subr.mxu0 0.0
  %658 = vmatpush2.msra.mxu0 0.0
  %659 = vmatprep.subr.mxu0 0.0
  %660 = vmatpush2.msra.mxu0 0.0
  %661 = vmatprep.mubr.f32.mxu0 0.0
  %662 = vmatmul.mubr.f32.gmra.mxu0 %v595
  %v663 = vpop.f32.mrf.mxu0
  %v664 = vadd.f32 0.0, %v663
  %v665 = vpop.f32.mrf.mxu0
  %666 = vdwg.mxu0
  %v667 = vadd.f32 %v594, %v664
  %v668 = vxor.u32 %v667, 2147483648
  %v669 = vmul.f32 %v668, 1.442695
  %v670 = vpow.pop %v669
  %v671 = vadd.f32 %v670, 1.0
  %v672 = vrcp.pop %v671
  %v673 = vmul.f32 1.0, %v672
  %v674 = vtanh.pop %v667
  %v675 = vmul.f32 %v673, %v582
  %677 = vrot.lane.b32.xlu0 %v674, 64
  %v678 = vpop.permute.xlu0 %677
  %v680 = vmul.f32 %v673, %v678
  %682 = vrot.lane.b32.xlu0 %v680, 32
  %v683 = vpop.permute.xlu0 %682
  %v685 = vadd.f32 %v675, %v683
  %v686 = vtanh.pop %v685
  %688 = vrot.lane.b32.xlu0 %v686, 64
  %v689 = vpop.permute.xlu0 %688
  %v691 = vmul.f32 %v673, %v689
  %693 = vrot.lane.b32.xlu0 %v691, 32
  %v694 = vpop.permute.xlu0 %693
  %696 = vst.msk [vmem:[#allocation3 + $0x10] sm:$0xff] %vm249, %v694
  %v697 = vld [vmem:[#allocation2 + $0x18] sm:$0xff]
  %v698 = vsel %vm249, %v694, 0
  %700 = vmatprep.subr.mxu0 0.0
  %701 = vmatpush1.msra.mxu0 0.0
  %702 = vmatprep.subr.mxu0 0.0
  %703 = vmatpush1.msra.mxu0 0.0
  %704 = vmatprep.subr.mxu0 0.0
  %705 = vmatpush1.msra.mxu0 0.0
  %706 = vmatprep.subr.mxu0 0.0
  %707 = vmatpush1.msra.mxu0 0.0
  %708 = vmatprep.subr.mxu0 0.0
  %709 = vmatpush1.msra.mxu0 0.0
  %710 = vmatprep.subr.mxu0 0.0
  %711 = vmatpush1.msra.mxu0 0.0
  %712 = vmatprep.subr.mxu0 0.0
  %713 = vmatpush1.msra.mxu0 0.0
  %714 = vmatprep.subr.mxu0 0.0
  %715 = vmatpush1.msra.mxu0 0.0
  %716 = vmatprep.subr.mxu0 0.0
  %717 = vmatpush1.msra.mxu0 0.0
  %718 = vmatprep.subr.mxu0 0.0
  %719 = vmatpush1.msra.mxu0 0.0
  %720 = vmatprep.subr.mxu0 0.0
  %721 = vmatpush1.msra.mxu0 0.0
  %722 = vmatprep.subr.mxu0 0.0
  %723 = vmatpush1.msra.mxu0 0.0
  %724 = vmatprep.subr.mxu0 0.0
  %725 = vmatpush1.msra.mxu0 %v241
  %726 = vmatprep.subr.mxu0 0.0
  %727 = vmatpush1.msra.mxu0 %v240
  %728 = vmatprep.subr.mxu0 0.0
  %729 = vmatpush1.msra.mxu0 %v239
  %730 = vmatprep.subr.mxu0 0.0
  %731 = vmatpush1.msra.mxu0 %v238
  %732 = vmatprep.subr.mxu0 0.0
  %733 = vmatpush2.msra.mxu0 0.0
  %734 = vmatprep.subr.mxu0 0.0
  %735 = vmatpush2.msra.mxu0 0.0
  %736 = vmatprep.subr.mxu0 0.0
  %737 = vmatpush2.msra.mxu0 0.0
  %738 = vmatprep.subr.mxu0 0.0
  %739 = vmatpush2.msra.mxu0 0.0
  %740 = vmatprep.subr.mxu0 0.0
  %741 = vmatpush2.msra.mxu0 0.0
  %742 = vmatprep.subr.mxu0 0.0
  %743 = vmatpush2.msra.mxu0 0.0
  %744 = vmatprep.subr.mxu0 0.0
  %745 = vmatpush2.msra.mxu0 0.0
  %746 = vmatprep.subr.mxu0 0.0
  %747 = vmatpush2.msra.mxu0 0.0
  %748 = vmatprep.subr.mxu0 0.0
  %749 = vmatpush2.msra.mxu0 0.0
  %750 = vmatprep.subr.mxu0 0.0
  %751 = vmatpush2.msra.mxu0 0.0
  %752 = vmatprep.subr.mxu0 0.0
  %753 = vmatpush2.msra.mxu0 0.0
  %754 = vmatprep.subr.mxu0 0.0
  %755 = vmatpush2.msra.mxu0 0.0
  %756 = vmatprep.subr.mxu0 0.0
  %757 = vmatpush2.msra.mxu0 0.0
  %758 = vmatprep.subr.mxu0 0.0
  %759 = vmatpush2.msra.mxu0 0.0
  %760 = vmatprep.subr.mxu0 0.0
  %761 = vmatpush2.msra.mxu0 0.0
  %762 = vmatprep.subr.mxu0 0.0
  %763 = vmatpush2.msra.mxu0 0.0
  %764 = vmatprep.mubr.f32.mxu0 0.0
  %765 = vmatmul.mubr.f32.gmra.mxu0 %v698
  %v766 = vpop.f32.mrf.mxu0
  %v767 = vadd.f32 0.0, %v766
  %v768 = vpop.f32.mrf.mxu0
  %769 = vdwg.mxu0
  %v770 = vadd.f32 %v697, %v767
  %v771 = vxor.u32 %v770, 2147483648
  %v772 = vmul.f32 %v771, 1.442695
  %v773 = vpow.pop %v772
  %v774 = vadd.f32 %v773, 1.0
  %v775 = vrcp.pop %v774
  %v776 = vmul.f32 1.0, %v775
  %v777 = vtanh.pop %v770
  %v778 = vmul.f32 %v776, %v685
  %780 = vrot.lane.b32.xlu0 %v777, 64
  %v781 = vpop.permute.xlu0 %780
  %v783 = vmul.f32 %v776, %v781
  %785 = vrot.lane.b32.xlu0 %v783, 32
  %v786 = vpop.permute.xlu0 %785
  %v788 = vadd.f32 %v778, %v786
  %v789 = vtanh.pop %v788
  %791 = vrot.lane.b32.xlu0 %v789, 64
  %v792 = vpop.permute.xlu0 %791
  %v794 = vmul.f32 %v776, %v792
  %796 = vrot.lane.b32.xlu0 %v794, 32
  %v797 = vpop.permute.xlu0 %796
  %799 = vst.msk [vmem:[#allocation3 + $0x18] sm:$0xff] %vm249, %v797
  %v800 = vld [vmem:[#allocation2 + $0x20] sm:$0xff]
  %v801 = vsel %vm249, %v797, 0
  %803 = vmatprep.subr.mxu0 0.0
  %804 = vmatpush1.msra.mxu0 0.0
  %805 = vmatprep.subr.mxu0 0.0
  %806 = vmatpush1.msra.mxu0 0.0
  %807 = vmatprep.subr.mxu0 0.0
  %808 = vmatpush1.msra.mxu0 0.0
  %809 = vmatprep.subr.mxu0 0.0
  %810 = vmatpush1.msra.mxu0 0.0
  %811 = vmatprep.subr.mxu0 0.0
  %812 = vmatpush1.msra.mxu0 0.0
  %813 = vmatprep.subr.mxu0 0.0
  %814 = vmatpush1.msra.mxu0 0.0
  %815 = vmatprep.subr.mxu0 0.0
  %816 = vmatpush1.msra.mxu0 0.0
  %817 = vmatprep.subr.mxu0 0.0
  %818 = vmatpush1.msra.mxu0 0.0
  %819 = vmatprep.subr.mxu0 0.0
  %820 = vmatpush1.msra.mxu0 0.0
  %821 = vmatprep.subr.mxu0 0.0
  %822 = vmatpush1.msra.mxu0 0.0
  %823 = vmatprep.subr.mxu0 0.0
  %824 = vmatpush1.msra.mxu0 0.0
  %825 = vmatprep.subr.mxu0 0.0
  %826 = vmatpush1.msra.mxu0 0.0
  %827 = vmatprep.subr.mxu0 0.0
  %828 = vmatpush1.msra.mxu0 %v241
  %829 = vmatprep.subr.mxu0 0.0
  %830 = vmatpush1.msra.mxu0 %v240
  %831 = vmatprep.subr.mxu0 0.0
  %832 = vmatpush1.msra.mxu0 %v239
  %833 = vmatprep.subr.mxu0 0.0
  %834 = vmatpush1.msra.mxu0 %v238
  %835 = vmatprep.subr.mxu0 0.0
  %836 = vmatpush2.msra.mxu0 0.0
  %837 = vmatprep.subr.mxu0 0.0
  %838 = vmatpush2.msra.mxu0 0.0
  %839 = vmatprep.subr.mxu0 0.0
  %840 = vmatpush2.msra.mxu0 0.0
  %841 = vmatprep.subr.mxu0 0.0
  %842 = vmatpush2.msra.mxu0 0.0
  %843 = vmatprep.subr.mxu0 0.0
  %844 = vmatpush2.msra.mxu0 0.0
  %845 = vmatprep.subr.mxu0 0.0
  %846 = vmatpush2.msra.mxu0 0.0
  %847 = vmatprep.subr.mxu0 0.0
  %848 = vmatpush2.msra.mxu0 0.0
  %849 = vmatprep.subr.mxu0 0.0
  %850 = vmatpush2.msra.mxu0 0.0
  %851 = vmatprep.subr.mxu0 0.0
  %852 = vmatpush2.msra.mxu0 0.0
  %853 = vmatprep.subr.mxu0 0.0
  %854 = vmatpush2.msra.mxu0 0.0
  %855 = vmatprep.subr.mxu0 0.0
  %856 = vmatpush2.msra.mxu0 0.0
  %857 = vmatprep.subr.mxu0 0.0
  %858 = vmatpush2.msra.mxu0 0.0
  %859 = vmatprep.subr.mxu0 0.0
  %860 = vmatpush2.msra.mxu0 0.0
  %861 = vmatprep.subr.mxu0 0.0
  %862 = vmatpush2.msra.mxu0 0.0
  %863 = vmatprep.subr.mxu0 0.0
  %864 = vmatpush2.msra.mxu0 0.0
  %865 = vmatprep.subr.mxu0 0.0
  %866 = vmatpush2.msra.mxu0 0.0
  %867 = vmatprep.mubr.f32.mxu0 0.0
  %868 = vmatmul.mubr.f32.gmra.mxu0 %v801
  %v869 = vpop.f32.mrf.mxu0
  %v870 = vadd.f32 0.0, %v869
  %v871 = vpop.f32.mrf.mxu0
  %872 = vdwg.mxu0
  %v873 = vadd.f32 %v800, %v870
  %v874 = vxor.u32 %v873, 2147483648
  %v875 = vmul.f32 %v874, 1.442695
  %v876 = vpow.pop %v875
  %v877 = vadd.f32 %v876, 1.0
  %v878 = vrcp.pop %v877
  %v879 = vmul.f32 1.0, %v878
  %v880 = vtanh.pop %v873
  %v881 = vmul.f32 %v879, %v788
  %883 = vrot.lane.b32.xlu0 %v880, 64
  %v884 = vpop.permute.xlu0 %883
  %v886 = vmul.f32 %v879, %v884
  %888 = vrot.lane.b32.xlu0 %v886, 32
  %v889 = vpop.permute.xlu0 %888
  %v891 = vadd.f32 %v881, %v889
  %v892 = vtanh.pop %v891
  %894 = vrot.lane.b32.xlu0 %v892, 64
  %v895 = vpop.permute.xlu0 %894
  %v897 = vmul.f32 %v879, %v895
  %899 = vrot.lane.b32.xlu0 %v897, 32
  %v900 = vpop.permute.xlu0 %899
  %902 = vst.msk [vmem:[#allocation3 + $0x20] sm:$0xff] %vm249, %v900
  %v903 = vld [vmem:[#allocation2 + $0x28] sm:$0xff]
  %v904 = vsel %vm249, %v900, 0
  %906 = vmatprep.subr.mxu0 0.0
  %907 = vmatpush1.msra.mxu0 0.0
  %908 = vmatprep.subr.mxu0 0.0
  %909 = vmatpush1.msra.mxu0 0.0
  %910 = vmatprep.subr.mxu0 0.0
  %911 = vmatpush1.msra.mxu0 0.0
  %912 = vmatprep.subr.mxu0 0.0
  %913 = vmatpush1.msra.mxu0 0.0
  %914 = vmatprep.subr.mxu0 0.0
  %915 = vmatpush1.msra.mxu0 0.0
  %916 = vmatprep.subr.mxu0 0.0
  %917 = vmatpush1.msra.mxu0 0.0
  %918 = vmatprep.subr.mxu0 0.0
  %919 = vmatpush1.msra.mxu0 0.0
  %920 = vmatprep.subr.mxu0 0.0
  %921 = vmatpush1.msra.mxu0 0.0
  %922 = vmatprep.subr.mxu0 0.0
  %923 = vmatpush1.msra.mxu0 0.0
  %924 = vmatprep.subr.mxu0 0.0
  %925 = vmatpush1.msra.mxu0 0.0
  %926 = vmatprep.subr.mxu0 0.0
  %927 = vmatpush1.msra.mxu0 0.0
  %928 = vmatprep.subr.mxu0 0.0
  %929 = vmatpush1.msra.mxu0 0.0
  %930 = vmatprep.subr.mxu0 0.0
  %931 = vmatpush1.msra.mxu0 %v241
  %932 = vmatprep.subr.mxu0 0.0
  %933 = vmatpush1.msra.mxu0 %v240
  %934 = vmatprep.subr.mxu0 0.0
  %935 = vmatpush1.msra.mxu0 %v239
  %936 = vmatprep.subr.mxu0 0.0
  %937 = vmatpush1.msra.mxu0 %v238
  %938 = vmatprep.subr.mxu0 0.0
  %939 = vmatpush2.msra.mxu0 0.0
  %940 = vmatprep.subr.mxu0 0.0
  %941 = vmatpush2.msra.mxu0 0.0
  %942 = vmatprep.subr.mxu0 0.0
  %943 = vmatpush2.msra.mxu0 0.0
  %944 = vmatprep.subr.mxu0 0.0
  %945 = vmatpush2.msra.mxu0 0.0
  %946 = vmatprep.subr.mxu0 0.0
  %947 = vmatpush2.msra.mxu0 0.0
  %948 = vmatprep.subr.mxu0 0.0
  %949 = vmatpush2.msra.mxu0 0.0
  %950 = vmatprep.subr.mxu0 0.0
  %951 = vmatpush2.msra.mxu0 0.0
  %952 = vmatprep.subr.mxu0 0.0
  %953 = vmatpush2.msra.mxu0 0.0
  %954 = vmatprep.subr.mxu0 0.0
  %955 = vmatpush2.msra.mxu0 0.0
  %956 = vmatprep.subr.mxu0 0.0
  %957 = vmatpush2.msra.mxu0 0.0
  %958 = vmatprep.subr.mxu0 0.0
  %959 = vmatpush2.msra.mxu0 0.0
  %960 = vmatprep.subr.mxu0 0.0
  %961 = vmatpush2.msra.mxu0 0.0
  %962 = vmatprep.subr.mxu0 0.0
  %963 = vmatpush2.msra.mxu0 0.0
  %964 = vmatprep.subr.mxu0 0.0
  %965 = vmatpush2.msra.mxu0 0.0
  %966 = vmatprep.subr.mxu0 0.0
  %967 = vmatpush2.msra.mxu0 0.0
  %968 = vmatprep.subr.mxu0 0.0
  %969 = vmatpush2.msra.mxu0 0.0
  %970 = vmatprep.mubr.f32.mxu0 0.0
  %971 = vmatmul.mubr.f32.gmra.mxu0 %v904
  %v972 = vpop.f32.mrf.mxu0
  %v973 = vadd.f32 0.0, %v972
  %v974 = vpop.f32.mrf.mxu0
  %975 = vdwg.mxu0
  %v976 = vadd.f32 %v903, %v973
  %v977 = vxor.u32 %v976, 2147483648
  %v978 = vmul.f32 %v977, 1.442695
  %v979 = vpow.pop %v978
  %v980 = vadd.f32 %v979, 1.0
  %v981 = vrcp.pop %v980
  %v982 = vmul.f32 1.0, %v981
  %v983 = vtanh.pop %v976
  %v984 = vmul.f32 %v982, %v891
  %986 = vrot.lane.b32.xlu0 %v983, 64
  %v987 = vpop.permute.xlu0 %986
  %v989 = vmul.f32 %v982, %v987
  %991 = vrot.lane.b32.xlu0 %v989, 32
  %v992 = vpop.permute.xlu0 %991
  %v994 = vadd.f32 %v984, %v992
  %v995 = vtanh.pop %v994
  %997 = vrot.lane.b32.xlu0 %v995, 64
  %v998 = vpop.permute.xlu0 %997
  %v1000 = vmul.f32 %v982, %v998
  %1002 = vrot.lane.b32.xlu0 %v1000, 32
  %v1003 = vpop.permute.xlu0 %1002
  %1005 = vst.msk [vmem:[#allocation3 + $0x28] sm:$0xff] %vm249, %v1003
  %v1006 = vld [vmem:[#allocation2 + $0x30] sm:$0xff]
  %v1007 = vsel %vm249, %v1003, 0
  %1009 = vmatprep.subr.mxu0 0.0
  %1010 = vmatpush1.msra.mxu0 0.0
  %1011 = vmatprep.subr.mxu0 0.0
  %1012 = vmatpush1.msra.mxu0 0.0
  %1013 = vmatprep.subr.mxu0 0.0
  %1014 = vmatpush1.msra.mxu0 0.0
  %1015 = vmatprep.subr.mxu0 0.0
  %1016 = vmatpush1.msra.mxu0 0.0
  %1017 = vmatprep.subr.mxu0 0.0
  %1018 = vmatpush1.msra.mxu0 0.0
  %1019 = vmatprep.subr.mxu0 0.0
  %1020 = vmatpush1.msra.mxu0 0.0
  %1021 = vmatprep.subr.mxu0 0.0
  %1022 = vmatpush1.msra.mxu0 0.0
  %1023 = vmatprep.subr.mxu0 0.0
  %1024 = vmatpush1.msra.mxu0 0.0
  %1025 = vmatprep.subr.mxu0 0.0
  %1026 = vmatpush1.msra.mxu0 0.0
  %1027 = vmatprep.subr.mxu0 0.0
  %1028 = vmatpush1.msra.mxu0 0.0
  %1029 = vmatprep.subr.mxu0 0.0
  %1030 = vmatpush1.msra.mxu0 0.0
  %1031 = vmatprep.subr.mxu0 0.0
  %1032 = vmatpush1.msra.mxu0 0.0
  %1033 = vmatprep.subr.mxu0 0.0
  %1034 = vmatpush1.msra.mxu0 %v241
  %1035 = vmatprep.subr.mxu0 0.0
  %1036 = vmatpush1.msra.mxu0 %v240
  %1037 = vmatprep.subr.mxu0 0.0
  %1038 = vmatpush1.msra.mxu0 %v239
  %1039 = vmatprep.subr.mxu0 0.0
  %1040 = vmatpush1.msra.mxu0 %v238
  %1041 = vmatprep.subr.mxu0 0.0
  %1042 = vmatpush2.msra.mxu0 0.0
  %1043 = vmatprep.subr.mxu0 0.0
  %1044 = vmatpush2.msra.mxu0 0.0
  %1045 = vmatprep.subr.mxu0 0.0
  %1046 = vmatpush2.msra.mxu0 0.0
  %1047 = vmatprep.subr.mxu0 0.0
  %1048 = vmatpush2.msra.mxu0 0.0
  %1049 = vmatprep.subr.mxu0 0.0
  %1050 = vmatpush2.msra.mxu0 0.0
  %1051 = vmatprep.subr.mxu0 0.0
  %1052 = vmatpush2.msra.mxu0 0.0
  %1053 = vmatprep.subr.mxu0 0.0
  %1054 = vmatpush2.msra.mxu0 0.0
  %1055 = vmatprep.subr.mxu0 0.0
  %1056 = vmatpush2.msra.mxu0 0.0
  %1057 = vmatprep.subr.mxu0 0.0
  %1058 = vmatpush2.msra.mxu0 0.0
  %1059 = vmatprep.subr.mxu0 0.0
  %1060 = vmatpush2.msra.mxu0 0.0
  %1061 = vmatprep.subr.mxu0 0.0
  %1062 = vmatpush2.msra.mxu0 0.0
  %1063 = vmatprep.subr.mxu0 0.0
  %1064 = vmatpush2.msra.mxu0 0.0
  %1065 = vmatprep.subr.mxu0 0.0
  %1066 = vmatpush2.msra.mxu0 0.0
  %1067 = vmatprep.subr.mxu0 0.0
  %1068 = vmatpush2.msra.mxu0 0.0
  %1069 = vmatprep.subr.mxu0 0.0
  %1070 = vmatpush2.msra.mxu0 0.0
  %1071 = vmatprep.subr.mxu0 0.0
  %1072 = vmatpush2.msra.mxu0 0.0
  %1073 = vmatprep.mubr.f32.mxu0 0.0
  %1074 = vmatmul.mubr.f32.gmra.mxu0 %v1007
  %v1075 = vpop.f32.mrf.mxu0
  %v1076 = vadd.f32 0.0, %v1075
  %v1077 = vpop.f32.mrf.mxu0
  %1078 = vdwg.mxu0
  %v1079 = vadd.f32 %v1006, %v1076
  %v1080 = vxor.u32 %v1079, 2147483648
  %v1081 = vmul.f32 %v1080, 1.442695
  %v1082 = vpow.pop %v1081
  %v1083 = vadd.f32 %v1082, 1.0
  %v1084 = vrcp.pop %v1083
  %v1085 = vmul.f32 1.0, %v1084
  %v1086 = vtanh.pop %v1079
  %v1087 = vmul.f32 %v1085, %v994
  %1089 = vrot.lane.b32.xlu0 %v1086, 64
  %v1090 = vpop.permute.xlu0 %1089
  %v1092 = vmul.f32 %v1085, %v1090
  %1094 = vrot.lane.b32.xlu0 %v1092, 32
  %v1095 = vpop.permute.xlu0 %1094
  %v1097 = vadd.f32 %v1087, %v1095
  %v1098 = vtanh.pop %v1097
  %1100 = vrot.lane.b32.xlu0 %v1098, 64
  %v1101 = vpop.permute.xlu0 %1100
  %v1103 = vmul.f32 %v1085, %v1101
  %1105 = vrot.lane.b32.xlu0 %v1103, 32
  %v1106 = vpop.permute.xlu0 %1105
  %1108 = vst.msk [vmem:[#allocation3 + $0x30] sm:$0xff] %vm249, %v1106
  %v1109 = vld [vmem:[#allocation2 + $0x38] sm:$0xff]
  %v1110 = vsel %vm249, %v1106, 0
  %1112 = vmatprep.subr.mxu0 0.0
  %1113 = vmatpush1.msra.mxu0 0.0
  %1114 = vmatprep.subr.mxu0 0.0
  %1115 = vmatpush1.msra.mxu0 0.0
  %1116 = vmatprep.subr.mxu0 0.0
  %1117 = vmatpush1.msra.mxu0 0.0
  %1118 = vmatprep.subr.mxu0 0.0
  %1119 = vmatpush1.msra.mxu0 0.0
  %1120 = vmatprep.subr.mxu0 0.0
  %1121 = vmatpush1.msra.mxu0 0.0
  %1122 = vmatprep.subr.mxu0 0.0
  %1123 = vmatpush1.msra.mxu0 0.0
  %1124 = vmatprep.subr.mxu0 0.0
  %1125 = vmatpush1.msra.mxu0 0.0
  %1126 = vmatprep.subr.mxu0 0.0
  %1127 = vmatpush1.msra.mxu0 0.0
  %1128 = vmatprep.subr.mxu0 0.0
  %1129 = vmatpush1.msra.mxu0 0.0
  %1130 = vmatprep.subr.mxu0 0.0
  %1131 = vmatpush1.msra.mxu0 0.0
  %1132 = vmatprep.subr.mxu0 0.0
  %1133 = vmatpush1.msra.mxu0 0.0
  %1134 = vmatprep.subr.mxu0 0.0
  %1135 = vmatpush1.msra.mxu0 0.0
  %1136 = vmatprep.subr.mxu0 0.0
  %1137 = vmatpush1.msra.mxu0 %v241
  %1138 = vmatprep.subr.mxu0 0.0
  %1139 = vmatpush1.msra.mxu0 %v240
  %1140 = vmatprep.subr.mxu0 0.0
  %1141 = vmatpush1.msra.mxu0 %v239
  %1142 = vmatprep.subr.mxu0 0.0
  %1143 = vmatpush1.msra.mxu0 %v238
  %1144 = vmatprep.subr.mxu0 0.0
  %1145 = vmatpush2.msra.mxu0 0.0
  %1146 = vmatprep.subr.mxu0 0.0
  %1147 = vmatpush2.msra.mxu0 0.0
  %1148 = vmatprep.subr.mxu0 0.0
  %1149 = vmatpush2.msra.mxu0 0.0
  %1150 = vmatprep.subr.mxu0 0.0
  %1151 = vmatpush2.msra.mxu0 0.0
  %1152 = vmatprep.subr.mxu0 0.0
  %1153 = vmatpush2.msra.mxu0 0.0
  %1154 = vmatprep.subr.mxu0 0.0
  %1155 = vmatpush2.msra.mxu0 0.0
  %1156 = vmatprep.subr.mxu0 0.0
  %1157 = vmatpush2.msra.mxu0 0.0
  %1158 = vmatprep.subr.mxu0 0.0
  %1159 = vmatpush2.msra.mxu0 0.0
  %1160 = vmatprep.subr.mxu0 0.0
  %1161 = vmatpush2.msra.mxu0 0.0
  %1162 = vmatprep.subr.mxu0 0.0
  %1163 = vmatpush2.msra.mxu0 0.0
  %1164 = vmatprep.subr.mxu0 0.0
  %1165 = vmatpush2.msra.mxu0 0.0
  %1166 = vmatprep.subr.mxu0 0.0
  %1167 = vmatpush2.msra.mxu0 0.0
  %1168 = vmatprep.subr.mxu0 0.0
  %1169 = vmatpush2.msra.mxu0 0.0
  %1170 = vmatprep.subr.mxu0 0.0
  %1171 = vmatpush2.msra.mxu0 0.0
  %1172 = vmatprep.subr.mxu0 0.0
  %1173 = vmatpush2.msra.mxu0 0.0
  %1174 = vmatprep.subr.mxu0 0.0
  %1175 = vmatpush2.msra.mxu0 0.0
  %1176 = vmatprep.mubr.f32.mxu0 0.0
  %1177 = vmatmul.mubr.f32.gmra.mxu0 %v1110
  %v1178 = vpop.f32.mrf.mxu0
  %v1179 = vadd.f32 0.0, %v1178
  %v1180 = vpop.f32.mrf.mxu0
  %1181 = vdwg.mxu0
  %v1182 = vadd.f32 %v1109, %v1179
  %v1183 = vxor.u32 %v1182, 2147483648
  %v1184 = vmul.f32 %v1183, 1.442695
  %v1185 = vpow.pop %v1184
  %v1186 = vadd.f32 %v1185, 1.0
  %v1187 = vrcp.pop %v1186
  %v1188 = vmul.f32 1.0, %v1187
  %v1189 = vtanh.pop %v1182
  %v1190 = vmul.f32 %v1188, %v1097
  %1192 = vrot.lane.b32.xlu0 %v1189, 64
  %v1193 = vpop.permute.xlu0 %1192
  %v1195 = vmul.f32 %v1188, %v1193
  %1197 = vrot.lane.b32.xlu0 %v1195, 32
  %v1198 = vpop.permute.xlu0 %1197
  %v1200 = vadd.f32 %v1190, %v1198
  %v1201 = vtanh.pop %v1200
  %1203 = vrot.lane.b32.xlu0 %v1201, 64
  %v1204 = vpop.permute.xlu0 %1203
  %v1206 = vmul.f32 %v1188, %v1204
  %1208 = vrot.lane.b32.xlu0 %v1206, 32
  %v1209 = vpop.permute.xlu0 %1208
  %1211 = vst.msk [vmem:[#allocation3 + $0x38] sm:$0xff] %vm249, %v1209
  %v1212 = vld [vmem:[#allocation3] sm:$0xff]
  %v1213 = vld [vmem:[#allocation3 + $0x8] sm:$0xff]
  %v1214 = vld [vmem:[#allocation3 + $0x10] sm:$0xff]
  %v1215 = vld [vmem:[#allocation3 + $0x18] sm:$0xff]
  %v1216 = vld [vmem:[#allocation3 + $0x20] sm:$0xff]
  %v1217 = vld [vmem:[#allocation3 + $0x28] sm:$0xff]
  %v1218 = vld [vmem:[#allocation3 + $0x30] sm:$0xff]
  %v1219 = vld [vmem:[#allocation3 + $0x38] sm:$0xff]
  %v1220 = vld [vmem:[%s5] sm:$0xff]
  %v1221 = vld [vmem:[%s5 + $0x8] sm:$0xff]
  %v1222 = vld [vmem:[%s5 + $0x10] sm:$0xff]
  %v1223 = vld [vmem:[%s5 + $0x18] sm:$0xff]
  %v1224 = vld [vmem:[%s6] sm:$0xff]
  %v1225 = vld [vmem:[%s6 + $0x8] sm:$0xff]
  %v1226 = vld [vmem:[%s6 + $0x10] sm:$0xff]
  %v1227 = vld [vmem:[%s6 + $0x18] sm:$0xff]
  %v1228 = vld [vmem:[%s7] sm:$0x1]
  %v1230 = vlaneseq
  %v1231 = vshrl.u32 %v1230, 7
  %v1232 = vsub.s32 0, %v1231
  %v1233 = vrot.slane %v1228, %v1232
  %v1236 = vsel %vm249, %v1212, 0
  %v1239 = vsel %vm249, %v1213, 0
  %v1242 = vsel %vm249, %v1214, 0
  %v1245 = vsel %vm249, %v1215, 0
  %v1248 = vsel %vm249, %v1216, 0
  %v1251 = vsel %vm249, %v1217, 0
  %v1254 = vsel %vm249, %v1218, 0
  %v1257 = vsel %vm249, %v1219, 0
  %1259 = vmatprep.subr.mxu0 0.0
  %1260 = vmatpush1.msra.mxu0 0.0
  %1261 = vmatprep.subr.mxu0 0.0
  %1262 = vmatpush1.msra.mxu0 0.0
  %1263 = vmatprep.subr.mxu0 0.0
  %1264 = vmatpush1.msra.mxu0 0.0
  %1265 = vmatprep.subr.mxu0 0.0
  %1266 = vmatpush1.msra.mxu0 0.0
  %1267 = vmatprep.subr.mxu0 0.0
  %1268 = vmatpush1.msra.mxu0 0.0
  %1269 = vmatprep.subr.mxu0 0.0
  %1270 = vmatpush1.msra.mxu0 0.0
  %1271 = vmatprep.subr.mxu0 0.0
  %1272 = vmatpush1.msra.mxu0 0.0
  %1273 = vmatprep.subr.mxu0 0.0
  %1274 = vmatpush1.msra.mxu0 0.0
  %1275 = vmatprep.subr.mxu0 0.0
  %1276 = vmatpush1.msra.mxu0 0.0
  %1277 = vmatprep.subr.mxu0 0.0
  %1278 = vmatpush1.msra.mxu0 0.0
  %1279 = vmatprep.subr.mxu0 0.0
  %1280 = vmatpush1.msra.mxu0 0.0
  %1281 = vmatprep.subr.mxu0 0.0
  %1282 = vmatpush1.msra.mxu0 0.0
  %1283 = vmatprep.subr.mxu0 0.0
  %1284 = vmatpush1.msra.mxu0 %v1223
  %1285 = vmatprep.subr.mxu0 0.0
  %1286 = vmatpush1.msra.mxu0 %v1222
  %1287 = vmatprep.subr.mxu0 0.0
  %1288 = vmatpush1.msra.mxu0 %v1221
  %1289 = vmatprep.subr.mxu0 0.0
  %1290 = vmatpush1.msra.mxu0 %v1220
  %1291 = vmatprep.subr.mxu0 0.0
  %1292 = vmatpush2.msra.mxu0 0.0
  %1293 = vmatprep.subr.mxu0 0.0
  %1294 = vmatpush2.msra.mxu0 0.0
  %1295 = vmatprep.subr.mxu0 0.0
  %1296 = vmatpush2.msra.mxu0 0.0
  %1297 = vmatprep.subr.mxu0 0.0
  %1298 = vmatpush2.msra.mxu0 0.0
  %1299 = vmatprep.subr.mxu0 0.0
  %1300 = vmatpush2.msra.mxu0 0.0
  %1301 = vmatprep.subr.mxu0 0.0
  %1302 = vmatpush2.msra.mxu0 0.0
  %1303 = vmatprep.subr.mxu0 0.0
  %1304 = vmatpush2.msra.mxu0 0.0
  %1305 = vmatprep.subr.mxu0 0.0
  %1306 = vmatpush2.msra.mxu0 0.0
  %1307 = vmatprep.subr.mxu0 0.0
  %1308 = vmatpush2.msra.mxu0 0.0
  %1309 = vmatprep.subr.mxu0 0.0
  %1310 = vmatpush2.msra.mxu0 0.0
  %1311 = vmatprep.subr.mxu0 0.0
  %1312 = vmatpush2.msra.mxu0 0.0
  %1313 = vmatprep.subr.mxu0 0.0
  %1314 = vmatpush2.msra.mxu0 0.0
  %1315 = vmatprep.subr.mxu0 0.0
  %1316 = vmatpush2.msra.mxu0 0.0
  %1317 = vmatprep.subr.mxu0 0.0
  %1318 = vmatpush2.msra.mxu0 0.0
  %1319 = vmatprep.subr.mxu0 0.0
  %1320 = vmatpush2.msra.mxu0 0.0
  %1321 = vmatprep.subr.mxu0 0.0
  %1322 = vmatpush2.msra.mxu0 0.0
  %1323 = vmatprep.mubr.f32.mxu0 0.0
  %1324 = vmatmul.mubr.f32.gmra.mxu0 %v1236
  %v1325 = vpop.f32.mrf.mxu0
  %v1326 = vadd.f32 %v1233, %v1325
  %v1327 = vpop.f32.mrf.mxu0
  %1328 = vmatprep.mubr.f32.mxu0 0.0
  %1329 = vmatmul.mubr.f32.gmra.mxu0 %v1239
  %v1330 = vpop.f32.mrf.mxu0
  %v1331 = vadd.f32 %v1233, %v1330
  %v1332 = vpop.f32.mrf.mxu0
  %1333 = vmatprep.mubr.f32.mxu0 0.0
  %1334 = vmatmul.mubr.f32.gmra.mxu0 %v1242
  %v1335 = vpop.f32.mrf.mxu0
  %v1336 = vadd.f32 %v1233, %v1335
  %v1337 = vpop.f32.mrf.mxu0
  %1338 = vmatprep.mubr.f32.mxu0 0.0
  %1339 = vmatmul.mubr.f32.gmra.mxu0 %v1245
  %v1340 = vpop.f32.mrf.mxu0
  %v1341 = vadd.f32 %v1233, %v1340
  %v1342 = vpop.f32.mrf.mxu0
  %1343 = vmatprep.mubr.f32.mxu0 0.0
  %1344 = vmatmul.mubr.f32.gmra.mxu0 %v1248
  %v1345 = vpop.f32.mrf.mxu0
  %v1346 = vadd.f32 %v1233, %v1345
  %v1347 = vpop.f32.mrf.mxu0
  %1348 = vmatprep.mubr.f32.mxu0 0.0
  %1349 = vmatmul.mubr.f32.gmra.mxu0 %v1251
  %v1350 = vpop.f32.mrf.mxu0
  %v1351 = vadd.f32 %v1233, %v1350
  %v1352 = vpop.f32.mrf.mxu0
  %1353 = vmatprep.mubr.f32.mxu0 0.0
  %1354 = vmatmul.mubr.f32.gmra.mxu0 %v1254
  %v1355 = vpop.f32.mrf.mxu0
  %v1356 = vadd.f32 %v1233, %v1355
  %v1357 = vpop.f32.mrf.mxu0
  %1358 = vmatprep.mubr.f32.mxu0 0.0
  %1359 = vmatmul.mubr.f32.gmra.mxu0 %v1257
  %v1360 = vpop.f32.mrf.mxu0
  %v1361 = vadd.f32 %v1233, %v1360
  %v1362 = vpop.f32.mrf.mxu0
  %1363 = vdwg.mxu0
  %1364 = vst [vmem:[#allocation2] sm:$0xff] %v1326
  %1365 = vst [vmem:[#allocation2 + $0x8] sm:$0xff] %v1331
  %1366 = vst [vmem:[#allocation2 + $0x10] sm:$0xff] %v1336
  %1367 = vst [vmem:[#allocation2 + $0x18] sm:$0xff] %v1341
  %1368 = vst [vmem:[#allocation2 + $0x20] sm:$0xff] %v1346
  %1369 = vst [vmem:[#allocation2 + $0x28] sm:$0xff] %v1351
  %1370 = vst [vmem:[#allocation2 + $0x30] sm:$0xff] %v1356
  %1371 = vst [vmem:[#allocation2 + $0x38] sm:$0xff] %v1361
  %v1372 = vld [vmem:[#allocation2] sm:$0xff]
  %1373 = vmatprep.subr.mxu0 0.0
  %1374 = vmatpush1.msra.mxu0 0.0
  %1375 = vmatprep.subr.mxu0 0.0
  %1376 = vmatpush1.msra.mxu0 0.0
  %1377 = vmatprep.subr.mxu0 0.0
  %1378 = vmatpush1.msra.mxu0 0.0
  %1379 = vmatprep.subr.mxu0 0.0
  %1380 = vmatpush1.msra.mxu0 0.0
  %1381 = vmatprep.subr.mxu0 0.0
  %1382 = vmatpush1.msra.mxu0 0.0
  %1383 = vmatprep.subr.mxu0 0.0
  %1384 = vmatpush1.msra.mxu0 0.0
  %1385 = vmatprep.subr.mxu0 0.0
  %1386 = vmatpush1.msra.mxu0 0.0
  %1387 = vmatprep.subr.mxu0 0.0
  %1388 = vmatpush1.msra.mxu0 0.0
  %1389 = vmatprep.subr.mxu0 0.0
  %1390 = vmatpush1.msra.mxu0 0.0
  %1391 = vmatprep.subr.mxu0 0.0
  %1392 = vmatpush1.msra.mxu0 0.0
  %1393 = vmatprep.subr.mxu0 0.0
  %1394 = vmatpush1.msra.mxu0 0.0
  %1395 = vmatprep.subr.mxu0 0.0
  %1396 = vmatpush1.msra.mxu0 0.0
  %1397 = vmatprep.subr.mxu0 0.0
  %1398 = vmatpush1.msra.mxu0 %v1227
  %1399 = vmatprep.subr.mxu0 0.0
  %1400 = vmatpush1.msra.mxu0 %v1226
  %1401 = vmatprep.subr.mxu0 0.0
  %1402 = vmatpush1.msra.mxu0 %v1225
  %1403 = vmatprep.subr.mxu0 0.0
  %1404 = vmatpush1.msra.mxu0 %v1224
  %1405 = vmatprep.subr.mxu0 0.0
  %1406 = vmatpush2.msra.mxu0 0.0
  %1407 = vmatprep.subr.mxu0 0.0
  %1408 = vmatpush2.msra.mxu0 0.0
  %1409 = vmatprep.subr.mxu0 0.0
  %1410 = vmatpush2.msra.mxu0 0.0
  %1411 = vmatprep.subr.mxu0 0.0
  %1412 = vmatpush2.msra.mxu0 0.0
  %1413 = vmatprep.subr.mxu0 0.0
  %1414 = vmatpush2.msra.mxu0 0.0
  %1415 = vmatprep.subr.mxu0 0.0
  %1416 = vmatpush2.msra.mxu0 0.0
  %1417 = vmatprep.subr.mxu0 0.0
  %1418 = vmatpush2.msra.mxu0 0.0
  %1419 = vmatprep.subr.mxu0 0.0
  %1420 = vmatpush2.msra.mxu0 0.0
  %1421 = vmatprep.subr.mxu0 0.0
  %1422 = vmatpush2.msra.mxu0 0.0
  %1423 = vmatprep.subr.mxu0 0.0
  %1424 = vmatpush2.msra.mxu0 0.0
  %1425 = vmatprep.subr.mxu0 0.0
  %1426 = vmatpush2.msra.mxu0 0.0
  %1427 = vmatprep.subr.mxu0 0.0
  %1428 = vmatpush2.msra.mxu0 0.0
  %1429 = vmatprep.subr.mxu0 0.0
  %1430 = vmatpush2.msra.mxu0 0.0
  %1431 = vmatprep.subr.mxu0 0.0
  %1432 = vmatpush2.msra.mxu0 0.0
  %1433 = vmatprep.subr.mxu0 0.0
  %1434 = vmatpush2.msra.mxu0 0.0
  %1435 = vmatprep.subr.mxu0 0.0
  %1436 = vmatpush2.msra.mxu0 0.0
  %1437 = vmatprep.mubr.f32.mxu0 0.0
  %1438 = vmatmul.mubr.f32.gmra.mxu0 %v389
  %v1439 = vpop.f32.mrf.mxu0
  %v1440 = vadd.f32 0.0, %v1439
  %v1441 = vpop.f32.mrf.mxu0
  %1442 = vdwg.mxu0
  %v1443 = vadd.f32 %v1372, %v1440
  %v1444 = vxor.u32 %v1443, 2147483648
  %v1445 = vmul.f32 %v1444, 1.442695
  %v1446 = vpow.pop %v1445
  %v1447 = vadd.f32 %v1446, 1.0
  %v1448 = vrcp.pop %v1447
  %v1449 = vmul.f32 1.0, %v1448
  %v1450 = vtanh.pop %v1443
  %v1451 = vmul.f32 %v1449, 0.0
  %1453 = vrot.lane.b32.xlu0 %v1450, 64
  %v1454 = vpop.permute.xlu0 %1453
  %v1456 = vmul.f32 %v1449, %v1454
  %1458 = vrot.lane.b32.xlu0 %v1456, 32
  %v1459 = vpop.permute.xlu0 %1458
  %v1461 = vadd.f32 %v1451, %v1459
  %v1462 = vtanh.pop %v1461
  %1464 = vrot.lane.b32.xlu0 %v1462, 64
  %v1465 = vpop.permute.xlu0 %1464
  %v1467 = vmul.f32 %v1449, %v1465
  %1469 = vrot.lane.b32.xlu0 %v1467, 32
  %v1470 = vpop.permute.xlu0 %1469
  %1472 = vst.msk [vmem:[#allocation3] sm:$0xff] %vm249, %v1470
  %v1473 = vld [vmem:[#allocation2 + $0x8] sm:$0xff]
  %v1474 = vsel %vm249, %v1470, 0
  %1476 = vmatprep.subr.mxu0 0.0
  %1477 = vmatpush1.msra.mxu0 0.0
  %1478 = vmatprep.subr.mxu0 0.0
  %1479 = vmatpush1.msra.mxu0 0.0
  %1480 = vmatprep.subr.mxu0 0.0
  %1481 = vmatpush1.msra.mxu0 0.0
  %1482 = vmatprep.subr.mxu0 0.0
  %1483 = vmatpush1.msra.mxu0 0.0
  %1484 = vmatprep.subr.mxu0 0.0
  %1485 = vmatpush1.msra.mxu0 0.0
  %1486 = vmatprep.subr.mxu0 0.0
  %1487 = vmatpush1.msra.mxu0 0.0
  %1488 = vmatprep.subr.mxu0 0.0
  %1489 = vmatpush1.msra.mxu0 0.0
  %1490 = vmatprep.subr.mxu0 0.0
  %1491 = vmatpush1.msra.mxu0 0.0
  %1492 = vmatprep.subr.mxu0 0.0
  %1493 = vmatpush1.msra.mxu0 0.0
  %1494 = vmatprep.subr.mxu0 0.0
  %1495 = vmatpush1.msra.mxu0 0.0
  %1496 = vmatprep.subr.mxu0 0.0
  %1497 = vmatpush1.msra.mxu0 0.0
  %1498 = vmatprep.subr.mxu0 0.0
  %1499 = vmatpush1.msra.mxu0 0.0
  %1500 = vmatprep.subr.mxu0 0.0
  %1501 = vmatpush1.msra.mxu0 %v1227
  %1502 = vmatprep.subr.mxu0 0.0
  %1503 = vmatpush1.msra.mxu0 %v1226
  %1504 = vmatprep.subr.mxu0 0.0
  %1505 = vmatpush1.msra.mxu0 %v1225
  %1506 = vmatprep.subr.mxu0 0.0
  %1507 = vmatpush1.msra.mxu0 %v1224
  %1508 = vmatprep.subr.mxu0 0.0
  %1509 = vmatpush2.msra.mxu0 0.0
  %1510 = vmatprep.subr.mxu0 0.0
  %1511 = vmatpush2.msra.mxu0 0.0
  %1512 = vmatprep.subr.mxu0 0.0
  %1513 = vmatpush2.msra.mxu0 0.0
  %1514 = vmatprep.subr.mxu0 0.0
  %1515 = vmatpush2.msra.mxu0 0.0
  %1516 = vmatprep.subr.mxu0 0.0
  %1517 = vmatpush2.msra.mxu0 0.0
  %1518 = vmatprep.subr.mxu0 0.0
  %1519 = vmatpush2.msra.mxu0 0.0
  %1520 = vmatprep.subr.mxu0 0.0
  %1521 = vmatpush2.msra.mxu0 0.0
  %1522 = vmatprep.subr.mxu0 0.0
  %1523 = vmatpush2.msra.mxu0 0.0
  %1524 = vmatprep.subr.mxu0 0.0
  %1525 = vmatpush2.msra.mxu0 0.0
  %1526 = vmatprep.subr.mxu0 0.0
  %1527 = vmatpush2.msra.mxu0 0.0
  %1528 = vmatprep.subr.mxu0 0.0
  %1529 = vmatpush2.msra.mxu0 0.0
  %1530 = vmatprep.subr.mxu0 0.0
  %1531 = vmatpush2.msra.mxu0 0.0
  %1532 = vmatprep.subr.mxu0 0.0
  %1533 = vmatpush2.msra.mxu0 0.0
  %1534 = vmatprep.subr.mxu0 0.0
  %1535 = vmatpush2.msra.mxu0 0.0
  %1536 = vmatprep.subr.mxu0 0.0
  %1537 = vmatpush2.msra.mxu0 0.0
  %1538 = vmatprep.subr.mxu0 0.0
  %1539 = vmatpush2.msra.mxu0 0.0
  %1540 = vmatprep.mubr.f32.mxu0 0.0
  %1541 = vmatmul.mubr.f32.gmra.mxu0 %v1474
  %v1542 = vpop.f32.mrf.mxu0
  %v1543 = vadd.f32 0.0, %v1542
  %v1544 = vpop.f32.mrf.mxu0
  %1545 = vdwg.mxu0
  %v1546 = vadd.f32 %v1473, %v1543
  %v1547 = vxor.u32 %v1546, 2147483648
  %v1548 = vmul.f32 %v1547, 1.442695
  %v1549 = vpow.pop %v1548
  %v1550 = vadd.f32 %v1549, 1.0
  %v1551 = vrcp.pop %v1550
  %v1552 = vmul.f32 1.0, %v1551
  %v1553 = vtanh.pop %v1546
  %v1554 = vmul.f32 %v1552, %v1461
  %1556 = vrot.lane.b32.xlu0 %v1553, 64
  %v1557 = vpop.permute.xlu0 %1556
  %v1559 = vmul.f32 %v1552, %v1557
  %1561 = vrot.lane.b32.xlu0 %v1559, 32
  %v1562 = vpop.permute.xlu0 %1561
  %v1564 = vadd.f32 %v1554, %v1562
  %v1565 = vtanh.pop %v1564
  %1567 = vrot.lane.b32.xlu0 %v1565, 64
  %v1568 = vpop.permute.xlu0 %1567
  %v1570 = vmul.f32 %v1552, %v1568
  %1572 = vrot.lane.b32.xlu0 %v1570, 32
  %v1573 = vpop.permute.xlu0 %1572
  %1575 = vst.msk [vmem:[#allocation3 + $0x8] sm:$0xff] %vm249, %v1573
  %v1576 = vld [vmem:[#allocation2 + $0x10] sm:$0xff]
  %v1577 = vsel %vm249, %v1573, 0
  %1579 = vmatprep.subr.mxu0 0.0
  %1580 = vmatpush1.msra.mxu0 0.0
  %1581 = vmatprep.subr.mxu0 0.0
  %1582 = vmatpush1.msra.mxu0 0.0
  %1583 = vmatprep.subr.mxu0 0.0
  %1584 = vmatpush1.msra.mxu0 0.0
  %1585 = vmatprep.subr.mxu0 0.0
  %1586 = vmatpush1.msra.mxu0 0.0
  %1587 = vmatprep.subr.mxu0 0.0
  %1588 = vmatpush1.msra.mxu0 0.0
  %1589 = vmatprep.subr.mxu0 0.0
  %1590 = vmatpush1.msra.mxu0 0.0
  %1591 = vmatprep.subr.mxu0 0.0
  %1592 = vmatpush1.msra.mxu0 0.0
  %1593 = vmatprep.subr.mxu0 0.0
  %1594 = vmatpush1.msra.mxu0 0.0
  %1595 = vmatprep.subr.mxu0 0.0
  %1596 = vmatpush1.msra.mxu0 0.0
  %1597 = vmatprep.subr.mxu0 0.0
  %1598 = vmatpush1.msra.mxu0 0.0
  %1599 = vmatprep.subr.mxu0 0.0
  %1600 = vmatpush1.msra.mxu0 0.0
  %1601 = vmatprep.subr.mxu0 0.0
  %1602 = vmatpush1.msra.mxu0 0.0
  %1603 = vmatprep.subr.mxu0 0.0
  %1604 = vmatpush1.msra.mxu0 %v1227
  %1605 = vmatprep.subr.mxu0 0.0
  %1606 = vmatpush1.msra.mxu0 %v1226
  %1607 = vmatprep.subr.mxu0 0.0
  %1608 = vmatpush1.msra.mxu0 %v1225
  %1609 = vmatprep.subr.mxu0 0.0
  %1610 = vmatpush1.msra.mxu0 %v1224
  %1611 = vmatprep.subr.mxu0 0.0
  %1612 = vmatpush2.msra.mxu0 0.0
  %1613 = vmatprep.subr.mxu0 0.0
  %1614 = vmatpush2.msra.mxu0 0.0
  %1615 = vmatprep.subr.mxu0 0.0
  %1616 = vmatpush2.msra.mxu0 0.0
  %1617 = vmatprep.subr.mxu0 0.0
  %1618 = vmatpush2.msra.mxu0 0.0
  %1619 = vmatprep.subr.mxu0 0.0
  %1620 = vmatpush2.msra.mxu0 0.0
  %1621 = vmatprep.subr.mxu0 0.0
  %1622 = vmatpush2.msra.mxu0 0.0
  %1623 = vmatprep.subr.mxu0 0.0
  %1624 = vmatpush2.msra.mxu0 0.0
  %1625 = vmatprep.subr.mxu0 0.0
  %1626 = vmatpush2.msra.mxu0 0.0
  %1627 = vmatprep.subr.mxu0 0.0
  %1628 = vmatpush2.msra.mxu0 0.0
  %1629 = vmatprep.subr.mxu0 0.0
  %1630 = vmatpush2.msra.mxu0 0.0
  %1631 = vmatprep.subr.mxu0 0.0
  %1632 = vmatpush2.msra.mxu0 0.0
  %1633 = vmatprep.subr.mxu0 0.0
  %1634 = vmatpush2.msra.mxu0 0.0
  %1635 = vmatprep.subr.mxu0 0.0
  %1636 = vmatpush2.msra.mxu0 0.0
  %1637 = vmatprep.subr.mxu0 0.0
  %1638 = vmatpush2.msra.mxu0 0.0
  %1639 = vmatprep.subr.mxu0 0.0
  %1640 = vmatpush2.msra.mxu0 0.0
  %1641 = vmatprep.subr.mxu0 0.0
  %1642 = vmatpush2.msra.mxu0 0.0
  %1643 = vmatprep.mubr.f32.mxu0 0.0
  %1644 = vmatmul.mubr.f32.gmra.mxu0 %v1577
  %v1645 = vpop.f32.mrf.mxu0
  %v1646 = vadd.f32 0.0, %v1645
  %v1647 = vpop.f32.mrf.mxu0
  %1648 = vdwg.mxu0
  %v1649 = vadd.f32 %v1576, %v1646
  %v1650 = vxor.u32 %v1649, 2147483648
  %v1651 = vmul.f32 %v1650, 1.442695
  %v1652 = vpow.pop %v1651
  %v1653 = vadd.f32 %v1652, 1.0
  %v1654 = vrcp.pop %v1653
  %v1655 = vmul.f32 1.0, %v1654
  %v1656 = vtanh.pop %v1649
  %v1657 = vmul.f32 %v1655, %v1564
  %1659 = vrot.lane.b32.xlu0 %v1656, 64
  %v1660 = vpop.permute.xlu0 %1659
  %v1662 = vmul.f32 %v1655, %v1660
  %1664 = vrot.lane.b32.xlu0 %v1662, 32
  %v1665 = vpop.permute.xlu0 %1664
  %v1667 = vadd.f32 %v1657, %v1665
  %v1668 = vtanh.pop %v1667
  %1670 = vrot.lane.b32.xlu0 %v1668, 64
  %v1671 = vpop.permute.xlu0 %1670
  %v1673 = vmul.f32 %v1655, %v1671
  %1675 = vrot.lane.b32.xlu0 %v1673, 32
  %v1676 = vpop.permute.xlu0 %1675
  %1678 = vst.msk [vmem:[#allocation3 + $0x10] sm:$0xff] %vm249, %v1676
  %v1679 = vld [vmem:[#allocation2 + $0x18] sm:$0xff]
  %v1680 = vsel %vm249, %v1676, 0
  %1682 = vmatprep.subr.mxu0 0.0
  %1683 = vmatpush1.msra.mxu0 0.0
  %1684 = vmatprep.subr.mxu0 0.0
  %1685 = vmatpush1.msra.mxu0 0.0
  %1686 = vmatprep.subr.mxu0 0.0
  %1687 = vmatpush1.msra.mxu0 0.0
  %1688 = vmatprep.subr.mxu0 0.0
  %1689 = vmatpush1.msra.mxu0 0.0
  %1690 = vmatprep.subr.mxu0 0.0
  %1691 = vmatpush1.msra.mxu0 0.0
  %1692 = vmatprep.subr.mxu0 0.0
  %1693 = vmatpush1.msra.mxu0 0.0
  %1694 = vmatprep.subr.mxu0 0.0
  %1695 = vmatpush1.msra.mxu0 0.0
  %1696 = vmatprep.subr.mxu0 0.0
  %1697 = vmatpush1.msra.mxu0 0.0
  %1698 = vmatprep.subr.mxu0 0.0
  %1699 = vmatpush1.msra.mxu0 0.0
  %1700 = vmatprep.subr.mxu0 0.0
  %1701 = vmatpush1.msra.mxu0 0.0
  %1702 = vmatprep.subr.mxu0 0.0
  %1703 = vmatpush1.msra.mxu0 0.0
  %1704 = vmatprep.subr.mxu0 0.0
  %1705 = vmatpush1.msra.mxu0 0.0
  %1706 = vmatprep.subr.mxu0 0.0
  %1707 = vmatpush1.msra.mxu0 %v1227
  %1708 = vmatprep.subr.mxu0 0.0
  %1709 = vmatpush1.msra.mxu0 %v1226
  %1710 = vmatprep.subr.mxu0 0.0
  %1711 = vmatpush1.msra.mxu0 %v1225
  %1712 = vmatprep.subr.mxu0 0.0
  %1713 = vmatpush1.msra.mxu0 %v1224
  %1714 = vmatprep.subr.mxu0 0.0
  %1715 = vmatpush2.msra.mxu0 0.0
  %1716 = vmatprep.subr.mxu0 0.0
  %1717 = vmatpush2.msra.mxu0 0.0
  %1718 = vmatprep.subr.mxu0 0.0
  %1719 = vmatpush2.msra.mxu0 0.0
  %1720 = vmatprep.subr.mxu0 0.0
  %1721 = vmatpush2.msra.mxu0 0.0
  %1722 = vmatprep.subr.mxu0 0.0
  %1723 = vmatpush2.msra.mxu0 0.0
  %1724 = vmatprep.subr.mxu0 0.0
  %1725 = vmatpush2.msra.mxu0 0.0
  %1726 = vmatprep.subr.mxu0 0.0
  %1727 = vmatpush2.msra.mxu0 0.0
  %1728 = vmatprep.subr.mxu0 0.0
  %1729 = vmatpush2.msra.mxu0 0.0
  %1730 = vmatprep.subr.mxu0 0.0
  %1731 = vmatpush2.msra.mxu0 0.0
  %1732 = vmatprep.subr.mxu0 0.0
  %1733 = vmatpush2.msra.mxu0 0.0
  %1734 = vmatprep.subr.mxu0 0.0
  %1735 = vmatpush2.msra.mxu0 0.0
  %1736 = vmatprep.subr.mxu0 0.0
  %1737 = vmatpush2.msra.mxu0 0.0
  %1738 = vmatprep.subr.mxu0 0.0
  %1739 = vmatpush2.msra.mxu0 0.0
  %1740 = vmatprep.subr.mxu0 0.0
  %1741 = vmatpush2.msra.mxu0 0.0
  %1742 = vmatprep.subr.mxu0 0.0
  %1743 = vmatpush2.msra.mxu0 0.0
  %1744 = vmatprep.subr.mxu0 0.0
  %1745 = vmatpush2.msra.mxu0 0.0
  %1746 = vmatprep.mubr.f32.mxu0 0.0
  %1747 = vmatmul.mubr.f32.gmra.mxu0 %v1680
  %v1748 = vpop.f32.mrf.mxu0
  %v1749 = vadd.f32 0.0, %v1748
  %v1750 = vpop.f32.mrf.mxu0
  %1751 = vdwg.mxu0
  %v1752 = vadd.f32 %v1679, %v1749
  %v1753 = vxor.u32 %v1752, 2147483648
  %v1754 = vmul.f32 %v1753, 1.442695
  %v1755 = vpow.pop %v1754
  %v1756 = vadd.f32 %v1755, 1.0
  %v1757 = vrcp.pop %v1756
  %v1758 = vmul.f32 1.0, %v1757
  %v1759 = vtanh.pop %v1752
  %v1760 = vmul.f32 %v1758, %v1667
  %1762 = vrot.lane.b32.xlu0 %v1759, 64
  %v1763 = vpop.permute.xlu0 %1762
  %v1765 = vmul.f32 %v1758, %v1763
  %1767 = vrot.lane.b32.xlu0 %v1765, 32
  %v1768 = vpop.permute.xlu0 %1767
  %v1770 = vadd.f32 %v1760, %v1768
  %v1771 = vtanh.pop %v1770
  %1773 = vrot.lane.b32.xlu0 %v1771, 64
  %v1774 = vpop.permute.xlu0 %1773
  %v1776 = vmul.f32 %v1758, %v1774
  %1778 = vrot.lane.b32.xlu0 %v1776, 32
  %v1779 = vpop.permute.xlu0 %1778
  %1781 = vst.msk [vmem:[#allocation3 + $0x18] sm:$0xff] %vm249, %v1779
  %v1782 = vld [vmem:[#allocation2 + $0x20] sm:$0xff]
  %v1783 = vsel %vm249, %v1779, 0
  %1785 = vmatprep.subr.mxu0 0.0
  %1786 = vmatpush1.msra.mxu0 0.0
  %1787 = vmatprep.subr.mxu0 0.0
  %1788 = vmatpush1.msra.mxu0 0.0
  %1789 = vmatprep.subr.mxu0 0.0
  %1790 = vmatpush1.msra.mxu0 0.0
  %1791 = vmatprep.subr.mxu0 0.0
  %1792 = vmatpush1.msra.mxu0 0.0
  %1793 = vmatprep.subr.mxu0 0.0
  %1794 = vmatpush1.msra.mxu0 0.0
  %1795 = vmatprep.subr.mxu0 0.0
  %1796 = vmatpush1.msra.mxu0 0.0
  %1797 = vmatprep.subr.mxu0 0.0
  %1798 = vmatpush1.msra.mxu0 0.0
  %1799 = vmatprep.subr.mxu0 0.0
  %1800 = vmatpush1.msra.mxu0 0.0
  %1801 = vmatprep.subr.mxu0 0.0
  %1802 = vmatpush1.msra.mxu0 0.0
  %1803 = vmatprep.subr.mxu0 0.0
  %1804 = vmatpush1.msra.mxu0 0.0
  %1805 = vmatprep.subr.mxu0 0.0
  %1806 = vmatpush1.msra.mxu0 0.0
  %1807 = vmatprep.subr.mxu0 0.0
  %1808 = vmatpush1.msra.mxu0 0.0
  %1809 = vmatprep.subr.mxu0 0.0
  %1810 = vmatpush1.msra.mxu0 %v1227
  %1811 = vmatprep.subr.mxu0 0.0
  %1812 = vmatpush1.msra.mxu0 %v1226
  %1813 = vmatprep.subr.mxu0 0.0
  %1814 = vmatpush1.msra.mxu0 %v1225
  %1815 = vmatprep.subr.mxu0 0.0
  %1816 = vmatpush1.msra.mxu0 %v1224
  %1817 = vmatprep.subr.mxu0 0.0
  %1818 = vmatpush2.msra.mxu0 0.0
  %1819 = vmatprep.subr.mxu0 0.0
  %1820 = vmatpush2.msra.mxu0 0.0
  %1821 = vmatprep.subr.mxu0 0.0
  %1822 = vmatpush2.msra.mxu0 0.0
  %1823 = vmatprep.subr.mxu0 0.0
  %1824 = vmatpush2.msra.mxu0 0.0
  %1825 = vmatprep.subr.mxu0 0.0
  %1826 = vmatpush2.msra.mxu0 0.0
  %1827 = vmatprep.subr.mxu0 0.0
  %1828 = vmatpush2.msra.mxu0 0.0
  %1829 = vmatprep.subr.mxu0 0.0
  %1830 = vmatpush2.msra.mxu0 0.0
  %1831 = vmatprep.subr.mxu0 0.0
  %1832 = vmatpush2.msra.mxu0 0.0
  %1833 = vmatprep.subr.mxu0 0.0
  %1834 = vmatpush2.msra.mxu0 0.0
  %1835 = vmatprep.subr.mxu0 0.0
  %1836 = vmatpush2.msra.mxu0 0.0
  %1837 = vmatprep.subr.mxu0 0.0
  %1838 = vmatpush2.msra.mxu0 0.0
  %1839 = vmatprep.subr.mxu0 0.0
  %1840 = vmatpush2.msra.mxu0 0.0
  %1841 = vmatprep.subr.mxu0 0.0
  %1842 = vmatpush2.msra.mxu0 0.0
  %1843 = vmatprep.subr.mxu0 0.0
  %1844 = vmatpush2.msra.mxu0 0.0
  %1845 = vmatprep.subr.mxu0 0.0
  %1846 = vmatpush2.msra.mxu0 0.0
  %1847 = vmatprep.subr.mxu0 0.0
  %1848 = vmatpush2.msra.mxu0 0.0
  %1849 = vmatprep.mubr.f32.mxu0 0.0
  %1850 = vmatmul.mubr.f32.gmra.mxu0 %v1783
  %v1851 = vpop.f32.mrf.mxu0
  %v1852 = vadd.f32 0.0, %v1851
  %v1853 = vpop.f32.mrf.mxu0
  %1854 = vdwg.mxu0
  %v1855 = vadd.f32 %v1782, %v1852
  %v1856 = vxor.u32 %v1855, 2147483648
  %v1857 = vmul.f32 %v1856, 1.442695
  %v1858 = vpow.pop %v1857
  %v1859 = vadd.f32 %v1858, 1.0
  %v1860 = vrcp.pop %v1859
  %v1861 = vmul.f32 1.0, %v1860
  %v1862 = vtanh.pop %v1855
  %v1863 = vmul.f32 %v1861, %v1770
  %1865 = vrot.lane.b32.xlu0 %v1862, 64
  %v1866 = vpop.permute.xlu0 %1865
  %v1868 = vmul.f32 %v1861, %v1866
  %1870 = vrot.lane.b32.xlu0 %v1868, 32
  %v1871 = vpop.permute.xlu0 %1870
  %v1873 = vadd.f32 %v1863, %v1871
  %v1874 = vtanh.pop %v1873
  %1876 = vrot.lane.b32.xlu0 %v1874, 64
  %v1877 = vpop.permute.xlu0 %1876
  %v1879 = vmul.f32 %v1861, %v1877
  %1881 = vrot.lane.b32.xlu0 %v1879, 32
  %v1882 = vpop.permute.xlu0 %1881
  %1884 = vst.msk [vmem:[#allocation3 + $0x20] sm:$0xff] %vm249, %v1882
  %v1885 = vld [vmem:[#allocation2 + $0x28] sm:$0xff]
  %v1886 = vsel %vm249, %v1882, 0
  %1888 = vmatprep.subr.mxu0 0.0
  %1889 = vmatpush1.msra.mxu0 0.0
  %1890 = vmatprep.subr.mxu0 0.0
  %1891 = vmatpush1.msra.mxu0 0.0
  %1892 = vmatprep.subr.mxu0 0.0
  %1893 = vmatpush1.msra.mxu0 0.0
  %1894 = vmatprep.subr.mxu0 0.0
  %1895 = vmatpush1.msra.mxu0 0.0
  %1896 = vmatprep.subr.mxu0 0.0
  %1897 = vmatpush1.msra.mxu0 0.0
  %1898 = vmatprep.subr.mxu0 0.0
  %1899 = vmatpush1.msra.mxu0 0.0
  %1900 = vmatprep.subr.mxu0 0.0
  %1901 = vmatpush1.msra.mxu0 0.0
  %1902 = vmatprep.subr.mxu0 0.0
  %1903 = vmatpush1.msra.mxu0 0.0
  %1904 = vmatprep.subr.mxu0 0.0
  %1905 = vmatpush1.msra.mxu0 0.0
  %1906 = vmatprep.subr.mxu0 0.0
  %1907 = vmatpush1.msra.mxu0 0.0
  %1908 = vmatprep.subr.mxu0 0.0
  %1909 = vmatpush1.msra.mxu0 0.0
  %1910 = vmatprep.subr.mxu0 0.0
  %1911 = vmatpush1.msra.mxu0 0.0
  %1912 = vmatprep.subr.mxu0 0.0
  %1913 = vmatpush1.msra.mxu0 %v1227
  %1914 = vmatprep.subr.mxu0 0.0
  %1915 = vmatpush1.msra.mxu0 %v1226
  %1916 = vmatprep.subr.mxu0 0.0
  %1917 = vmatpush1.msra.mxu0 %v1225
  %1918 = vmatprep.subr.mxu0 0.0
  %1919 = vmatpush1.msra.mxu0 %v1224
  %1920 = vmatprep.subr.mxu0 0.0
  %1921 = vmatpush2.msra.mxu0 0.0
  %1922 = vmatprep.subr.mxu0 0.0
  %1923 = vmatpush2.msra.mxu0 0.0
  %1924 = vmatprep.subr.mxu0 0.0
  %1925 = vmatpush2.msra.mxu0 0.0
  %1926 = vmatprep.subr.mxu0 0.0
  %1927 = vmatpush2.msra.mxu0 0.0
  %1928 = vmatprep.subr.mxu0 0.0
  %1929 = vmatpush2.msra.mxu0 0.0
  %1930 = vmatprep.subr.mxu0 0.0
  %1931 = vmatpush2.msra.mxu0 0.0
  %1932 = vmatprep.subr.mxu0 0.0
  %1933 = vmatpush2.msra.mxu0 0.0
  %1934 = vmatprep.subr.mxu0 0.0
  %1935 = vmatpush2.msra.mxu0 0.0
  %1936 = vmatprep.subr.mxu0 0.0
  %1937 = vmatpush2.msra.mxu0 0.0
  %1938 = vmatprep.subr.mxu0 0.0
  %1939 = vmatpush2.msra.mxu0 0.0
  %1940 = vmatprep.subr.mxu0 0.0
  %1941 = vmatpush2.msra.mxu0 0.0
  %1942 = vmatprep.subr.mxu0 0.0
  %1943 = vmatpush2.msra.mxu0 0.0
  %1944 = vmatprep.subr.mxu0 0.0
  %1945 = vmatpush2.msra.mxu0 0.0
  %1946 = vmatprep.subr.mxu0 0.0
  %1947 = vmatpush2.msra.mxu0 0.0
  %1948 = vmatprep.subr.mxu0 0.0
  %1949 = vmatpush2.msra.mxu0 0.0
  %1950 = vmatprep.subr.mxu0 0.0
  %1951 = vmatpush2.msra.mxu0 0.0
  %1952 = vmatprep.mubr.f32.mxu0 0.0
  %1953 = vmatmul.mubr.f32.gmra.mxu0 %v1886
  %v1954 = vpop.f32.mrf.mxu0
  %v1955 = vadd.f32 0.0, %v1954
  %v1956 = vpop.f32.mrf.mxu0
  %1957 = vdwg.mxu0
  %v1958 = vadd.f32 %v1885, %v1955
  %v1959 = vxor.u32 %v1958, 2147483648
  %v1960 = vmul.f32 %v1959, 1.442695
  %v1961 = vpow.pop %v1960
  %v1962 = vadd.f32 %v1961, 1.0
  %v1963 = vrcp.pop %v1962
  %v1964 = vmul.f32 1.0, %v1963
  %v1965 = vtanh.pop %v1958
  %v1966 = vmul.f32 %v1964, %v1873
  %1968 = vrot.lane.b32.xlu0 %v1965, 64
  %v1969 = vpop.permute.xlu0 %1968
  %v1971 = vmul.f32 %v1964, %v1969
  %1973 = vrot.lane.b32.xlu0 %v1971, 32
  %v1974 = vpop.permute.xlu0 %1973
  %v1976 = vadd.f32 %v1966, %v1974
  %v1977 = vtanh.pop %v1976
  %1979 = vrot.lane.b32.xlu0 %v1977, 64
  %v1980 = vpop.permute.xlu0 %1979
  %v1982 = vmul.f32 %v1964, %v1980
  %1984 = vrot.lane.b32.xlu0 %v1982, 32
  %v1985 = vpop.permute.xlu0 %1984
  %1987 = vst.msk [vmem:[#allocation3 + $0x28] sm:$0xff] %vm249, %v1985
  %v1988 = vld [vmem:[#allocation2 + $0x30] sm:$0xff]
  %v1989 = vsel %vm249, %v1985, 0
  %1991 = vmatprep.subr.mxu0 0.0
  %1992 = vmatpush1.msra.mxu0 0.0
  %1993 = vmatprep.subr.mxu0 0.0
  %1994 = vmatpush1.msra.mxu0 0.0
  %1995 = vmatprep.subr.mxu0 0.0
  %1996 = vmatpush1.msra.mxu0 0.0
  %1997 = vmatprep.subr.mxu0 0.0
  %1998 = vmatpush1.msra.mxu0 0.0
  %1999 = vmatprep.subr.mxu0 0.0
  %2000 = vmatpush1.msra.mxu0 0.0
  %2001 = vmatprep.subr.mxu0 0.0
  %2002 = vmatpush1.msra.mxu0 0.0
  %2003 = vmatprep.subr.mxu0 0.0
  %2004 = vmatpush1.msra.mxu0 0.0
  %2005 = vmatprep.subr.mxu0 0.0
  %2006 = vmatpush1.msra.mxu0 0.0
  %2007 = vmatprep.subr.mxu0 0.0
  %2008 = vmatpush1.msra.mxu0 0.0
  %2009 = vmatprep.subr.mxu0 0.0
  %2010 = vmatpush1.msra.mxu0 0.0
  %2011 = vmatprep.subr.mxu0 0.0
  %2012 = vmatpush1.msra.mxu0 0.0
  %2013 = vmatprep.subr.mxu0 0.0
  %2014 = vmatpush1.msra.mxu0 0.0
  %2015 = vmatprep.subr.mxu0 0.0
  %2016 = vmatpush1.msra.mxu0 %v1227
  %2017 = vmatprep.subr.mxu0 0.0
  %2018 = vmatpush1.msra.mxu0 %v1226
  %2019 = vmatprep.subr.mxu0 0.0
  %2020 = vmatpush1.msra.mxu0 %v1225
  %2021 = vmatprep.subr.mxu0 0.0
  %2022 = vmatpush1.msra.mxu0 %v1224
  %2023 = vmatprep.subr.mxu0 0.0
  %2024 = vmatpush2.msra.mxu0 0.0
  %2025 = vmatprep.subr.mxu0 0.0
  %2026 = vmatpush2.msra.mxu0 0.0
  %2027 = vmatprep.subr.mxu0 0.0
  %2028 = vmatpush2.msra.mxu0 0.0
  %2029 = vmatprep.subr.mxu0 0.0
  %2030 = vmatpush2.msra.mxu0 0.0
  %2031 = vmatprep.subr.mxu0 0.0
  %2032 = vmatpush2.msra.mxu0 0.0
  %2033 = vmatprep.subr.mxu0 0.0
  %2034 = vmatpush2.msra.mxu0 0.0
  %2035 = vmatprep.subr.mxu0 0.0
  %2036 = vmatpush2.msra.mxu0 0.0
  %2037 = vmatprep.subr.mxu0 0.0
  %2038 = vmatpush2.msra.mxu0 0.0
  %2039 = vmatprep.subr.mxu0 0.0
  %2040 = vmatpush2.msra.mxu0 0.0
  %2041 = vmatprep.subr.mxu0 0.0
  %2042 = vmatpush2.msra.mxu0 0.0
  %2043 = vmatprep.subr.mxu0 0.0
  %2044 = vmatpush2.msra.mxu0 0.0
  %2045 = vmatprep.subr.mxu0 0.0
  %2046 = vmatpush2.msra.mxu0 0.0
  %2047 = vmatprep.subr.mxu0 0.0
  %2048 = vmatpush2.msra.mxu0 0.0
  %2049 = vmatprep.subr.mxu0 0.0
  %2050 = vmatpush2.msra.mxu0 0.0
  %2051 = vmatprep.subr.mxu0 0.0
  %2052 = vmatpush2.msra.mxu0 0.0
  %2053 = vmatprep.subr.mxu0 0.0
  %2054 = vmatpush2.msra.mxu0 0.0
  %2055 = vmatprep.mubr.f32.mxu0 0.0
  %2056 = vmatmul.mubr.f32.gmra.mxu0 %v1989
  %v2057 = vpop.f32.mrf.mxu0
  %v2058 = vadd.f32 0.0, %v2057
  %v2059 = vpop.f32.mrf.mxu0
  %2060 = vdwg.mxu0
  %v2061 = vadd.f32 %v1988, %v2058
  %v2062 = vxor.u32 %v2061, 2147483648
  %v2063 = vmul.f32 %v2062, 1.442695
  %v2064 = vpow.pop %v2063
  %v2065 = vadd.f32 %v2064, 1.0
  %v2066 = vrcp.pop %v2065
  %v2067 = vmul.f32 1.0, %v2066
  %v2068 = vtanh.pop %v2061
  %v2069 = vmul.f32 %v2067, %v1976
  %2071 = vrot.lane.b32.xlu0 %v2068, 64
  %v2072 = vpop.permute.xlu0 %2071
  %v2074 = vmul.f32 %v2067, %v2072
  %2076 = vrot.lane.b32.xlu0 %v2074, 32
  %v2077 = vpop.permute.xlu0 %2076
  %v2079 = vadd.f32 %v2069, %v2077
  %v2080 = vtanh.pop %v2079
  %2082 = vrot.lane.b32.xlu0 %v2080, 64
  %v2083 = vpop.permute.xlu0 %2082
  %v2085 = vmul.f32 %v2067, %v2083
  %2087 = vrot.lane.b32.xlu0 %v2085, 32
  %v2088 = vpop.permute.xlu0 %2087
  %2090 = vst.msk [vmem:[#allocation3 + $0x30] sm:$0xff] %vm249, %v2088
  %v2091 = vld [vmem:[#allocation2 + $0x38] sm:$0xff]
  %v2092 = vsel %vm249, %v2088, 0
  %2094 = vmatprep.subr.mxu0 0.0
  %2095 = vmatpush1.msra.mxu0 0.0
  %2096 = vmatprep.subr.mxu0 0.0
  %2097 = vmatpush1.msra.mxu0 0.0
  %2098 = vmatprep.subr.mxu0 0.0
  %2099 = vmatpush1.msra.mxu0 0.0
  %2100 = vmatprep.subr.mxu0 0.0
  %2101 = vmatpush1.msra.mxu0 0.0
  %2102 = vmatprep.subr.mxu0 0.0
  %2103 = vmatpush1.msra.mxu0 0.0
  %2104 = vmatprep.subr.mxu0 0.0
  %2105 = vmatpush1.msra.mxu0 0.0
  %2106 = vmatprep.subr.mxu0 0.0
  %2107 = vmatpush1.msra.mxu0 0.0
  %2108 = vmatprep.subr.mxu0 0.0
  %2109 = vmatpush1.msra.mxu0 0.0
  %2110 = vmatprep.subr.mxu0 0.0
  %2111 = vmatpush1.msra.mxu0 0.0
  %2112 = vmatprep.subr.mxu0 0.0
  %2113 = vmatpush1.msra.mxu0 0.0
  %2114 = vmatprep.subr.mxu0 0.0
  %2115 = vmatpush1.msra.mxu0 0.0
  %2116 = vmatprep.subr.mxu0 0.0
  %2117 = vmatpush1.msra.mxu0 0.0
  %2118 = vmatprep.subr.mxu0 0.0
  %2119 = vmatpush1.msra.mxu0 %v1227
  %2120 = vmatprep.subr.mxu0 0.0
  %2121 = vmatpush1.msra.mxu0 %v1226
  %2122 = vmatprep.subr.mxu0 0.0
  %2123 = vmatpush1.msra.mxu0 %v1225
  %2124 = vmatprep.subr.mxu0 0.0
  %2125 = vmatpush1.msra.mxu0 %v1224
  %2126 = vmatprep.subr.mxu0 0.0
  %2127 = vmatpush2.msra.mxu0 0.0
  %2128 = vmatprep.subr.mxu0 0.0
  %2129 = vmatpush2.msra.mxu0 0.0
  %2130 = vmatprep.subr.mxu0 0.0
  %2131 = vmatpush2.msra.mxu0 0.0
  %2132 = vmatprep.subr.mxu0 0.0
  %2133 = vmatpush2.msra.mxu0 0.0
  %2134 = vmatprep.subr.mxu0 0.0
  %2135 = vmatpush2.msra.mxu0 0.0
  %2136 = vmatprep.subr.mxu0 0.0
  %2137 = vmatpush2.msra.mxu0 0.0
  %2138 = vmatprep.subr.mxu0 0.0
  %2139 = vmatpush2.msra.mxu0 0.0
  %2140 = vmatprep.subr.mxu0 0.0
  %2141 = vmatpush2.msra.mxu0 0.0
  %2142 = vmatprep.subr.mxu0 0.0
  %2143 = vmatpush2.msra.mxu0 0.0
  %2144 = vmatprep.subr.mxu0 0.0
  %2145 = vmatpush2.msra.mxu0 0.0
  %2146 = vmatprep.subr.mxu0 0.0
  %2147 = vmatpush2.msra.mxu0 0.0
  %2148 = vmatprep.subr.mxu0 0.0
  %2149 = vmatpush2.msra.mxu0 0.0
  %2150 = vmatprep.subr.mxu0 0.0
  %2151 = vmatpush2.msra.mxu0 0.0
  %2152 = vmatprep.subr.mxu0 0.0
  %2153 = vmatpush2.msra.mxu0 0.0
  %2154 = vmatprep.subr.mxu0 0.0
  %2155 = vmatpush2.msra.mxu0 0.0
  %2156 = vmatprep.subr.mxu0 0.0
  %2157 = vmatpush2.msra.mxu0 0.0
  %2158 = vmatprep.mubr.f32.mxu0 0.0
  %2159 = vmatmul.mubr.f32.gmra.mxu0 %v2092
  %v2160 = vpop.f32.mrf.mxu0
  %v2161 = vadd.f32 0.0, %v2160
  %v2162 = vpop.f32.mrf.mxu0
  %2163 = vdwg.mxu0
  %v2164 = vadd.f32 %v2091, %v2161
  %v2165 = vxor.u32 %v2164, 2147483648
  %v2166 = vmul.f32 %v2165, 1.442695
  %v2167 = vpow.pop %v2166
  %v2168 = vadd.f32 %v2167, 1.0
  %v2169 = vrcp.pop %v2168
  %v2170 = vmul.f32 1.0, %v2169
  %v2171 = vtanh.pop %v2164
  %v2172 = vmul.f32 %v2170, %v2079
  %2174 = vrot.lane.b32.xlu0 %v2171, 64
  %v2175 = vpop.permute.xlu0 %2174
  %v2177 = vmul.f32 %v2170, %v2175
  %2179 = vrot.lane.b32.xlu0 %v2177, 32
  %v2180 = vpop.permute.xlu0 %2179
  %v2182 = vadd.f32 %v2172, %v2180
  %v2183 = vtanh.pop %v2182
  %2185 = vrot.lane.b32.xlu0 %v2183, 64
  %v2186 = vpop.permute.xlu0 %2185
  %v2188 = vmul.f32 %v2170, %v2186
  %2190 = vrot.lane.b32.xlu0 %v2188, 32
  %v2191 = vpop.permute.xlu0 %2190
  %2193 = vst.msk [vmem:[#allocation3 + $0x38] sm:$0xff] %vm249, %v2191
  %v2194 = vld [vmem:[#allocation3] sm:$0xff]
  %v2195 = vld [vmem:[#allocation3 + $0x8] sm:$0xff]
  %v2196 = vld [vmem:[#allocation3 + $0x10] sm:$0xff]
  %v2197 = vld [vmem:[#allocation3 + $0x18] sm:$0xff]
  %v2198 = vld [vmem:[#allocation3 + $0x20] sm:$0xff]
  %v2199 = vld [vmem:[#allocation3 + $0x28] sm:$0xff]
  %v2200 = vld [vmem:[#allocation3 + $0x30] sm:$0xff]
  %v2201 = vld [vmem:[#allocation3 + $0x38] sm:$0xff]
  %v2202 = vld [vmem:[%s8] sm:$0xff]
  %v2203 = vld [vmem:[%s8 + $0x8] sm:$0xff]
  %v2204 = vld [vmem:[%s8 + $0x10] sm:$0xff]
  %v2205 = vld [vmem:[%s8 + $0x18] sm:$0xff]
  %v2206 = vld [vmem:[%s9] sm:$0x1]
  %v2208 = vlaneseq
  %v2209 = vshrl.u32 %v2208, 7
  %v2210 = vsub.s32 0, %v2209
  %v2211 = vrot.slane %v2206, %v2210
  %v2214 = vsel %vm249, %v2194, 0
  %v2217 = vsel %vm249, %v2195, 0
  %v2220 = vsel %vm249, %v2196, 0
  %v2223 = vsel %vm249, %v2197, 0
  %v2226 = vsel %vm249, %v2198, 0
  %v2229 = vsel %vm249, %v2199, 0
  %v2232 = vsel %vm249, %v2200, 0
  %v2235 = vsel %vm249, %v2201, 0
  %2237 = vmatprep.subr.mxu0 0.0
  %2238 = vmatpush1.msra.mxu0 0.0
  %2239 = vmatprep.subr.mxu0 0.0
  %2240 = vmatpush1.msra.mxu0 0.0
  %2241 = vmatprep.subr.mxu0 0.0
  %2242 = vmatpush1.msra.mxu0 0.0
  %2243 = vmatprep.subr.mxu0 0.0
  %2244 = vmatpush1.msra.mxu0 0.0
  %2245 = vmatprep.subr.mxu0 0.0
  %2246 = vmatpush1.msra.mxu0 0.0
  %2247 = vmatprep.subr.mxu0 0.0
  %2248 = vmatpush1.msra.mxu0 0.0
  %2249 = vmatprep.subr.mxu0 0.0
  %2250 = vmatpush1.msra.mxu0 0.0
  %2251 = vmatprep.subr.mxu0 0.0
  %2252 = vmatpush1.msra.mxu0 0.0
  %2253 = vmatprep.subr.mxu0 0.0
  %2254 = vmatpush1.msra.mxu0 0.0
  %2255 = vmatprep.subr.mxu0 0.0
  %2256 = vmatpush1.msra.mxu0 0.0
  %2257 = vmatprep.subr.mxu0 0.0
  %2258 = vmatpush1.msra.mxu0 0.0
  %2259 = vmatprep.subr.mxu0 0.0
  %2260 = vmatpush1.msra.mxu0 0.0
  %2261 = vmatprep.subr.mxu0 0.0
  %2262 = vmatpush1.msra.mxu0 %v2205
  %2263 = vmatprep.subr.mxu0 0.0
  %2264 = vmatpush1.msra.mxu0 %v2204
  %2265 = vmatprep.subr.mxu0 0.0
  %2266 = vmatpush1.msra.mxu0 %v2203
  %2267 = vmatprep.subr.mxu0 0.0
  %2268 = vmatpush1.msra.mxu0 %v2202
  %2269 = vmatprep.subr.mxu0 0.0
  %2270 = vmatpush2.msra.mxu0 0.0
  %2271 = vmatprep.subr.mxu0 0.0
  %2272 = vmatpush2.msra.mxu0 0.0
  %2273 = vmatprep.subr.mxu0 0.0
  %2274 = vmatpush2.msra.mxu0 0.0
  %2275 = vmatprep.subr.mxu0 0.0
  %2276 = vmatpush2.msra.mxu0 0.0
  %2277 = vmatprep.subr.mxu0 0.0
  %2278 = vmatpush2.msra.mxu0 0.0
  %2279 = vmatprep.subr.mxu0 0.0
  %2280 = vmatpush2.msra.mxu0 0.0
  %2281 = vmatprep.subr.mxu0 0.0
  %2282 = vmatpush2.msra.mxu0 0.0
  %2283 = vmatprep.subr.mxu0 0.0
  %2284 = vmatpush2.msra.mxu0 0.0
  %2285 = vmatprep.subr.mxu0 0.0
  %2286 = vmatpush2.msra.mxu0 0.0
  %2287 = vmatprep.subr.mxu0 0.0
  %2288 = vmatpush2.msra.mxu0 0.0
  %2289 = vmatprep.subr.mxu0 0.0
  %2290 = vmatpush2.msra.mxu0 0.0
  %2291 = vmatprep.subr.mxu0 0.0
  %2292 = vmatpush2.msra.mxu0 0.0
  %2293 = vmatprep.subr.mxu0 0.0
  %2294 = vmatpush2.msra.mxu0 0.0
  %2295 = vmatprep.subr.mxu0 0.0
  %2296 = vmatpush2.msra.mxu0 0.0
  %2297 = vmatprep.subr.mxu0 0.0
  %2298 = vmatpush2.msra.mxu0 0.0
  %2299 = vmatprep.subr.mxu0 0.0
  %2300 = vmatpush2.msra.mxu0 0.0
  %2301 = vmatprep.mubr.f32.mxu0 0.0
  %2302 = vmatmul.mubr.f32.gmra.mxu0 %v2214
  %v2303 = vpop.f32.mrf.mxu0
  %v2304 = vadd.f32 %v2211, %v2303
  %v2305 = vpop.f32.mrf.mxu0
  %2306 = vmatprep.mubr.f32.mxu0 0.0
  %2307 = vmatmul.mubr.f32.gmra.mxu0 %v2217
  %v2308 = vpop.f32.mrf.mxu0
  %v2309 = vadd.f32 %v2211, %v2308
  %v2310 = vpop.f32.mrf.mxu0
  %2311 = vmatprep.mubr.f32.mxu0 0.0
  %2312 = vmatmul.mubr.f32.gmra.mxu0 %v2220
  %v2313 = vpop.f32.mrf.mxu0
  %v2314 = vadd.f32 %v2211, %v2313
  %v2315 = vpop.f32.mrf.mxu0
  %2316 = vmatprep.mubr.f32.mxu0 0.0
  %2317 = vmatmul.mubr.f32.gmra.mxu0 %v2223
  %v2318 = vpop.f32.mrf.mxu0
  %v2319 = vadd.f32 %v2211, %v2318
  %v2320 = vpop.f32.mrf.mxu0
  %2321 = vmatprep.mubr.f32.mxu0 0.0
  %2322 = vmatmul.mubr.f32.gmra.mxu0 %v2226
  %v2323 = vpop.f32.mrf.mxu0
  %v2324 = vadd.f32 %v2211, %v2323
  %v2325 = vpop.f32.mrf.mxu0
  %2326 = vmatprep.mubr.f32.mxu0 0.0
  %2327 = vmatmul.mubr.f32.gmra.mxu0 %v2229
  %v2328 = vpop.f32.mrf.mxu0
  %v2329 = vadd.f32 %v2211, %v2328
  %v2330 = vpop.f32.mrf.mxu0
  %2331 = vmatprep.mubr.f32.mxu0 0.0
  %2332 = vmatmul.mubr.f32.gmra.mxu0 %v2232
  %v2333 = vpop.f32.mrf.mxu0
  %v2334 = vadd.f32 %v2211, %v2333
  %v2335 = vpop.f32.mrf.mxu0
  %2336 = vmatprep.mubr.f32.mxu0 0.0
  %2337 = vmatmul.mubr.f32.gmra.mxu0 %v2235
  %v2338 = vpop.f32.mrf.mxu0
  %v2339 = vadd.f32 %v2211, %v2338
  %v2340 = vpop.f32.mrf.mxu0
  %2341 = vdwg.mxu0
  %vm2342 = vcmask 130048
  %2343 = vst.msk [vmem:[%s10] sm:$0xff] %vm2342, %v2304
  %2344 = vst.msk [vmem:[%s10 + $0x8] sm:$0xff] %vm2342, %v2309
  %2345 = vst.msk [vmem:[%s10 + $0x10] sm:$0xff] %vm2342, %v2314
  %2346 = vst.msk [vmem:[%s10 + $0x18] sm:$0xff] %vm2342, %v2319
  %2347 = vst.msk [vmem:[%s10 + $0x20] sm:$0xff] %vm2342, %v2324
  %2348 = vst.msk [vmem:[%s10 + $0x28] sm:$0xff] %vm2342, %v2329
  %2349 = vst.msk [vmem:[%s10 + $0x30] sm:$0xff] %vm2342, %v2334
  %2350 = vst.msk [vmem:[%s10 + $0x38] sm:$0xff] %vm2342, %v2339
  // Predicated region
  $region42: #{hypernym_hyponym_lstm_forward.1} parent=0 // pred_check
    _
  $region43: #{hypernym_hyponym_lstm_forward.1} parent=0 // pred_check_branch
    %2352 = sbr.rel (0) target = $region45
  $region44: #{hypernym_hyponym_lstm_forward.1} parent=0 // pred_region
    _
  $region45: #{hypernym_hyponym_lstm_forward.1} parent=0 // pred_fallthru
    _
  // Predicated region
  $region46: #{hypernym_hyponym_lstm_forward.1} parent=0 // pred_check
    _
  $region47: #{hypernym_hyponym_lstm_forward.1} parent=0 // pred_check_branch
    %2354 = sbr.rel (0) target = $region49
  $region48: #{hypernym_hyponym_lstm_forward.1} parent=0 // pred_region
    _
  $region49: #{hypernym_hyponym_lstm_forward.1} parent=0 // pred_fallthru
    _

</llo_original>
